<compile_context>
chip_gen: v5e
topology: v5e:2x2
jax: 0.10.0
libtpu: 0.0.40
codegen_flags: <defaults>
</compile_context>

<pallas_src>
import jax
import jax.numpy as jnp
from jax.experimental import pallas as pl
from jax.experimental.pallas import tpu as pltpu


def _bilstm_kernel(x_ref, wih_f_ref, wih_b_ref, bias_f_ref, bias_b_ref,
                   whh_f_ref, whh_b_ref, wemb_f_ref, wemb_b_ref, bemb_ref,
                   out_ref,
                   xwf_ref, xwb_ref, hf_ref, hb_ref, *, unroll):
    """Bidirectional LSTM + linear embedding, fully VMEM-resident.

    Shapes (Hp = per-gate padded hidden, H4p = 4*Hp, nOutP = padded nOut):
      x_ref:      (T, Bp, nIn)        input (batch padded to a multiple of 8)
      wih_*_ref:  (nIn, H4p)          W_ih^T per direction, gate-padded columns
      bias_*_ref: (1, H4p)            b_ih + b_hh per direction, f32, gate-padded
      whh_*_ref:  (Hp, H4p)           W_hh^T per direction, gate-padded / row-padded
      wemb_*_ref: (Hp, nOutP)         embedding weight halves, transposed, padded
      bemb_ref:   (1, nOutP)          embedding bias, f32, padded
      out_ref:    (T, Bp, nOutP)
      xwf_ref:    (T, Bp, H4p)  scratch  hoisted x @ W_ih_f (+bias), f32
      xwb_ref:    (T, Bp, H4p)  scratch  hoisted x @ W_ih_b (+bias), f32
      hf_ref:     (T, Bp, Hp)   scratch  forward hidden states (MXU dtype)
      hb_ref:     (T, Bp, Hp)   scratch  backward hidden states (MXU dtype)
    """
    T, Bp, nIn = x_ref.shape
    Hp = whh_f_ref.shape[0]
    H4p = 4 * Hp
    nOutP = out_ref.shape[-1]
    f32 = jnp.float32
    mxu_dtype = whh_f_ref.dtype        # f32 or bf16 (set by the wrapper)

    # ---- Phase 1: hoisted input projections (two large MXU matmuls, bias folded).
    x_flat = x_ref[...].reshape(T * Bp, nIn)
    xwf = jnp.dot(x_flat, wih_f_ref[...], preferred_element_type=f32)
    xwf_ref[...] = (xwf + bias_f_ref[...]).reshape(T, Bp, H4p)
    xwb = jnp.dot(x_flat, wih_b_ref[...], preferred_element_type=f32)
    xwb_ref[...] = (xwb + bias_b_ref[...]).reshape(T, Bp, H4p)

    def gate_math(pre, c):
        # PyTorch gate order: i, f, g, o.  All elementwise math in f32.
        # Gate blocks are Hp (=multiple of 128) wide -> full-vreg, lane-aligned slices.
        i_g = jax.nn.sigmoid(pre[:, 0 * Hp:1 * Hp])
        f_g = jax.nn.sigmoid(pre[:, 1 * Hp:2 * Hp])
        g_g = jnp.tanh(pre[:, 2 * Hp:3 * Hp])
        o_g = jax.nn.sigmoid(pre[:, 3 * Hp:4 * Hp])
        c_new = f_g * c + i_g * g_g
        h_new = o_g * jnp.tanh(c_new)
        return h_new, c_new

    # ---- Phase 2: both directions in one time loop; one (Bp, Hp) @ (Hp, 4Hp)
    # matmul per direction per step — no sublane concat on the serial chain, and
    # no discarded MXU output.  Hidden carries stay in the MXU operand dtype;
    # cell carries stay f32 for the gate math.
    def step(t, carry):
        h_f, c_f, h_b, c_b = carry
        tb = T - 1 - t
        rec_f = jnp.dot(h_f, whh_f_ref[...], preferred_element_type=f32)   # (Bp, 4Hp)
        rec_b = jnp.dot(h_b, whh_b_ref[...], preferred_element_type=f32)   # (Bp, 4Hp)
        pre_f = xwf_ref[t] + rec_f        # loads exactly the 4Hp lanes needed
        pre_b = xwb_ref[tb] + rec_b
        h_f_new, c_f = gate_math(pre_f, c_f)
        h_b_new, c_b = gate_math(pre_b, c_b)
        h_f = h_f_new.astype(hf_ref.dtype)
        h_b = h_b_new.astype(hb_ref.dtype)
        hf_ref[t] = h_f
        hb_ref[tb] = h_b
        return h_f, c_f, h_b, c_b

    zc = jnp.zeros((Bp, Hp), f32)
    zh = jnp.zeros((Bp, Hp), mxu_dtype)
    jax.lax.fori_loop(0, T, step, (zh, zc, zh, zc), unroll=unroll)

    # ---- Phase 3: fused embedding — split W_emb (no fwd/bwd lane concat), two large
    # matmuls and one lane-dense slab store of the whole (T, Bp, nOutP) output.
    hf_all = hf_ref[...].reshape(T * Bp, Hp)
    hb_all = hb_ref[...].reshape(T * Bp, Hp)
    out = (jnp.dot(hf_all, wemb_f_ref[...], preferred_element_type=f32)
           + jnp.dot(hb_all, wemb_b_ref[...], preferred_element_type=f32)
           + bemb_ref[...])
    out_ref[...] = out.reshape(T, Bp, nOutP).astype(out_ref.dtype)


def _round_up(v, m):
    return ((v + m - 1) // m) * m


def _pack_gate_cols(w, H, Hp):
    """(4H, X) PyTorch gate-stacked weight -> (X, 4*Hp) transposed, each gate's
    H real columns zero-padded to Hp lanes (keeps gate slices 128-lane aligned)."""
    X = w.shape[1]
    wt = w.T.reshape(X, 4, H)
    wt = jnp.pad(wt, ((0, 0), (0, 0), (0, Hp - H)))
    return wt.reshape(X, 4 * Hp)


def _pack_gate_bias(b, H, Hp):
    b4 = jnp.pad(b.reshape(4, H), ((0, 0), (0, Hp - H)))
    return b4.reshape(1, 4 * Hp)


def bidirectional_lstm(x, params, *, mxu_dtype=jnp.float32):
    """x: (T, B, nIn) float32.  Returns (T, B, nOut) float32.

    mxu_dtype=jnp.bfloat16 casts x, all weights, and the hidden-state scratches for
    the MXU matmuls (f32 accumulation, f32 gate math).  Biggest win on v6e/v7x;
    on v5e (no bf16 VPU/EUP, 128-wide MXU tiles) the gain is mostly DMA/footprint.
    """
    T, B, nIn = x.shape
    H = params["whh_f"].shape[1]           # weight_hh: (4H, H)
    nOut = params["w_emb"].shape[0]        # embedding weight: (nOut, 2H)

    Bp = _round_up(B, 8)                   # full sublane groups
    Hp = _round_up(H, 128)                 # lane-aligned gate blocks
    H4p = 4 * Hp
    nOutP = _round_up(nOut, 128)           # lane-dense output store
    if Bp != B:
        x = jnp.pad(x, ((0, 0), (0, Bp - B), (0, 0)))

    # Weight prep: transpose, per-gate lane padding, bias folding (b_ih + b_hh).
    # Zero padding keeps the padded hidden lanes exactly 0 through the recurrence.
    wih_f = _pack_gate_cols(params["wih_f"], H, Hp)                           # (nIn, 4Hp)
    wih_b = _pack_gate_cols(params["wih_b"], H, Hp)
    whh_f = jnp.pad(_pack_gate_cols(params["whh_f"], H, Hp), ((0, Hp - H), (0, 0)))  # (Hp, 4Hp)
    whh_b = jnp.pad(_pack_gate_cols(params["whh_b"], H, Hp), ((0, Hp - H), (0, 0)))
    bias_f = _pack_gate_bias(params["bih_f"] + params["bhh_f"], H, Hp)        # (1, 4Hp) f32
    bias_b = _pack_gate_bias(params["bih_b"] + params["bhh_b"], H, Hp)
    wemb_f = jnp.pad(params["w_emb"][:, :H].T, ((0, Hp - H), (0, nOutP - nOut)))   # (Hp, nOutP)
    wemb_b = jnp.pad(params["w_emb"][:, H:].T, ((0, Hp - H), (0, nOutP - nOut)))
    bemb = jnp.pad(params["b_emb"], (0, nOutP - nOut)).reshape(1, nOutP)      # f32

    x = x.astype(mxu_dtype)
    wih_f = wih_f.astype(mxu_dtype)
    wih_b = wih_b.astype(mxu_dtype)
    whh_f = whh_f.astype(mxu_dtype)
    whh_b = whh_b.astype(mxu_dtype)
    wemb_f = wemb_f.astype(mxu_dtype)
    wemb_b = wemb_b.astype(mxu_dtype)
    # biases stay f32 (added after the f32-accumulated matmuls).

    # VMEM budget: actual footprint + headroom, clamped to physical VMEM.
    msz = jnp.dtype(mxu_dtype).itemsize
    footprint = (
        T * Bp * nIn * msz                    # x
        + 2 * nIn * H4p * msz                 # wih_f / wih_b
        + 2 * H4p * 4                         # bias_f / bias_b (f32)
        + 2 * Hp * H4p * msz                  # whh_f / whh_b
        + 2 * Hp * nOutP * msz                # wemb_f / wemb_b
        + nOutP * 4                           # bemb
        + T * Bp * nOutP * 4                  # output
        + 2 * T * Bp * H4p * 4                # xwf / xwb scratch (f32 pre-activations)
        + 2 * T * Bp * Hp * msz               # hf / hb scratch (MXU dtype)
    )
    try:
        phys_vmem = int(pltpu.get_tpu_info().vmem_capacity_bytes)
    except Exception:
        phys_vmem = 128 << 20
    vmem_limit = max(16 << 20, min(int(footprint * 1.25) + (4 << 20), phys_vmem))

    vmem = pl.BlockSpec(memory_space=pltpu.MemorySpace.VMEM)
    import functools
    kernel = functools.partial(_bilstm_kernel, unroll=min(8, T))
    out = pl.pallas_call(
        kernel,
        out_shape=jax.ShapeDtypeStruct((T, Bp, nOutP), jnp.float32),
        in_specs=[vmem] * 10,
        out_specs=vmem,
        scratch_shapes=[
            pltpu.VMEM((T, Bp, H4p), jnp.float32),   # xwf: x @ W_ih_f (+bias)
            pltpu.VMEM((T, Bp, H4p), jnp.float32),   # xwb: x @ W_ih_b (+bias)
            pltpu.VMEM((T, Bp, Hp), mxu_dtype),      # forward hidden states
            pltpu.VMEM((T, Bp, Hp), mxu_dtype),      # backward hidden states
        ],
        compiler_params=pltpu.CompilerParams(vmem_limit_bytes=vmem_limit),
    )(x, wih_f, wih_b, bias_f, bias_b, whh_f, whh_b, wemb_f, wemb_b, bemb)
    return out[:, :B, :nOut]


def init_params(key, nIn, nHidden, nOut):
    """Deterministic PyTorch-style uniform(-1/sqrt(H), 1/sqrt(H)) init."""
    ks = jax.random.split(key, 10)
    kl = 1.0 / jnp.sqrt(nHidden)
    ke = 1.0 / jnp.sqrt(2 * nHidden)
    u = lambda k, shape, s: jax.random.uniform(k, shape, jnp.float32, -s, s)
    return {
        "wih_f": u(ks[0], (4 * nHidden, nIn), kl),
        "whh_f": u(ks[1], (4 * nHidden, nHidden), kl),
        "bih_f": u(ks[2], (4 * nHidden,), kl),
        "bhh_f": u(ks[3], (4 * nHidden,), kl),
        "wih_b": u(ks[4], (4 * nHidden, nIn), kl),
        "whh_b": u(ks[5], (4 * nHidden, nHidden), kl),
        "bih_b": u(ks[6], (4 * nHidden,), kl),
        "bhh_b": u(ks[7], (4 * nHidden,), kl),
        "w_emb": u(ks[8], (nOut, 2 * nHidden), ke),
        "b_emb": u(ks[9], (nOut,), ke),
    }


def _reference(x, params):
    """Pure-JAX reference matching PyTorch nn.LSTM(bidirectional) + Linear."""
    T, B, _ = x.shape
    H = params["whh_f"].shape[1]

    def run_dir(xs, wih, whh, bih, bhh):
        def step(carry, x_t):
            h, c = carry
            g = x_t @ wih.T + h @ whh.T + bih + bhh
            i = jax.nn.sigmoid(g[:, 0 * H:1 * H])
            f = jax.nn.sigmoid(g[:, 1 * H:2 * H])
            gg = jnp.tanh(g[:, 2 * H:3 * H])
            o = jax.nn.sigmoid(g[:, 3 * H:4 * H])
            c = f * c + i * gg
            h = o * jnp.tanh(c)
            return (h, c), h
        h0 = jnp.zeros((B, H), jnp.float32)
        _, hs = jax.lax.scan(step, (h0, h0), xs)
        return hs

    fwd = run_dir(x, params["wih_f"], params["whh_f"],
                  params["bih_f"], params["bhh_f"])
    bwd = run_dir(x[::-1], params["wih_b"], params["whh_b"],
                  params["bih_b"], params["bhh_b"])[::-1]
    rec = jnp.concatenate([fwd, bwd], axis=-1)            # (T, B, 2H)
    out = rec @ params["w_emb"].T + params["b_emb"]
    return out


if __name__ == "__main__":
    T, B, nIn, nHidden, nOut = 8, 2, 32, 32, 16
    key = jax.random.PRNGKey(0)
    kx, kp = jax.random.split(key)
    x = jax.random.normal(kx, (T, B, nIn), jnp.float32)
    params = init_params(kp, nIn, nHidden, nOut)

    ref = jax.block_until_ready(_reference(x, params))

    # f32 MXU path — tight check (tolerance covers accumulation-order deltas).
    out = jax.block_until_ready(bidirectional_lstm(x, params))
    assert out.shape == (T, B, nOut)
    assert jnp.allclose(out, ref, atol=1e-4, rtol=1e-4), "f32 mismatch vs reference"

    # bf16 MXU operands / f32 accumulation & gate math — looser, bf16-appropriate check.
    out_bf16 = jax.block_until_ready(
        bidirectional_lstm(x, params, mxu_dtype=jnp.bfloat16))
    assert out_bf16.shape == (T, B, nOut)
    assert jnp.allclose(out_bf16, ref, atol=5e-2, rtol=5e-2), "bf16 mismatch vs reference"

    print("KERNEL_OK")
</pallas_src>

<mosaic_0001>
module attributes {stable_mosaic.version = 11 : i64} {
  func.func @_bilstm_kernel(%arg0: memref<8x8x32xf32, #tpu.memory_space<vmem>>, %arg1: memref<32x512xf32, #tpu.memory_space<vmem>>, %arg2: memref<32x512xf32, #tpu.memory_space<vmem>>, %arg3: memref<1x512xf32, #tpu.memory_space<vmem>>, %arg4: memref<1x512xf32, #tpu.memory_space<vmem>>, %arg5: memref<128x512xf32, #tpu.memory_space<vmem>>, %arg6: memref<128x512xf32, #tpu.memory_space<vmem>>, %arg7: memref<128x128xf32, #tpu.memory_space<vmem>>, %arg8: memref<128x128xf32, #tpu.memory_space<vmem>>, %arg9: memref<1x128xf32, #tpu.memory_space<vmem>>, %arg10: memref<8x8x128xf32, #tpu.memory_space<vmem>>, %arg11: memref<8x8x512xf32, #tpu.memory_space<vmem>>, %arg12: memref<8x8x512xf32, #tpu.memory_space<vmem>>, %arg13: memref<8x8x128xf32, #tpu.memory_space<vmem>>, %arg14: memref<8x8x128xf32, #tpu.memory_space<vmem>>) attributes {dimension_semantics = [], scalar_prefetch = 0 : i64, scratch_operands = 4 : i64, tpu.core_type = #tpu.core_type<tc>} {
    %c0 = arith.constant 0 : index
    %c0_0 = arith.constant 0 : index
    %c0_1 = arith.constant 0 : index
    %0 = vector.load %arg0[%c0, %c0_0, %c0_1] : memref<8x8x32xf32, #tpu.memory_space<vmem>>, vector<8x8x32xf32>
    %1 = vector.shape_cast %0 : vector<8x8x32xf32> to vector<64x32xf32>
    %c0_2 = arith.constant 0 : index
    %c0_3 = arith.constant 0 : index
    %2 = vector.load %arg1[%c0_2, %c0_3] : memref<32x512xf32, #tpu.memory_space<vmem>>, vector<32x512xf32>
    %cst = arith.constant dense<0.000000e+00> : vector<64x512xf32>
    %3 = tpu.matmul %1, %2, %cst {dimension_numbers = #tpu.dot_dimension_numbers<[1], [0], [0], [1], [0, 0, 1, 1], [], []>} : vector<64x32xf32>, vector<32x512xf32>, vector<64x512xf32> -> vector<64x512xf32>
    %c0_4 = arith.constant 0 : index
    %c0_5 = arith.constant 0 : index
    %4 = vector.load %arg3[%c0_4, %c0_5] : memref<1x512xf32, #tpu.memory_space<vmem>>, vector<1x512xf32>
    %5 = vector.broadcast %4 : vector<1x512xf32> to vector<64x512xf32>
    %6 = arith.addf %3, %5 : vector<64x512xf32>
    %7 = vector.shape_cast %6 : vector<64x512xf32> to vector<8x8x512xf32>
    %c0_6 = arith.constant 0 : index
    %c0_7 = arith.constant 0 : index
    %c0_8 = arith.constant 0 : index
    %8 = vector.load %arg11[%c0_6, %c0_7, %c0_8] : memref<8x8x512xf32, #tpu.memory_space<vmem>>, vector<8x8x512xf32>
    tpu.vector_store %arg11[%c0_6, %c0_7, %c0_8], %7 {strides = array<i32>} : memref<8x8x512xf32, #tpu.memory_space<vmem>>, vector<8x8x512xf32>,
    %c0_9 = arith.constant 0 : index
    %c0_10 = arith.constant 0 : index
    %9 = vector.load %arg2[%c0_9, %c0_10] : memref<32x512xf32, #tpu.memory_space<vmem>>, vector<32x512xf32>
    %cst_11 = arith.constant dense<0.000000e+00> : vector<64x512xf32>
    %10 = tpu.matmul %1, %9, %cst_11 {dimension_numbers = #tpu.dot_dimension_numbers<[1], [0], [0], [1], [0, 0, 1, 1], [], []>} : vector<64x32xf32>, vector<32x512xf32>, vector<64x512xf32> -> vector<64x512xf32>
    %c0_12 = arith.constant 0 : index
    %c0_13 = arith.constant 0 : index
    %11 = vector.load %arg4[%c0_12, %c0_13] : memref<1x512xf32, #tpu.memory_space<vmem>>, vector<1x512xf32>
    %12 = vector.broadcast %11 : vector<1x512xf32> to vector<64x512xf32>
    %13 = arith.addf %10, %12 : vector<64x512xf32>
    %14 = vector.shape_cast %13 : vector<64x512xf32> to vector<8x8x512xf32>
    %c0_14 = arith.constant 0 : index
    %c0_15 = arith.constant 0 : index
    %c0_16 = arith.constant 0 : index
    %15 = vector.load %arg12[%c0_14, %c0_15, %c0_16] : memref<8x8x512xf32, #tpu.memory_space<vmem>>, vector<8x8x512xf32>
    tpu.vector_store %arg12[%c0_14, %c0_15, %c0_16], %14 {strides = array<i32>} : memref<8x8x512xf32, #tpu.memory_space<vmem>>, vector<8x8x512xf32>,
    %cst_17 = arith.constant 0.000000e+00 : f32
    %16 = vector.broadcast %cst_17 : f32 to vector<8x128xf32>
    %cst_18 = arith.constant 0.000000e+00 : f32
    %17 = vector.broadcast %cst_18 : f32 to vector<8x128xf32>
    %c0_i32 = arith.constant 0 : i32
    %c7_i32 = arith.constant 7 : i32
    %18 = arith.subi %c7_i32, %c0_i32 : i32
    %c0_19 = arith.constant 0 : index
    %c0_20 = arith.constant 0 : index
    %19 = vector.load %arg5[%c0_19, %c0_20] : memref<128x512xf32, #tpu.memory_space<vmem>>, vector<128x512xf32>
    %cst_21 = arith.constant dense<0.000000e+00> : vector<8x512xf32>
    %20 = tpu.matmul %17, %19, %cst_21 {dimension_numbers = #tpu.dot_dimension_numbers<[1], [0], [0], [1], [0, 0, 1, 1], [], []>} : vector<8x128xf32>, vector<128x512xf32>, vector<8x512xf32> -> vector<8x512xf32>
    %c0_22 = arith.constant 0 : index
    %c0_23 = arith.constant 0 : index
    %21 = vector.load %arg6[%c0_22, %c0_23] : memref<128x512xf32, #tpu.memory_space<vmem>>, vector<128x512xf32>
    %cst_24 = arith.constant dense<0.000000e+00> : vector<8x512xf32>
    %22 = tpu.matmul %17, %21, %cst_24 {dimension_numbers = #tpu.dot_dimension_numbers<[1], [0], [0], [1], [0, 0, 1, 1], [], []>} : vector<8x128xf32>, vector<128x512xf32>, vector<8x512xf32> -> vector<8x512xf32>
    %23 = arith.index_cast %c0_i32 : i32 to index
    %c0_25 = arith.constant 0 : index
    %c0_26 = arith.constant 0 : index
    %24 = vector.load %arg11[%23, %c0_25, %c0_26] : memref<8x8x512xf32, #tpu.memory_space<vmem>>, vector<1x8x512xf32>
    %25 = vector.shape_cast %24 : vector<1x8x512xf32> to vector<8x512xf32>
    %26 = arith.addf %25, %20 : vector<8x512xf32>
    %27 = arith.index_cast %18 : i32 to index
    %c0_27 = arith.constant 0 : index
    %c0_28 = arith.constant 0 : index
    %28 = vector.load %arg12[%27, %c0_27, %c0_28] : memref<8x8x512xf32, #tpu.memory_space<vmem>>, vector<1x8x512xf32>
    %29 = vector.shape_cast %28 : vector<1x8x512xf32> to vector<8x512xf32>
    %30 = arith.addf %29, %22 : vector<8x512xf32>
    %31 = vector.extract_strided_slice %26 {offsets = [0, 0], sizes = [8, 128], strides = [1, 1]} : vector<8x512xf32> to vector<8x128xf32>
    %32 = arith.negf %31 : vector<8x128xf32>
    %33 = math.exp %32 : vector<8x128xf32>
    %cst_29 = arith.constant 1.000000e+00 : f32
    %34 = vector.broadcast %cst_29 : f32 to vector<8x128xf32>
    %35 = arith.addf %34, %33 : vector<8x128xf32>
    %36 = arith.divf %34, %35 : vector<8x128xf32>
    %37 = vector.extract_strided_slice %26 {offsets = [0, 128], sizes = [8, 128], strides = [1, 1]} : vector<8x512xf32> to vector<8x128xf32>
    %38 = arith.negf %37 : vector<8x128xf32>
    %39 = math.exp %38 : vector<8x128xf32>
    %cst_30 = arith.constant 1.000000e+00 : f32
    %40 = vector.broadcast %cst_30 : f32 to vector<8x128xf32>
    %41 = arith.addf %40, %39 : vector<8x128xf32>
    %42 = arith.divf %40, %41 : vector<8x128xf32>
    %43 = vector.extract_strided_slice %26 {offsets = [0, 256], sizes = [8, 128], strides = [1, 1]} : vector<8x512xf32> to vector<8x128xf32>
    %44 = math.tanh %43 : vector<8x128xf32>
    %45 = vector.extract_strided_slice %26 {offsets = [0, 384], sizes = [8, 128], strides = [1, 1]} : vector<8x512xf32> to vector<8x128xf32>
    %46 = arith.negf %45 : vector<8x128xf32>
    %47 = math.exp %46 : vector<8x128xf32>
    %cst_31 = arith.constant 1.000000e+00 : f32
    %48 = vector.broadcast %cst_31 : f32 to vector<8x128xf32>
    %49 = arith.addf %48, %47 : vector<8x128xf32>
    %50 = arith.divf %48, %49 : vector<8x128xf32>
    %51 = arith.mulf %42, %16 : vector<8x128xf32>
    %52 = arith.mulf %36, %44 : vector<8x128xf32>
    %53 = arith.addf %51, %52 : vector<8x128xf32>
    %54 = math.tanh %53 : vector<8x128xf32>
    %55 = arith.mulf %50, %54 : vector<8x128xf32>
    %56 = vector.extract_strided_slice %30 {offsets = [0, 0], sizes = [8, 128], strides = [1, 1]} : vector<8x512xf32> to vector<8x128xf32>
    %57 = arith.negf %56 : vector<8x128xf32>
    %58 = math.exp %57 : vector<8x128xf32>
    %cst_32 = arith.constant 1.000000e+00 : f32
    %59 = vector.broadcast %cst_32 : f32 to vector<8x128xf32>
    %60 = arith.addf %59, %58 : vector<8x128xf32>
    %61 = arith.divf %59, %60 : vector<8x128xf32>
    %62 = vector.extract_strided_slice %30 {offsets = [0, 128], sizes = [8, 128], strides = [1, 1]} : vector<8x512xf32> to vector<8x128xf32>
    %63 = arith.negf %62 : vector<8x128xf32>
    %64 = math.exp %63 : vector<8x128xf32>
    %cst_33 = arith.constant 1.000000e+00 : f32
    %65 = vector.broadcast %cst_33 : f32 to vector<8x128xf32>
    %66 = arith.addf %65, %64 : vector<8x128xf32>
    %67 = arith.divf %65, %66 : vector<8x128xf32>
    %68 = vector.extract_strided_slice %30 {offsets = [0, 256], sizes = [8, 128], strides = [1, 1]} : vector<8x512xf32> to vector<8x128xf32>
    %69 = math.tanh %68 : vector<8x128xf32>
    %70 = vector.extract_strided_slice %30 {offsets = [0, 384], sizes = [8, 128], strides = [1, 1]} : vector<8x512xf32> to vector<8x128xf32>
    %71 = arith.negf %70 : vector<8x128xf32>
    %72 = math.exp %71 : vector<8x128xf32>
    %cst_34 = arith.constant 1.000000e+00 : f32
    %73 = vector.broadcast %cst_34 : f32 to vector<8x128xf32>
    %74 = arith.addf %73, %72 : vector<8x128xf32>
    %75 = arith.divf %73, %74 : vector<8x128xf32>
    %76 = arith.mulf %67, %16 : vector<8x128xf32>
    %77 = arith.mulf %61, %69 : vector<8x128xf32>
    %78 = arith.addf %76, %77 : vector<8x128xf32>
    %79 = math.tanh %78 : vector<8x128xf32>
    %80 = arith.mulf %75, %79 : vector<8x128xf32>
    %81 = arith.index_cast %c0_i32 : i32 to index
    %c0_35 = arith.constant 0 : index
    %c0_36 = arith.constant 0 : index
    %82 = vector.load %arg13[%81, %c0_35, %c0_36] : memref<8x8x128xf32, #tpu.memory_space<vmem>>, vector<1x8x128xf32>
    %83 = vector.shape_cast %82 : vector<1x8x128xf32> to vector<8x128xf32>
    %84 = vector.shape_cast %55 : vector<8x128xf32> to vector<1x8x128xf32>
    tpu.vector_store %arg13[%81, %c0_35, %c0_36], %84 {strides = array<i32>} : memref<8x8x128xf32, #tpu.memory_space<vmem>>, vector<1x8x128xf32>,
    %85 = arith.index_cast %18 : i32 to index
    %c0_37 = arith.constant 0 : index
    %c0_38 = arith.constant 0 : index
    %86 = vector.load %arg14[%85, %c0_37, %c0_38] : memref<8x8x128xf32, #tpu.memory_space<vmem>>, vector<1x8x128xf32>
    %87 = vector.shape_cast %86 : vector<1x8x128xf32> to vector<8x128xf32>
    %88 = vector.shape_cast %80 : vector<8x128xf32> to vector<1x8x128xf32>
    tpu.vector_store %arg14[%85, %c0_37, %c0_38], %88 {strides = array<i32>} : memref<8x8x128xf32, #tpu.memory_space<vmem>>, vector<1x8x128xf32>,
    %c1_i32 = arith.constant 1 : i32
    %c7_i32_39 = arith.constant 7 : i32
    %89 = arith.subi %c7_i32_39, %c1_i32 : i32
    %c0_40 = arith.constant 0 : index
    %c0_41 = arith.constant 0 : index
    %90 = vector.load %arg5[%c0_40, %c0_41] : memref<128x512xf32, #tpu.memory_space<vmem>>, vector<128x512xf32>
    %cst_42 = arith.constant dense<0.000000e+00> : vector<8x512xf32>
    %91 = tpu.matmul %55, %90, %cst_42 {dimension_numbers = #tpu.dot_dimension_numbers<[1], [0], [0], [1], [0, 0, 1, 1], [], []>} : vector<8x128xf32>, vector<128x512xf32>, vector<8x512xf32> -> vector<8x512xf32>
    %c0_43 = arith.constant 0 : index
    %c0_44 = arith.constant 0 : index
    %92 = vector.load %arg6[%c0_43, %c0_44] : memref<128x512xf32, #tpu.memory_space<vmem>>, vector<128x512xf32>
    %cst_45 = arith.constant dense<0.000000e+00> : vector<8x512xf32>
    %93 = tpu.matmul %80, %92, %cst_45 {dimension_numbers = #tpu.dot_dimension_numbers<[1], [0], [0], [1], [0, 0, 1, 1], [], []>} : vector<8x128xf32>, vector<128x512xf32>, vector<8x512xf32> -> vector<8x512xf32>
    %94 = arith.index_cast %c1_i32 : i32 to index
    %c0_46 = arith.constant 0 : index
    %c0_47 = arith.constant 0 : index
    %95 = vector.load %arg11[%94, %c0_46, %c0_47] : memref<8x8x512xf32, #tpu.memory_space<vmem>>, vector<1x8x512xf32>
    %96 = vector.shape_cast %95 : vector<1x8x512xf32> to vector<8x512xf32>
    %97 = arith.addf %96, %91 : vector<8x512xf32>
    %98 = arith.index_cast %89 : i32 to index
    %c0_48 = arith.constant 0 : index
    %c0_49 = arith.constant 0 : index
    %99 = vector.load %arg12[%98, %c0_48, %c0_49] : memref<8x8x512xf32, #tpu.memory_space<vmem>>, vector<1x8x512xf32>
    %100 = vector.shape_cast %99 : vector<1x8x512xf32> to vector<8x512xf32>
    %101 = arith.addf %100, %93 : vector<8x512xf32>
    %102 = vector.extract_strided_slice %97 {offsets = [0, 0], sizes = [8, 128], strides = [1, 1]} : vector<8x512xf32> to vector<8x128xf32>
    %103 = arith.negf %102 : vector<8x128xf32>
    %104 = math.exp %103 : vector<8x128xf32>
    %cst_50 = arith.constant 1.000000e+00 : f32
    %105 = vector.broadcast %cst_50 : f32 to vector<8x128xf32>
    %106 = arith.addf %105, %104 : vector<8x128xf32>
    %107 = arith.divf %105, %106 : vector<8x128xf32>
    %108 = vector.extract_strided_slice %97 {offsets = [0, 128], sizes = [8, 128], strides = [1, 1]} : vector<8x512xf32> to vector<8x128xf32>
    %109 = arith.negf %108 : vector<8x128xf32>
    %110 = math.exp %109 : vector<8x128xf32>
    %cst_51 = arith.constant 1.000000e+00 : f32
    %111 = vector.broadcast %cst_51 : f32 to vector<8x128xf32>
    %112 = arith.addf %111, %110 : vector<8x128xf32>
    %113 = arith.divf %111, %112 : vector<8x128xf32>
    %114 = vector.extract_strided_slice %97 {offsets = [0, 256], sizes = [8, 128], strides = [1, 1]} : vector<8x512xf32> to vector<8x128xf32>
    %115 = math.tanh %114 : vector<8x128xf32>
    %116 = vector.extract_strided_slice %97 {offsets = [0, 384], sizes = [8, 128], strides = [1, 1]} : vector<8x512xf32> to vector<8x128xf32>
    %117 = arith.negf %116 : vector<8x128xf32>
    %118 = math.exp %117 : vector<8x128xf32>
    %cst_52 = arith.constant 1.000000e+00 : f32
    %119 = vector.broadcast %cst_52 : f32 to vector<8x128xf32>
    %120 = arith.addf %119, %118 : vector<8x128xf32>
    %121 = arith.divf %119, %120 : vector<8x128xf32>
    %122 = arith.mulf %113, %53 : vector<8x128xf32>
    %123 = arith.mulf %107, %115 : vector<8x128xf32>
    %124 = arith.addf %122, %123 : vector<8x128xf32>
    %125 = math.tanh %124 : vector<8x128xf32>
    %126 = arith.mulf %121, %125 : vector<8x128xf32>
    %127 = vector.extract_strided_slice %101 {offsets = [0, 0], sizes = [8, 128], strides = [1, 1]} : vector<8x512xf32> to vector<8x128xf32>
    %128 = arith.negf %127 : vector<8x128xf32>
    %129 = math.exp %128 : vector<8x128xf32>
    %cst_53 = arith.constant 1.000000e+00 : f32
    %130 = vector.broadcast %cst_53 : f32 to vector<8x128xf32>
    %131 = arith.addf %130, %129 : vector<8x128xf32>
    %132 = arith.divf %130, %131 : vector<8x128xf32>
    %133 = vector.extract_strided_slice %101 {offsets = [0, 128], sizes = [8, 128], strides = [1, 1]} : vector<8x512xf32> to vector<8x128xf32>
    %134 = arith.negf %133 : vector<8x128xf32>
    %135 = math.exp %134 : vector<8x128xf32>
    %cst_54 = arith.constant 1.000000e+00 : f32
    %136 = vector.broadcast %cst_54 : f32 to vector<8x128xf32>
    %137 = arith.addf %136, %135 : vector<8x128xf32>
    %138 = arith.divf %136, %137 : vector<8x128xf32>
    %139 = vector.extract_strided_slice %101 {offsets = [0, 256], sizes = [8, 128], strides = [1, 1]} : vector<8x512xf32> to vector<8x128xf32>
    %140 = math.tanh %139 : vector<8x128xf32>
    %141 = vector.extract_strided_slice %101 {offsets = [0, 384], sizes = [8, 128], strides = [1, 1]} : vector<8x512xf32> to vector<8x128xf32>
    %142 = arith.negf %141 : vector<8x128xf32>
    %143 = math.exp %142 : vector<8x128xf32>
    %cst_55 = arith.constant 1.000000e+00 : f32
    %144 = vector.broadcast %cst_55 : f32 to vector<8x128xf32>
    %145 = arith.addf %144, %143 : vector<8x128xf32>
    %146 = arith.divf %144, %145 : vector<8x128xf32>
    %147 = arith.mulf %138, %78 : vector<8x128xf32>
    %148 = arith.mulf %132, %140 : vector<8x128xf32>
    %149 = arith.addf %147, %148 : vector<8x128xf32>
    %150 = math.tanh %149 : vector<8x128xf32>
    %151 = arith.mulf %146, %150 : vector<8x128xf32>
    %152 = arith.index_cast %c1_i32 : i32 to index
    %c0_56 = arith.constant 0 : index
    %c0_57 = arith.constant 0 : index
    %153 = vector.load %arg13[%152, %c0_56, %c0_57] : memref<8x8x128xf32, #tpu.memory_space<vmem>>, vector<1x8x128xf32>
    %154 = vector.shape_cast %153 : vector<1x8x128xf32> to vector<8x128xf32>
    %155 = vector.shape_cast %126 : vector<8x128xf32> to vector<1x8x128xf32>
    tpu.vector_store %arg13[%152, %c0_56, %c0_57], %155 {strides = array<i32>} : memref<8x8x128xf32, #tpu.memory_space<vmem>>, vector<1x8x128xf32>,
    %156 = arith.index_cast %89 : i32 to index
    %c0_58 = arith.constant 0 : index
    %c0_59 = arith.constant 0 : index
    %157 = vector.load %arg14[%156, %c0_58, %c0_59] : memref<8x8x128xf32, #tpu.memory_space<vmem>>, vector<1x8x128xf32>
    %158 = vector.shape_cast %157 : vector<1x8x128xf32> to vector<8x128xf32>
    %159 = vector.shape_cast %151 : vector<8x128xf32> to vector<1x8x128xf32>
    tpu.vector_store %arg14[%156, %c0_58, %c0_59], %159 {strides = array<i32>} : memref<8x8x128xf32, #tpu.memory_space<vmem>>, vector<1x8x128xf32>,
    %c2_i32 = arith.constant 2 : i32
    %c7_i32_60 = arith.constant 7 : i32
    %160 = arith.subi %c7_i32_60, %c2_i32 : i32
    %c0_61 = arith.constant 0 : index
    %c0_62 = arith.constant 0 : index
    %161 = vector.load %arg5[%c0_61, %c0_62] : memref<128x512xf32, #tpu.memory_space<vmem>>, vector<128x512xf32>
    %cst_63 = arith.constant dense<0.000000e+00> : vector<8x512xf32>
    %162 = tpu.matmul %126, %161, %cst_63 {dimension_numbers = #tpu.dot_dimension_numbers<[1], [0], [0], [1], [0, 0, 1, 1], [], []>} : vector<8x128xf32>, vector<128x512xf32>, vector<8x512xf32> -> vector<8x512xf32>
    %c0_64 = arith.constant 0 : index
    %c0_65 = arith.constant 0 : index
    %163 = vector.load %arg6[%c0_64, %c0_65] : memref<128x512xf32, #tpu.memory_space<vmem>>, vector<128x512xf32>
    %cst_66 = arith.constant dense<0.000000e+00> : vector<8x512xf32>
    %164 = tpu.matmul %151, %163, %cst_66 {dimension_numbers = #tpu.dot_dimension_numbers<[1], [0], [0], [1], [0, 0, 1, 1], [], []>} : vector<8x128xf32>, vector<128x512xf32>, vector<8x512xf32> -> vector<8x512xf32>
    %165 = arith.index_cast %c2_i32 : i32 to index
    %c0_67 = arith.constant 0 : index
    %c0_68 = arith.constant 0 : index
    %166 = vector.load %arg11[%165, %c0_67, %c0_68] : memref<8x8x512xf32, #tpu.memory_space<vmem>>, vector<1x8x512xf32>
    %167 = vector.shape_cast %166 : vector<1x8x512xf32> to vector<8x512xf32>
    %168 = arith.addf %167, %162 : vector<8x512xf32>
    %169 = arith.index_cast %160 : i32 to index
    %c0_69 = arith.constant 0 : index
    %c0_70 = arith.constant 0 : index
    %170 = vector.load %arg12[%169, %c0_69, %c0_70] : memref<8x8x512xf32, #tpu.memory_space<vmem>>, vector<1x8x512xf32>
    %171 = vector.shape_cast %170 : vector<1x8x512xf32> to vector<8x512xf32>
    %172 = arith.addf %171, %164 : vector<8x512xf32>
    %173 = vector.extract_strided_slice %168 {offsets = [0, 0], sizes = [8, 128], strides = [1, 1]} : vector<8x512xf32> to vector<8x128xf32>
    %174 = arith.negf %173 : vector<8x128xf32>
    %175 = math.exp %174 : vector<8x128xf32>
    %cst_71 = arith.constant 1.000000e+00 : f32
    %176 = vector.broadcast %cst_71 : f32 to vector<8x128xf32>
    %177 = arith.addf %176, %175 : vector<8x128xf32>
    %178 = arith.divf %176, %177 : vector<8x128xf32>
    %179 = vector.extract_strided_slice %168 {offsets = [0, 128], sizes = [8, 128], strides = [1, 1]} : vector<8x512xf32> to vector<8x128xf32>
    %180 = arith.negf %179 : vector<8x128xf32>
    %181 = math.exp %180 : vector<8x128xf32>
    %cst_72 = arith.constant 1.000000e+00 : f32
    %182 = vector.broadcast %cst_72 : f32 to vector<8x128xf32>
    %183 = arith.addf %182, %181 : vector<8x128xf32>
    %184 = arith.divf %182, %183 : vector<8x128xf32>
    %185 = vector.extract_strided_slice %168 {offsets = [0, 256], sizes = [8, 128], strides = [1, 1]} : vector<8x512xf32> to vector<8x128xf32>
    %186 = math.tanh %185 : vector<8x128xf32>
    %187 = vector.extract_strided_slice %168 {offsets = [0, 384], sizes = [8, 128], strides = [1, 1]} : vector<8x512xf32> to vector<8x128xf32>
    %188 = arith.negf %187 : vector<8x128xf32>
    %189 = math.exp %188 : vector<8x128xf32>
    %cst_73 = arith.constant 1.000000e+00 : f32
    %190 = vector.broadcast %cst_73 : f32 to vector<8x128xf32>
    %191 = arith.addf %190, %189 : vector<8x128xf32>
    %192 = arith.divf %190, %191 : vector<8x128xf32>
    %193 = arith.mulf %184, %124 : vector<8x128xf32>
    %194 = arith.mulf %178, %186 : vector<8x128xf32>
    %195 = arith.addf %193, %194 : vector<8x128xf32>
    %196 = math.tanh %195 : vector<8x128xf32>
    %197 = arith.mulf %192, %196 : vector<8x128xf32>
    %198 = vector.extract_strided_slice %172 {offsets = [0, 0], sizes = [8, 128], strides = [1, 1]} : vector<8x512xf32> to vector<8x128xf32>
    %199 = arith.negf %198 : vector<8x128xf32>
    %200 = math.exp %199 : vector<8x128xf32>
    %cst_74 = arith.constant 1.000000e+00 : f32
    %201 = vector.broadcast %cst_74 : f32 to vector<8x128xf32>
    %202 = arith.addf %201, %200 : vector<8x128xf32>
    %203 = arith.divf %201, %202 : vector<8x128xf32>
    %204 = vector.extract_strided_slice %172 {offsets = [0, 128], sizes = [8, 128], strides = [1, 1]} : vector<8x512xf32> to vector<8x128xf32>
    %205 = arith.negf %204 : vector<8x128xf32>
    %206 = math.exp %205 : vector<8x128xf32>
    %cst_75 = arith.constant 1.000000e+00 : f32
    %207 = vector.broadcast %cst_75 : f32 to vector<8x128xf32>
    %208 = arith.addf %207, %206 : vector<8x128xf32>
    %209 = arith.divf %207, %208 : vector<8x128xf32>
    %210 = vector.extract_strided_slice %172 {offsets = [0, 256], sizes = [8, 128], strides = [1, 1]} : vector<8x512xf32> to vector<8x128xf32>
    %211 = math.tanh %210 : vector<8x128xf32>
    %212 = vector.extract_strided_slice %172 {offsets = [0, 384], sizes = [8, 128], strides = [1, 1]} : vector<8x512xf32> to vector<8x128xf32>
    %213 = arith.negf %212 : vector<8x128xf32>
    %214 = math.exp %213 : vector<8x128xf32>
    %cst_76 = arith.constant 1.000000e+00 : f32
    %215 = vector.broadcast %cst_76 : f32 to vector<8x128xf32>
    %216 = arith.addf %215, %214 : vector<8x128xf32>
    %217 = arith.divf %215, %216 : vector<8x128xf32>
    %218 = arith.mulf %209, %149 : vector<8x128xf32>
    %219 = arith.mulf %203, %211 : vector<8x128xf32>
    %220 = arith.addf %218, %219 : vector<8x128xf32>
    %221 = math.tanh %220 : vector<8x128xf32>
    %222 = arith.mulf %217, %221 : vector<8x128xf32>
    %223 = arith.index_cast %c2_i32 : i32 to index
    %c0_77 = arith.constant 0 : index
    %c0_78 = arith.constant 0 : index
    %224 = vector.load %arg13[%223, %c0_77, %c0_78] : memref<8x8x128xf32, #tpu.memory_space<vmem>>, vector<1x8x128xf32>
    %225 = vector.shape_cast %224 : vector<1x8x128xf32> to vector<8x128xf32>
    %226 = vector.shape_cast %197 : vector<8x128xf32> to vector<1x8x128xf32>
    tpu.vector_store %arg13[%223, %c0_77, %c0_78], %226 {strides = array<i32>} : memref<8x8x128xf32, #tpu.memory_space<vmem>>, vector<1x8x128xf32>,
    %227 = arith.index_cast %160 : i32 to index
    %c0_79 = arith.constant 0 : index
    %c0_80 = arith.constant 0 : index
    %228 = vector.load %arg14[%227, %c0_79, %c0_80] : memref<8x8x128xf32, #tpu.memory_space<vmem>>, vector<1x8x128xf32>
    %229 = vector.shape_cast %228 : vector<1x8x128xf32> to vector<8x128xf32>
    %230 = vector.shape_cast %222 : vector<8x128xf32> to vector<1x8x128xf32>
    tpu.vector_store %arg14[%227, %c0_79, %c0_80], %230 {strides = array<i32>} : memref<8x8x128xf32, #tpu.memory_space<vmem>>, vector<1x8x128xf32>,
    %c3_i32 = arith.constant 3 : i32
    %c7_i32_81 = arith.constant 7 : i32
    %231 = arith.subi %c7_i32_81, %c3_i32 : i32
    %c0_82 = arith.constant 0 : index
    %c0_83 = arith.constant 0 : index
    %232 = vector.load %arg5[%c0_82, %c0_83] : memref<128x512xf32, #tpu.memory_space<vmem>>, vector<128x512xf32>
    %cst_84 = arith.constant dense<0.000000e+00> : vector<8x512xf32>
    %233 = tpu.matmul %197, %232, %cst_84 {dimension_numbers = #tpu.dot_dimension_numbers<[1], [0], [0], [1], [0, 0, 1, 1], [], []>} : vector<8x128xf32>, vector<128x512xf32>, vector<8x512xf32> -> vector<8x512xf32>
    %c0_85 = arith.constant 0 : index
    %c0_86 = arith.constant 0 : index
    %234 = vector.load %arg6[%c0_85, %c0_86] : memref<128x512xf32, #tpu.memory_space<vmem>>, vector<128x512xf32>
    %cst_87 = arith.constant dense<0.000000e+00> : vector<8x512xf32>
    %235 = tpu.matmul %222, %234, %cst_87 {dimension_numbers = #tpu.dot_dimension_numbers<[1], [0], [0], [1], [0, 0, 1, 1], [], []>} : vector<8x128xf32>, vector<128x512xf32>, vector<8x512xf32> -> vector<8x512xf32>
    %236 = arith.index_cast %c3_i32 : i32 to index
    %c0_88 = arith.constant 0 : index
    %c0_89 = arith.constant 0 : index
    %237 = vector.load %arg11[%236, %c0_88, %c0_89] : memref<8x8x512xf32, #tpu.memory_space<vmem>>, vector<1x8x512xf32>
    %238 = vector.shape_cast %237 : vector<1x8x512xf32> to vector<8x512xf32>
    %239 = arith.addf %238, %233 : vector<8x512xf32>
    %240 = arith.index_cast %231 : i32 to index
    %c0_90 = arith.constant 0 : index
    %c0_91 = arith.constant 0 : index
    %241 = vector.load %arg12[%240, %c0_90, %c0_91] : memref<8x8x512xf32, #tpu.memory_space<vmem>>, vector<1x8x512xf32>
    %242 = vector.shape_cast %241 : vector<1x8x512xf32> to vector<8x512xf32>
    %243 = arith.addf %242, %235 : vector<8x512xf32>
    %244 = vector.extract_strided_slice %239 {offsets = [0, 0], sizes = [8, 128], strides = [1, 1]} : vector<8x512xf32> to vector<8x128xf32>
    %245 = arith.negf %244 : vector<8x128xf32>
    %246 = math.exp %245 : vector<8x128xf32>
    %cst_92 = arith.constant 1.000000e+00 : f32
    %247 = vector.broadcast %cst_92 : f32 to vector<8x128xf32>
    %248 = arith.addf %247, %246 : vector<8x128xf32>
    %249 = arith.divf %247, %248 : vector<8x128xf32>
    %250 = vector.extract_strided_slice %239 {offsets = [0, 128], sizes = [8, 128], strides = [1, 1]} : vector<8x512xf32> to vector<8x128xf32>
    %251 = arith.negf %250 : vector<8x128xf32>
    %252 = math.exp %251 : vector<8x128xf32>
    %cst_93 = arith.constant 1.000000e+00 : f32
    %253 = vector.broadcast %cst_93 : f32 to vector<8x128xf32>
    %254 = arith.addf %253, %252 : vector<8x128xf32>
    %255 = arith.divf %253, %254 : vector<8x128xf32>
    %256 = vector.extract_strided_slice %239 {offsets = [0, 256], sizes = [8, 128], strides = [1, 1]} : vector<8x512xf32> to vector<8x128xf32>
    %257 = math.tanh %256 : vector<8x128xf32>
    %258 = vector.extract_strided_slice %239 {offsets = [0, 384], sizes = [8, 128], strides = [1, 1]} : vector<8x512xf32> to vector<8x128xf32>
    %259 = arith.negf %258 : vector<8x128xf32>
    %260 = math.exp %259 : vector<8x128xf32>
    %cst_94 = arith.constant 1.000000e+00 : f32
    %261 = vector.broadcast %cst_94 : f32 to vector<8x128xf32>
    %262 = arith.addf %261, %260 : vector<8x128xf32>
    %263 = arith.divf %261, %262 : vector<8x128xf32>
    %264 = arith.mulf %255, %195 : vector<8x128xf32>
    %265 = arith.mulf %249, %257 : vector<8x128xf32>
    %266 = arith.addf %264, %265 : vector<8x128xf32>
    %267 = math.tanh %266 : vector<8x128xf32>
    %268 = arith.mulf %263, %267 : vector<8x128xf32>
    %269 = vector.extract_strided_slice %243 {offsets = [0, 0], sizes = [8, 128], strides = [1, 1]} : vector<8x512xf32> to vector<8x128xf32>
    %270 = arith.negf %269 : vector<8x128xf32>
    %271 = math.exp %270 : vector<8x128xf32>
    %cst_95 = arith.constant 1.000000e+00 : f32
    %272 = vector.broadcast %cst_95 : f32 to vector<8x128xf32>
    %273 = arith.addf %272, %271 : vector<8x128xf32>
    %274 = arith.divf %272, %273 : vector<8x128xf32>
    %275 = vector.extract_strided_slice %243 {offsets = [0, 128], sizes = [8, 128], strides = [1, 1]} : vector<8x512xf32> to vector<8x128xf32>
    %276 = arith.negf %275 : vector<8x128xf32>
    %277 = math.exp %276 : vector<8x128xf32>
    %cst_96 = arith.constant 1.000000e+00 : f32
    %278 = vector.broadcast %cst_96 : f32 to vector<8x128xf32>
    %279 = arith.addf %278, %277 : vector<8x128xf32>
    %280 = arith.divf %278, %279 : vector<8x128xf32>
    %281 = vector.extract_strided_slice %243 {offsets = [0, 256], sizes = [8, 128], strides = [1, 1]} : vector<8x512xf32> to vector<8x128xf32>
    %282 = math.tanh %281 : vector<8x128xf32>
    %283 = vector.extract_strided_slice %243 {offsets = [0, 384], sizes = [8, 128], strides = [1, 1]} : vector<8x512xf32> to vector<8x128xf32>
    %284 = arith.negf %283 : vector<8x128xf32>
    %285 = math.exp %284 : vector<8x128xf32>
    %cst_97 = arith.constant 1.000000e+00 : f32
    %286 = vector.broadcast %cst_97 : f32 to vector<8x128xf32>
    %287 = arith.addf %286, %285 : vector<8x128xf32>
    %288 = arith.divf %286, %287 : vector<8x128xf32>
    %289 = arith.mulf %280, %220 : vector<8x128xf32>
    %290 = arith.mulf %274, %282 : vector<8x128xf32>
    %291 = arith.addf %289, %290 : vector<8x128xf32>
    %292 = math.tanh %291 : vector<8x128xf32>
    %293 = arith.mulf %288, %292 : vector<8x128xf32>
    %294 = arith.index_cast %c3_i32 : i32 to index
    %c0_98 = arith.constant 0 : index
    %c0_99 = arith.constant 0 : index
    %295 = vector.load %arg13[%294, %c0_98, %c0_99] : memref<8x8x128xf32, #tpu.memory_space<vmem>>, vector<1x8x128xf32>
    %296 = vector.shape_cast %295 : vector<1x8x128xf32> to vector<8x128xf32>
    %297 = vector.shape_cast %268 : vector<8x128xf32> to vector<1x8x128xf32>
    tpu.vector_store %arg13[%294, %c0_98, %c0_99], %297 {strides = array<i32>} : memref<8x8x128xf32, #tpu.memory_space<vmem>>, vector<1x8x128xf32>,
    %298 = arith.index_cast %231 : i32 to index
    %c0_100 = arith.constant 0 : index
    %c0_101 = arith.constant 0 : index
    %299 = vector.load %arg14[%298, %c0_100, %c0_101] : memref<8x8x128xf32, #tpu.memory_space<vmem>>, vector<1x8x128xf32>
    %300 = vector.shape_cast %299 : vector<1x8x128xf32> to vector<8x128xf32>
    %301 = vector.shape_cast %293 : vector<8x128xf32> to vector<1x8x128xf32>
    tpu.vector_store %arg14[%298, %c0_100, %c0_101], %301 {strides = array<i32>} : memref<8x8x128xf32, #tpu.memory_space<vmem>>, vector<1x8x128xf32>,
    %c4_i32 = arith.constant 4 : i32
    %c7_i32_102 = arith.constant 7 : i32
    %302 = arith.subi %c7_i32_102, %c4_i32 : i32
    %c0_103 = arith.constant 0 : index
    %c0_104 = arith.constant 0 : index
    %303 = vector.load %arg5[%c0_103, %c0_104] : memref<128x512xf32, #tpu.memory_space<vmem>>, vector<128x512xf32>
    %cst_105 = arith.constant dense<0.000000e+00> : vector<8x512xf32>
    %304 = tpu.matmul %268, %303, %cst_105 {dimension_numbers = #tpu.dot_dimension_numbers<[1], [0], [0], [1], [0, 0, 1, 1], [], []>} : vector<8x128xf32>, vector<128x512xf32>, vector<8x512xf32> -> vector<8x512xf32>
    %c0_106 = arith.constant 0 : index
    %c0_107 = arith.constant 0 : index
    %305 = vector.load %arg6[%c0_106, %c0_107] : memref<128x512xf32, #tpu.memory_space<vmem>>, vector<128x512xf32>
    %cst_108 = arith.constant dense<0.000000e+00> : vector<8x512xf32>
    %306 = tpu.matmul %293, %305, %cst_108 {dimension_numbers = #tpu.dot_dimension_numbers<[1], [0], [0], [1], [0, 0, 1, 1], [], []>} : vector<8x128xf32>, vector<128x512xf32>, vector<8x512xf32> -> vector<8x512xf32>
    %307 = arith.index_cast %c4_i32 : i32 to index
    %c0_109 = arith.constant 0 : index
    %c0_110 = arith.constant 0 : index
    %308 = vector.load %arg11[%307, %c0_109, %c0_110] : memref<8x8x512xf32, #tpu.memory_space<vmem>>, vector<1x8x512xf32>
    %309 = vector.shape_cast %308 : vector<1x8x512xf32> to vector<8x512xf32>
    %310 = arith.addf %309, %304 : vector<8x512xf32>
    %311 = arith.index_cast %302 : i32 to index
    %c0_111 = arith.constant 0 : index
    %c0_112 = arith.constant 0 : index
    %312 = vector.load %arg12[%311, %c0_111, %c0_112] : memref<8x8x512xf32, #tpu.memory_space<vmem>>, vector<1x8x512xf32>
    %313 = vector.shape_cast %312 : vector<1x8x512xf32> to vector<8x512xf32>
    %314 = arith.addf %313, %306 : vector<8x512xf32>
    %315 = vector.extract_strided_slice %310 {offsets = [0, 0], sizes = [8, 128], strides = [1, 1]} : vector<8x512xf32> to vector<8x128xf32>
    %316 = arith.negf %315 : vector<8x128xf32>
    %317 = math.exp %316 : vector<8x128xf32>
    %cst_113 = arith.constant 1.000000e+00 : f32
    %318 = vector.broadcast %cst_113 : f32 to vector<8x128xf32>
    %319 = arith.addf %318, %317 : vector<8x128xf32>
    %320 = arith.divf %318, %319 : vector<8x128xf32>
    %321 = vector.extract_strided_slice %310 {offsets = [0, 128], sizes = [8, 128], strides = [1, 1]} : vector<8x512xf32> to vector<8x128xf32>
    %322 = arith.negf %321 : vector<8x128xf32>
    %323 = math.exp %322 : vector<8x128xf32>
    %cst_114 = arith.constant 1.000000e+00 : f32
    %324 = vector.broadcast %cst_114 : f32 to vector<8x128xf32>
    %325 = arith.addf %324, %323 : vector<8x128xf32>
    %326 = arith.divf %324, %325 : vector<8x128xf32>
    %327 = vector.extract_strided_slice %310 {offsets = [0, 256], sizes = [8, 128], strides = [1, 1]} : vector<8x512xf32> to vector<8x128xf32>
    %328 = math.tanh %327 : vector<8x128xf32>
    %329 = vector.extract_strided_slice %310 {offsets = [0, 384], sizes = [8, 128], strides = [1, 1]} : vector<8x512xf32> to vector<8x128xf32>
    %330 = arith.negf %329 : vector<8x128xf32>
    %331 = math.exp %330 : vector<8x128xf32>
    %cst_115 = arith.constant 1.000000e+00 : f32
    %332 = vector.broadcast %cst_115 : f32 to vector<8x128xf32>
    %333 = arith.addf %332, %331 : vector<8x128xf32>
    %334 = arith.divf %332, %333 : vector<8x128xf32>
    %335 = arith.mulf %326, %266 : vector<8x128xf32>
    %336 = arith.mulf %320, %328 : vector<8x128xf32>
    %337 = arith.addf %335, %336 : vector<8x128xf32>
    %338 = math.tanh %337 : vector<8x128xf32>
    %339 = arith.mulf %334, %338 : vector<8x128xf32>
    %340 = vector.extract_strided_slice %314 {offsets = [0, 0], sizes = [8, 128], strides = [1, 1]} : vector<8x512xf32> to vector<8x128xf32>
    %341 = arith.negf %340 : vector<8x128xf32>
    %342 = math.exp %341 : vector<8x128xf32>
    %cst_116 = arith.constant 1.000000e+00 : f32
    %343 = vector.broadcast %cst_116 : f32 to vector<8x128xf32>
    %344 = arith.addf %343, %342 : vector<8x128xf32>
    %345 = arith.divf %343, %344 : vector<8x128xf32>
    %346 = vector.extract_strided_slice %314 {offsets = [0, 128], sizes = [8, 128], strides = [1, 1]} : vector<8x512xf32> to vector<8x128xf32>
    %347 = arith.negf %346 : vector<8x128xf32>
    %348 = math.exp %347 : vector<8x128xf32>
    %cst_117 = arith.constant 1.000000e+00 : f32
    %349 = vector.broadcast %cst_117 : f32 to vector<8x128xf32>
    %350 = arith.addf %349, %348 : vector<8x128xf32>
    %351 = arith.divf %349, %350 : vector<8x128xf32>
    %352 = vector.extract_strided_slice %314 {offsets = [0, 256], sizes = [8, 128], strides = [1, 1]} : vector<8x512xf32> to vector<8x128xf32>
    %353 = math.tanh %352 : vector<8x128xf32>
    %354 = vector.extract_strided_slice %314 {offsets = [0, 384], sizes = [8, 128], strides = [1, 1]} : vector<8x512xf32> to vector<8x128xf32>
    %355 = arith.negf %354 : vector<8x128xf32>
    %356 = math.exp %355 : vector<8x128xf32>
    %cst_118 = arith.constant 1.000000e+00 : f32
    %357 = vector.broadcast %cst_118 : f32 to vector<8x128xf32>
    %358 = arith.addf %357, %356 : vector<8x128xf32>
    %359 = arith.divf %357, %358 : vector<8x128xf32>
    %360 = arith.mulf %351, %291 : vector<8x128xf32>
    %361 = arith.mulf %345, %353 : vector<8x128xf32>
    %362 = arith.addf %360, %361 : vector<8x128xf32>
    %363 = math.tanh %362 : vector<8x128xf32>
    %364 = arith.mulf %359, %363 : vector<8x128xf32>
    %365 = arith.index_cast %c4_i32 : i32 to index
    %c0_119 = arith.constant 0 : index
    %c0_120 = arith.constant 0 : index
    %366 = vector.load %arg13[%365, %c0_119, %c0_120] : memref<8x8x128xf32, #tpu.memory_space<vmem>>, vector<1x8x128xf32>
    %367 = vector.shape_cast %366 : vector<1x8x128xf32> to vector<8x128xf32>
    %368 = vector.shape_cast %339 : vector<8x128xf32> to vector<1x8x128xf32>
    tpu.vector_store %arg13[%365, %c0_119, %c0_120], %368 {strides = array<i32>} : memref<8x8x128xf32, #tpu.memory_space<vmem>>, vector<1x8x128xf32>,
    %369 = arith.index_cast %302 : i32 to index
    %c0_121 = arith.constant 0 : index
    %c0_122 = arith.constant 0 : index
    %370 = vector.load %arg14[%369, %c0_121, %c0_122] : memref<8x8x128xf32, #tpu.memory_space<vmem>>, vector<1x8x128xf32>
    %371 = vector.shape_cast %370 : vector<1x8x128xf32> to vector<8x128xf32>
    %372 = vector.shape_cast %364 : vector<8x128xf32> to vector<1x8x128xf32>
    tpu.vector_store %arg14[%369, %c0_121, %c0_122], %372 {strides = array<i32>} : memref<8x8x128xf32, #tpu.memory_space<vmem>>, vector<1x8x128xf32>,
    %c5_i32 = arith.constant 5 : i32
    %c7_i32_123 = arith.constant 7 : i32
    %373 = arith.subi %c7_i32_123, %c5_i32 : i32
    %c0_124 = arith.constant 0 : index
    %c0_125 = arith.constant 0 : index
    %374 = vector.load %arg5[%c0_124, %c0_125] : memref<128x512xf32, #tpu.memory_space<vmem>>, vector<128x512xf32>
    %cst_126 = arith.constant dense<0.000000e+00> : vector<8x512xf32>
    %375 = tpu.matmul %339, %374, %cst_126 {dimension_numbers = #tpu.dot_dimension_numbers<[1], [0], [0], [1], [0, 0, 1, 1], [], []>} : vector<8x128xf32>, vector<128x512xf32>, vector<8x512xf32> -> vector<8x512xf32>
    %c0_127 = arith.constant 0 : index
    %c0_128 = arith.constant 0 : index
    %376 = vector.load %arg6[%c0_127, %c0_128] : memref<128x512xf32, #tpu.memory_space<vmem>>, vector<128x512xf32>
    %cst_129 = arith.constant dense<0.000000e+00> : vector<8x512xf32>
    %377 = tpu.matmul %364, %376, %cst_129 {dimension_numbers = #tpu.dot_dimension_numbers<[1], [0], [0], [1], [0, 0, 1, 1], [], []>} : vector<8x128xf32>, vector<128x512xf32>, vector<8x512xf32> -> vector<8x512xf32>
    %378 = arith.index_cast %c5_i32 : i32 to index
    %c0_130 = arith.constant 0 : index
    %c0_131 = arith.constant 0 : index
    %379 = vector.load %arg11[%378, %c0_130, %c0_131] : memref<8x8x512xf32, #tpu.memory_space<vmem>>, vector<1x8x512xf32>
    %380 = vector.shape_cast %379 : vector<1x8x512xf32> to vector<8x512xf32>
    %381 = arith.addf %380, %375 : vector<8x512xf32>
    %382 = arith.index_cast %373 : i32 to index
    %c0_132 = arith.constant 0 : index
    %c0_133 = arith.constant 0 : index
    %383 = vector.load %arg12[%382, %c0_132, %c0_133] : memref<8x8x512xf32, #tpu.memory_space<vmem>>, vector<1x8x512xf32>
    %384 = vector.shape_cast %383 : vector<1x8x512xf32> to vector<8x512xf32>
    %385 = arith.addf %384, %377 : vector<8x512xf32>
    %386 = vector.extract_strided_slice %381 {offsets = [0, 0], sizes = [8, 128], strides = [1, 1]} : vector<8x512xf32> to vector<8x128xf32>
    %387 = arith.negf %386 : vector<8x128xf32>
    %388 = math.exp %387 : vector<8x128xf32>
    %cst_134 = arith.constant 1.000000e+00 : f32
    %389 = vector.broadcast %cst_134 : f32 to vector<8x128xf32>
    %390 = arith.addf %389, %388 : vector<8x128xf32>
    %391 = arith.divf %389, %390 : vector<8x128xf32>
    %392 = vector.extract_strided_slice %381 {offsets = [0, 128], sizes = [8, 128], strides = [1, 1]} : vector<8x512xf32> to vector<8x128xf32>
    %393 = arith.negf %392 : vector<8x128xf32>
    %394 = math.exp %393 : vector<8x128xf32>
    %cst_135 = arith.constant 1.000000e+00 : f32
    %395 = vector.broadcast %cst_135 : f32 to vector<8x128xf32>
    %396 = arith.addf %395, %394 : vector<8x128xf32>
    %397 = arith.divf %395, %396 : vector<8x128xf32>
    %398 = vector.extract_strided_slice %381 {offsets = [0, 256], sizes = [8, 128], strides = [1, 1]} : vector<8x512xf32> to vector<8x128xf32>
    %399 = math.tanh %398 : vector<8x128xf32>
    %400 = vector.extract_strided_slice %381 {offsets = [0, 384], sizes = [8, 128], strides = [1, 1]} : vector<8x512xf32> to vector<8x128xf32>
    %401 = arith.negf %400 : vector<8x128xf32>
    %402 = math.exp %401 : vector<8x128xf32>
    %cst_136 = arith.constant 1.000000e+00 : f32
    %403 = vector.broadcast %cst_136 : f32 to vector<8x128xf32>
    %404 = arith.addf %403, %402 : vector<8x128xf32>
    %405 = arith.divf %403, %404 : vector<8x128xf32>
    %406 = arith.mulf %397, %337 : vector<8x128xf32>
    %407 = arith.mulf %391, %399 : vector<8x128xf32>
    %408 = arith.addf %406, %407 : vector<8x128xf32>
    %409 = math.tanh %408 : vector<8x128xf32>
    %410 = arith.mulf %405, %409 : vector<8x128xf32>
    %411 = vector.extract_strided_slice %385 {offsets = [0, 0], sizes = [8, 128], strides = [1, 1]} : vector<8x512xf32> to vector<8x128xf32>
    %412 = arith.negf %411 : vector<8x128xf32>
    %413 = math.exp %412 : vector<8x128xf32>
    %cst_137 = arith.constant 1.000000e+00 : f32
    %414 = vector.broadcast %cst_137 : f32 to vector<8x128xf32>
    %415 = arith.addf %414, %413 : vector<8x128xf32>
    %416 = arith.divf %414, %415 : vector<8x128xf32>
    %417 = vector.extract_strided_slice %385 {offsets = [0, 128], sizes = [8, 128], strides = [1, 1]} : vector<8x512xf32> to vector<8x128xf32>
    %418 = arith.negf %417 : vector<8x128xf32>
    %419 = math.exp %418 : vector<8x128xf32>
    %cst_138 = arith.constant 1.000000e+00 : f32
    %420 = vector.broadcast %cst_138 : f32 to vector<8x128xf32>
    %421 = arith.addf %420, %419 : vector<8x128xf32>
    %422 = arith.divf %420, %421 : vector<8x128xf32>
    %423 = vector.extract_strided_slice %385 {offsets = [0, 256], sizes = [8, 128], strides = [1, 1]} : vector<8x512xf32> to vector<8x128xf32>
    %424 = math.tanh %423 : vector<8x128xf32>
    %425 = vector.extract_strided_slice %385 {offsets = [0, 384], sizes = [8, 128], strides = [1, 1]} : vector<8x512xf32> to vector<8x128xf32>
    %426 = arith.negf %425 : vector<8x128xf32>
    %427 = math.exp %426 : vector<8x128xf32>
    %cst_139 = arith.constant 1.000000e+00 : f32
    %428 = vector.broadcast %cst_139 : f32 to vector<8x128xf32>
    %429 = arith.addf %428, %427 : vector<8x128xf32>
    %430 = arith.divf %428, %429 : vector<8x128xf32>
    %431 = arith.mulf %422, %362 : vector<8x128xf32>
    %432 = arith.mulf %416, %424 : vector<8x128xf32>
    %433 = arith.addf %431, %432 : vector<8x128xf32>
    %434 = math.tanh %433 : vector<8x128xf32>
    %435 = arith.mulf %430, %434 : vector<8x128xf32>
    %436 = arith.index_cast %c5_i32 : i32 to index
    %c0_140 = arith.constant 0 : index
    %c0_141 = arith.constant 0 : index
    %437 = vector.load %arg13[%436, %c0_140, %c0_141] : memref<8x8x128xf32, #tpu.memory_space<vmem>>, vector<1x8x128xf32>
    %438 = vector.shape_cast %437 : vector<1x8x128xf32> to vector<8x128xf32>
    %439 = vector.shape_cast %410 : vector<8x128xf32> to vector<1x8x128xf32>
    tpu.vector_store %arg13[%436, %c0_140, %c0_141], %439 {strides = array<i32>} : memref<8x8x128xf32, #tpu.memory_space<vmem>>, vector<1x8x128xf32>,
    %440 = arith.index_cast %373 : i32 to index
    %c0_142 = arith.constant 0 : index
    %c0_143 = arith.constant 0 : index
    %441 = vector.load %arg14[%440, %c0_142, %c0_143] : memref<8x8x128xf32, #tpu.memory_space<vmem>>, vector<1x8x128xf32>
    %442 = vector.shape_cast %441 : vector<1x8x128xf32> to vector<8x128xf32>
    %443 = vector.shape_cast %435 : vector<8x128xf32> to vector<1x8x128xf32>
    tpu.vector_store %arg14[%440, %c0_142, %c0_143], %443 {strides = array<i32>} : memref<8x8x128xf32, #tpu.memory_space<vmem>>, vector<1x8x128xf32>,
    %c6_i32 = arith.constant 6 : i32
    %c7_i32_144 = arith.constant 7 : i32
    %444 = arith.subi %c7_i32_144, %c6_i32 : i32
    %c0_145 = arith.constant 0 : index
    %c0_146 = arith.constant 0 : index
    %445 = vector.load %arg5[%c0_145, %c0_146] : memref<128x512xf32, #tpu.memory_space<vmem>>, vector<128x512xf32>
    %cst_147 = arith.constant dense<0.000000e+00> : vector<8x512xf32>
    %446 = tpu.matmul %410, %445, %cst_147 {dimension_numbers = #tpu.dot_dimension_numbers<[1], [0], [0], [1], [0, 0, 1, 1], [], []>} : vector<8x128xf32>, vector<128x512xf32>, vector<8x512xf32> -> vector<8x512xf32>
    %c0_148 = arith.constant 0 : index
    %c0_149 = arith.constant 0 : index
    %447 = vector.load %arg6[%c0_148, %c0_149] : memref<128x512xf32, #tpu.memory_space<vmem>>, vector<128x512xf32>
    %cst_150 = arith.constant dense<0.000000e+00> : vector<8x512xf32>
    %448 = tpu.matmul %435, %447, %cst_150 {dimension_numbers = #tpu.dot_dimension_numbers<[1], [0], [0], [1], [0, 0, 1, 1], [], []>} : vector<8x128xf32>, vector<128x512xf32>, vector<8x512xf32> -> vector<8x512xf32>
    %449 = arith.index_cast %c6_i32 : i32 to index
    %c0_151 = arith.constant 0 : index
    %c0_152 = arith.constant 0 : index
    %450 = vector.load %arg11[%449, %c0_151, %c0_152] : memref<8x8x512xf32, #tpu.memory_space<vmem>>, vector<1x8x512xf32>
    %451 = vector.shape_cast %450 : vector<1x8x512xf32> to vector<8x512xf32>
    %452 = arith.addf %451, %446 : vector<8x512xf32>
    %453 = arith.index_cast %444 : i32 to index
    %c0_153 = arith.constant 0 : index
    %c0_154 = arith.constant 0 : index
    %454 = vector.load %arg12[%453, %c0_153, %c0_154] : memref<8x8x512xf32, #tpu.memory_space<vmem>>, vector<1x8x512xf32>
    %455 = vector.shape_cast %454 : vector<1x8x512xf32> to vector<8x512xf32>
    %456 = arith.addf %455, %448 : vector<8x512xf32>
    %457 = vector.extract_strided_slice %452 {offsets = [0, 0], sizes = [8, 128], strides = [1, 1]} : vector<8x512xf32> to vector<8x128xf32>
    %458 = arith.negf %457 : vector<8x128xf32>
    %459 = math.exp %458 : vector<8x128xf32>
    %cst_155 = arith.constant 1.000000e+00 : f32
    %460 = vector.broadcast %cst_155 : f32 to vector<8x128xf32>
    %461 = arith.addf %460, %459 : vector<8x128xf32>
    %462 = arith.divf %460, %461 : vector<8x128xf32>
    %463 = vector.extract_strided_slice %452 {offsets = [0, 128], sizes = [8, 128], strides = [1, 1]} : vector<8x512xf32> to vector<8x128xf32>
    %464 = arith.negf %463 : vector<8x128xf32>
    %465 = math.exp %464 : vector<8x128xf32>
    %cst_156 = arith.constant 1.000000e+00 : f32
    %466 = vector.broadcast %cst_156 : f32 to vector<8x128xf32>
    %467 = arith.addf %466, %465 : vector<8x128xf32>
    %468 = arith.divf %466, %467 : vector<8x128xf32>
    %469 = vector.extract_strided_slice %452 {offsets = [0, 256], sizes = [8, 128], strides = [1, 1]} : vector<8x512xf32> to vector<8x128xf32>
    %470 = math.tanh %469 : vector<8x128xf32>
    %471 = vector.extract_strided_slice %452 {offsets = [0, 384], sizes = [8, 128], strides = [1, 1]} : vector<8x512xf32> to vector<8x128xf32>
    %472 = arith.negf %471 : vector<8x128xf32>
    %473 = math.exp %472 : vector<8x128xf32>
    %cst_157 = arith.constant 1.000000e+00 : f32
    %474 = vector.broadcast %cst_157 : f32 to vector<8x128xf32>
    %475 = arith.addf %474, %473 : vector<8x128xf32>
    %476 = arith.divf %474, %475 : vector<8x128xf32>
    %477 = arith.mulf %468, %408 : vector<8x128xf32>
    %478 = arith.mulf %462, %470 : vector<8x128xf32>
    %479 = arith.addf %477, %478 : vector<8x128xf32>
    %480 = math.tanh %479 : vector<8x128xf32>
    %481 = arith.mulf %476, %480 : vector<8x128xf32>
    %482 = vector.extract_strided_slice %456 {offsets = [0, 0], sizes = [8, 128], strides = [1, 1]} : vector<8x512xf32> to vector<8x128xf32>
    %483 = arith.negf %482 : vector<8x128xf32>
    %484 = math.exp %483 : vector<8x128xf32>
    %cst_158 = arith.constant 1.000000e+00 : f32
    %485 = vector.broadcast %cst_158 : f32 to vector<8x128xf32>
    %486 = arith.addf %485, %484 : vector<8x128xf32>
    %487 = arith.divf %485, %486 : vector<8x128xf32>
    %488 = vector.extract_strided_slice %456 {offsets = [0, 128], sizes = [8, 128], strides = [1, 1]} : vector<8x512xf32> to vector<8x128xf32>
    %489 = arith.negf %488 : vector<8x128xf32>
    %490 = math.exp %489 : vector<8x128xf32>
    %cst_159 = arith.constant 1.000000e+00 : f32
    %491 = vector.broadcast %cst_159 : f32 to vector<8x128xf32>
    %492 = arith.addf %491, %490 : vector<8x128xf32>
    %493 = arith.divf %491, %492 : vector<8x128xf32>
    %494 = vector.extract_strided_slice %456 {offsets = [0, 256], sizes = [8, 128], strides = [1, 1]} : vector<8x512xf32> to vector<8x128xf32>
    %495 = math.tanh %494 : vector<8x128xf32>
    %496 = vector.extract_strided_slice %456 {offsets = [0, 384], sizes = [8, 128], strides = [1, 1]} : vector<8x512xf32> to vector<8x128xf32>
    %497 = arith.negf %496 : vector<8x128xf32>
    %498 = math.exp %497 : vector<8x128xf32>
    %cst_160 = arith.constant 1.000000e+00 : f32
    %499 = vector.broadcast %cst_160 : f32 to vector<8x128xf32>
    %500 = arith.addf %499, %498 : vector<8x128xf32>
    %501 = arith.divf %499, %500 : vector<8x128xf32>
    %502 = arith.mulf %493, %433 : vector<8x128xf32>
    %503 = arith.mulf %487, %495 : vector<8x128xf32>
    %504 = arith.addf %502, %503 : vector<8x128xf32>
    %505 = math.tanh %504 : vector<8x128xf32>
    %506 = arith.mulf %501, %505 : vector<8x128xf32>
    %507 = arith.index_cast %c6_i32 : i32 to index
    %c0_161 = arith.constant 0 : index
    %c0_162 = arith.constant 0 : index
    %508 = vector.load %arg13[%507, %c0_161, %c0_162] : memref<8x8x128xf32, #tpu.memory_space<vmem>>, vector<1x8x128xf32>
    %509 = vector.shape_cast %508 : vector<1x8x128xf32> to vector<8x128xf32>
    %510 = vector.shape_cast %481 : vector<8x128xf32> to vector<1x8x128xf32>
    tpu.vector_store %arg13[%507, %c0_161, %c0_162], %510 {strides = array<i32>} : memref<8x8x128xf32, #tpu.memory_space<vmem>>, vector<1x8x128xf32>,
    %511 = arith.index_cast %444 : i32 to index
    %c0_163 = arith.constant 0 : index
    %c0_164 = arith.constant 0 : index
    %512 = vector.load %arg14[%511, %c0_163, %c0_164] : memref<8x8x128xf32, #tpu.memory_space<vmem>>, vector<1x8x128xf32>
    %513 = vector.shape_cast %512 : vector<1x8x128xf32> to vector<8x128xf32>
    %514 = vector.shape_cast %506 : vector<8x128xf32> to vector<1x8x128xf32>
    tpu.vector_store %arg14[%511, %c0_163, %c0_164], %514 {strides = array<i32>} : memref<8x8x128xf32, #tpu.memory_space<vmem>>, vector<1x8x128xf32>,
    %c7_i32_165 = arith.constant 7 : i32
    %c7_i32_166 = arith.constant 7 : i32
    %515 = arith.subi %c7_i32_166, %c7_i32_165 : i32
    %c0_167 = arith.constant 0 : index
    %c0_168 = arith.constant 0 : index
    %516 = vector.load %arg5[%c0_167, %c0_168] : memref<128x512xf32, #tpu.memory_space<vmem>>, vector<128x512xf32>
    %cst_169 = arith.constant dense<0.000000e+00> : vector<8x512xf32>
    %517 = tpu.matmul %481, %516, %cst_169 {dimension_numbers = #tpu.dot_dimension_numbers<[1], [0], [0], [1], [0, 0, 1, 1], [], []>} : vector<8x128xf32>, vector<128x512xf32>, vector<8x512xf32> -> vector<8x512xf32>
    %c0_170 = arith.constant 0 : index
    %c0_171 = arith.constant 0 : index
    %518 = vector.load %arg6[%c0_170, %c0_171] : memref<128x512xf32, #tpu.memory_space<vmem>>, vector<128x512xf32>
    %cst_172 = arith.constant dense<0.000000e+00> : vector<8x512xf32>
    %519 = tpu.matmul %506, %518, %cst_172 {dimension_numbers = #tpu.dot_dimension_numbers<[1], [0], [0], [1], [0, 0, 1, 1], [], []>} : vector<8x128xf32>, vector<128x512xf32>, vector<8x512xf32> -> vector<8x512xf32>
    %520 = arith.index_cast %c7_i32_165 : i32 to index
    %c0_173 = arith.constant 0 : index
    %c0_174 = arith.constant 0 : index
    %521 = vector.load %arg11[%520, %c0_173, %c0_174] : memref<8x8x512xf32, #tpu.memory_space<vmem>>, vector<1x8x512xf32>
    %522 = vector.shape_cast %521 : vector<1x8x512xf32> to vector<8x512xf32>
    %523 = arith.addf %522, %517 : vector<8x512xf32>
    %524 = arith.index_cast %515 : i32 to index
    %c0_175 = arith.constant 0 : index
    %c0_176 = arith.constant 0 : index
    %525 = vector.load %arg12[%524, %c0_175, %c0_176] : memref<8x8x512xf32, #tpu.memory_space<vmem>>, vector<1x8x512xf32>
    %526 = vector.shape_cast %525 : vector<1x8x512xf32> to vector<8x512xf32>
    %527 = arith.addf %526, %519 : vector<8x512xf32>
    %528 = vector.extract_strided_slice %523 {offsets = [0, 0], sizes = [8, 128], strides = [1, 1]} : vector<8x512xf32> to vector<8x128xf32>
    %529 = arith.negf %528 : vector<8x128xf32>
    %530 = math.exp %529 : vector<8x128xf32>
    %cst_177 = arith.constant 1.000000e+00 : f32
    %531 = vector.broadcast %cst_177 : f32 to vector<8x128xf32>
    %532 = arith.addf %531, %530 : vector<8x128xf32>
    %533 = arith.divf %531, %532 : vector<8x128xf32>
    %534 = vector.extract_strided_slice %523 {offsets = [0, 128], sizes = [8, 128], strides = [1, 1]} : vector<8x512xf32> to vector<8x128xf32>
    %535 = arith.negf %534 : vector<8x128xf32>
    %536 = math.exp %535 : vector<8x128xf32>
    %cst_178 = arith.constant 1.000000e+00 : f32
    %537 = vector.broadcast %cst_178 : f32 to vector<8x128xf32>
    %538 = arith.addf %537, %536 : vector<8x128xf32>
    %539 = arith.divf %537, %538 : vector<8x128xf32>
    %540 = vector.extract_strided_slice %523 {offsets = [0, 256], sizes = [8, 128], strides = [1, 1]} : vector<8x512xf32> to vector<8x128xf32>
    %541 = math.tanh %540 : vector<8x128xf32>
    %542 = vector.extract_strided_slice %523 {offsets = [0, 384], sizes = [8, 128], strides = [1, 1]} : vector<8x512xf32> to vector<8x128xf32>
    %543 = arith.negf %542 : vector<8x128xf32>
    %544 = math.exp %543 : vector<8x128xf32>
    %cst_179 = arith.constant 1.000000e+00 : f32
    %545 = vector.broadcast %cst_179 : f32 to vector<8x128xf32>
    %546 = arith.addf %545, %544 : vector<8x128xf32>
    %547 = arith.divf %545, %546 : vector<8x128xf32>
    %548 = arith.mulf %539, %479 : vector<8x128xf32>
    %549 = arith.mulf %533, %541 : vector<8x128xf32>
    %550 = arith.addf %548, %549 : vector<8x128xf32>
    %551 = math.tanh %550 : vector<8x128xf32>
    %552 = arith.mulf %547, %551 : vector<8x128xf32>
    %553 = vector.extract_strided_slice %527 {offsets = [0, 0], sizes = [8, 128], strides = [1, 1]} : vector<8x512xf32> to vector<8x128xf32>
    %554 = arith.negf %553 : vector<8x128xf32>
    %555 = math.exp %554 : vector<8x128xf32>
    %cst_180 = arith.constant 1.000000e+00 : f32
    %556 = vector.broadcast %cst_180 : f32 to vector<8x128xf32>
    %557 = arith.addf %556, %555 : vector<8x128xf32>
    %558 = arith.divf %556, %557 : vector<8x128xf32>
    %559 = vector.extract_strided_slice %527 {offsets = [0, 128], sizes = [8, 128], strides = [1, 1]} : vector<8x512xf32> to vector<8x128xf32>
    %560 = arith.negf %559 : vector<8x128xf32>
    %561 = math.exp %560 : vector<8x128xf32>
    %cst_181 = arith.constant 1.000000e+00 : f32
    %562 = vector.broadcast %cst_181 : f32 to vector<8x128xf32>
    %563 = arith.addf %562, %561 : vector<8x128xf32>
    %564 = arith.divf %562, %563 : vector<8x128xf32>
    %565 = vector.extract_strided_slice %527 {offsets = [0, 256], sizes = [8, 128], strides = [1, 1]} : vector<8x512xf32> to vector<8x128xf32>
    %566 = math.tanh %565 : vector<8x128xf32>
    %567 = vector.extract_strided_slice %527 {offsets = [0, 384], sizes = [8, 128], strides = [1, 1]} : vector<8x512xf32> to vector<8x128xf32>
    %568 = arith.negf %567 : vector<8x128xf32>
    %569 = math.exp %568 : vector<8x128xf32>
    %cst_182 = arith.constant 1.000000e+00 : f32
    %570 = vector.broadcast %cst_182 : f32 to vector<8x128xf32>
    %571 = arith.addf %570, %569 : vector<8x128xf32>
    %572 = arith.divf %570, %571 : vector<8x128xf32>
    %573 = arith.mulf %564, %504 : vector<8x128xf32>
    %574 = arith.mulf %558, %566 : vector<8x128xf32>
    %575 = arith.addf %573, %574 : vector<8x128xf32>
    %576 = math.tanh %575 : vector<8x128xf32>
    %577 = arith.mulf %572, %576 : vector<8x128xf32>
    %578 = arith.index_cast %c7_i32_165 : i32 to index
    %c0_183 = arith.constant 0 : index
    %c0_184 = arith.constant 0 : index
    %579 = vector.load %arg13[%578, %c0_183, %c0_184] : memref<8x8x128xf32, #tpu.memory_space<vmem>>, vector<1x8x128xf32>
    %580 = vector.shape_cast %579 : vector<1x8x128xf32> to vector<8x128xf32>
    %581 = vector.shape_cast %552 : vector<8x128xf32> to vector<1x8x128xf32>
    tpu.vector_store %arg13[%578, %c0_183, %c0_184], %581 {strides = array<i32>} : memref<8x8x128xf32, #tpu.memory_space<vmem>>, vector<1x8x128xf32>,
    %582 = arith.index_cast %515 : i32 to index
    %c0_185 = arith.constant 0 : index
    %c0_186 = arith.constant 0 : index
    %583 = vector.load %arg14[%582, %c0_185, %c0_186] : memref<8x8x128xf32, #tpu.memory_space<vmem>>, vector<1x8x128xf32>
    %584 = vector.shape_cast %583 : vector<1x8x128xf32> to vector<8x128xf32>
    %585 = vector.shape_cast %577 : vector<8x128xf32> to vector<1x8x128xf32>
    tpu.vector_store %arg14[%582, %c0_185, %c0_186], %585 {strides = array<i32>} : memref<8x8x128xf32, #tpu.memory_space<vmem>>, vector<1x8x128xf32>,
    %c8_i32 = arith.constant 8 : i32
    %c0_187 = arith.constant 0 : index
    %c0_188 = arith.constant 0 : index
    %c0_189 = arith.constant 0 : index
    %586 = vector.load %arg13[%c0_187, %c0_188, %c0_189] : memref<8x8x128xf32, #tpu.memory_space<vmem>>, vector<8x8x128xf32>
    %587 = vector.shape_cast %586 : vector<8x8x128xf32> to vector<64x128xf32>
    %c0_190 = arith.constant 0 : index
    %c0_191 = arith.constant 0 : index
    %c0_192 = arith.constant 0 : index
    %588 = vector.load %arg14[%c0_190, %c0_191, %c0_192] : memref<8x8x128xf32, #tpu.memory_space<vmem>>, vector<8x8x128xf32>
    %589 = vector.shape_cast %588 : vector<8x8x128xf32> to vector<64x128xf32>
    %c0_193 = arith.constant 0 : index
    %c0_194 = arith.constant 0 : index
    %590 = vector.load %arg7[%c0_193, %c0_194] : memref<128x128xf32, #tpu.memory_space<vmem>>, vector<128x128xf32>
    %cst_195 = arith.constant dense<0.000000e+00> : vector<64x128xf32>
    %591 = tpu.matmul %587, %590, %cst_195 {dimension_numbers = #tpu.dot_dimension_numbers<[1], [0], [0], [1], [0, 0, 1, 1], [], []>} : vector<64x128xf32>, vector<128x128xf32>, vector<64x128xf32> -> vector<64x128xf32>
    %c0_196 = arith.constant 0 : index
    %c0_197 = arith.constant 0 : index
    %592 = vector.load %arg8[%c0_196, %c0_197] : memref<128x128xf32, #tpu.memory_space<vmem>>, vector<128x128xf32>
    %cst_198 = arith.constant dense<0.000000e+00> : vector<64x128xf32>
    %593 = tpu.matmul %589, %592, %cst_198 {dimension_numbers = #tpu.dot_dimension_numbers<[1], [0], [0], [1], [0, 0, 1, 1], [], []>} : vector<64x128xf32>, vector<128x128xf32>, vector<64x128xf32> -> vector<64x128xf32>
    %594 = arith.addf %591, %593 : vector<64x128xf32>
    %c0_199 = arith.constant 0 : index
    %c0_200 = arith.constant 0 : index
    %595 = vector.load %arg9[%c0_199, %c0_200] : memref<1x128xf32, #tpu.memory_space<vmem>>, vector<1x128xf32>
    %596 = vector.broadcast %595 : vector<1x128xf32> to vector<64x128xf32>
    %597 = arith.addf %594, %596 : vector<64x128xf32>
    %598 = vector.shape_cast %597 : vector<64x128xf32> to vector<8x8x128xf32>
    %c0_201 = arith.constant 0 : index
    %c0_202 = arith.constant 0 : index
    %c0_203 = arith.constant 0 : index
    %599 = vector.load %arg10[%c0_201, %c0_202, %c0_203] : memref<8x8x128xf32, #tpu.memory_space<vmem>>, vector<8x8x128xf32>
    tpu.vector_store %arg10[%c0_201, %c0_202, %c0_203], %598 {strides = array<i32>} : memref<8x8x128xf32, #tpu.memory_space<vmem>>, vector<8x8x128xf32>,
    return
  }
}

</mosaic_0001>

<llo_original>
// kernel: tpu_custom_call.1
$region0: #{tpu_custom_call.1}
  #allocation0 [shape = 'u32[]', space=smem, size = 0x4, offset = 0x4, fixed_abs, tag = 'smem constant byte address 0x4 - core index']
  #allocation1 [shape = 'u32[72,128]{1,0:T(1,128)}', space=vmem, size = 0x9000, scoped, tag = 'internal scratch']
  #allocation2 [shape = 'f32[8,8,512]{2,1,0:T(8,128)}', space=vmem, size = 0x20000, scoped, tag = 'scratch operand']
  #allocation3 [shape = 'f32[8,8,512]{2,1,0:T(8,128)}', space=vmem, size = 0x20000, scoped, tag = 'scratch operand']
  #allocation4 [shape = 'f32[8,8,128]{2,1,0:T(8,128)}', space=vmem, size = 0x8000, scoped, tag = 'scratch operand']
  #allocation5 [shape = 'f32[8,8,128]{2,1,0:T(8,128)}', space=vmem, size = 0x8000, scoped, tag = 'scratch operand']
  %s0 = inlined_call_operand.hbm [shape: f32[8,8,32], index: 0, kind: input, shape index: {}]
  %s1 = inlined_call_operand.hbm [shape: f32[32,512], index: 1, kind: input, shape index: {}]
  %s2 = inlined_call_operand.hbm [shape: f32[32,512], index: 2, kind: input, shape index: {}]
  %s3 = inlined_call_operand.hbm [shape: f32[1,512], index: 3, kind: input, shape index: {}]
  %s4 = inlined_call_operand.hbm [shape: f32[1,512], index: 4, kind: input, shape index: {}]
  %s5 = inlined_call_operand.hbm [shape: f32[128,512], index: 5, kind: input, shape index: {}]
  %s6 = inlined_call_operand.hbm [shape: f32[128,512], index: 6, kind: input, shape index: {}]
  %s7 = inlined_call_operand.hbm [shape: f32[128,128], index: 7, kind: input, shape index: {}]
  %s8 = inlined_call_operand.hbm [shape: f32[128,128], index: 8, kind: input, shape index: {}]
  %s9 = inlined_call_operand.vmem [shape: f32[1,128], index: 9, kind: input, shape index: {}]
  %s10 = inlined_call_operand.hbm [shape: f32[8,8,128], index: 10, kind: output, shape index: {}]
  %s11 = sld [smem:[#allocation0]]
  $region86: #{tpu_custom_call.1} parent=0
    _
  %s13 = ssub.s32 1, %s11
  %s14 = scalar_select 0, %s13, %s11
  $region1: #{tpu_custom_call.1} parent=0
    #allocation6 [shape = 'u8[32768]{0}', space=vmem, size = 0x8000, scoped, tag = 'input window, operand 0, single buffered']
    #allocation7 [shape = 's32[1]{0}', space=sflag, size = 0x4, scoped, tag = 'scoped memory for tpu_custom_call.1']
    #allocation8 [shape = 's32[1]{0}', space=sflag, size = 0x4, scoped, tag = 'scoped memory for tpu_custom_call.1']
    #allocation9 [shape = 'u8[65536]{0}', space=vmem, size = 0x10000, scoped, tag = 'input window, operand 1, single buffered']
    #allocation10 [shape = 's32[1]{0}', space=sflag, size = 0x4, scoped, tag = 'scoped memory for tpu_custom_call.1']
    #allocation11 [shape = 'u8[65536]{0}', space=vmem, size = 0x10000, scoped, tag = 'input window, operand 2, single buffered']
    #allocation12 [shape = 'u8[2048]{0}', space=vmem, size = 0x800, scoped, tag = 'input window, operand 3, single buffered']
    #allocation13 [shape = 's32[1]{0}', space=sflag, size = 0x4, scoped, tag = 'scoped memory for tpu_custom_call.1']
    #allocation14 [shape = 'u8[2048]{0}', space=vmem, size = 0x800, scoped, tag = 'input window, operand 4, single buffered']
    #allocation15 [shape = 'u8[262144]{0}', space=vmem, size = 0x40000, scoped, tag = 'input window, operand 5, single buffered']
    #allocation16 [shape = 's32[1]{0}', space=sflag, size = 0x4, scoped, tag = 'scoped memory for tpu_custom_call.1']
    #allocation17 [shape = 'u8[262144]{0}', space=vmem, size = 0x40000, scoped, tag = 'input window, operand 6, single buffered']
    #allocation18 [shape = 'u8[65536]{0}', space=vmem, size = 0x10000, scoped, tag = 'input window, operand 7, single buffered']
    #allocation19 [shape = 's32[1]{0}', space=sflag, size = 0x4, scoped, tag = 'scoped memory for tpu_custom_call.1']
    #allocation20 [shape = 'u8[65536]{0}', space=vmem, size = 0x10000, scoped, tag = 'input window, operand 8, single buffered']
    #allocation21 [shape = 'u8[32768]{0}', space=vmem, size = 0x8000, scoped, tag = 'output window, operand 0, single buffered']
    %15 = vsyncpa [#allocation7], 0
    %16 = vsyncpa [#allocation10], 0
    %17 = vsyncpa [#allocation13], 0
    %18 = vsyncpa [#allocation16], 0
    %19 = vsyncpa [#allocation19], 0
    %20 = vsyncpa [#allocation8], 0
    // Predicated region
    $region2: #{tpu_custom_call.1} parent=1 // pred_check
      _
    $region3: #{tpu_custom_call.1} parent=1 // pred_check_branch
      %22 = sbr.rel (0) target = $region5
    $region4: #{tpu_custom_call.1} parent=1 // pred_region
      %24 = vsyncadd [#allocation7], 0
      %s25 = sshll.u32 %s0, 4
      %s26 = int_to_ptr.hbm [resolvable:$true] %s25
      %s27 = sshll.u32 [#allocation6], 4
      %s28 = int_to_ptr.vmem [resolvable:$true] %s27
      %33 = dma.hbm_to_vmem [thread:$0]  %s26, 1024, %s28, [#allocation7], 128, 128, 8
    $region5: #{tpu_custom_call.1} parent=1 // pred_fallthru
      _
    // Predicated region
    $region6: #{tpu_custom_call.1} parent=1 // pred_check
      _
    $region7: #{tpu_custom_call.1} parent=1 // pred_check_branch
      %35 = sbr.rel (0) target = $region9
    $region8: #{tpu_custom_call.1} parent=1 // pred_region
      %37 = vsyncadd [#allocation10], 0
      %s38 = sshll.u32 %s1, 4
      %s39 = int_to_ptr.hbm [resolvable:$true] %s38
      %s40 = sshll.u32 [#allocation9], 4
      %s41 = int_to_ptr.vmem [resolvable:$true] %s40
      %46 = dma.hbm_to_vmem [thread:$0]  %s39, 2048, %s41, [#allocation10], 512, 512, 32
    $region9: #{tpu_custom_call.1} parent=1 // pred_fallthru
      _
    // Predicated region
    $region10: #{tpu_custom_call.1} parent=1 // pred_check
      _
    $region11: #{tpu_custom_call.1} parent=1 // pred_check_branch
      %48 = sbr.rel (0) target = $region13
    $region12: #{tpu_custom_call.1} parent=1 // pred_region
      %50 = vsyncadd [#allocation10], 0
      %s51 = sshll.u32 %s2, 4
      %s52 = int_to_ptr.hbm [resolvable:$true] %s51
      %s53 = sshll.u32 [#allocation11], 4
      %s54 = int_to_ptr.vmem [resolvable:$true] %s53
      %59 = dma.hbm_to_vmem [thread:$0]  %s52, 2048, %s54, [#allocation10], 512, 512, 32
    $region13: #{tpu_custom_call.1} parent=1 // pred_fallthru
      _
    // Predicated region
    $region14: #{tpu_custom_call.1} parent=1 // pred_check
      _
    $region15: #{tpu_custom_call.1} parent=1 // pred_check_branch
      %61 = sbr.rel (0) target = $region17
    $region16: #{tpu_custom_call.1} parent=1 // pred_region
      %63 = vsyncadd [#allocation13], 0
      %s65 = sshll.u32 %s3, 4
      %s66 = int_to_ptr.hbm [resolvable:$true] %s65
      %s67 = sshll.u32 [#allocation12], 4
      %s68 = int_to_ptr.vmem [resolvable:$true] %s67
      %70 = dma.hbm_to_vmem [thread:$0]  %s66, 64, %s68, [#allocation13]
    $region17: #{tpu_custom_call.1} parent=1 // pred_fallthru
      _
    // Predicated region
    $region18: #{tpu_custom_call.1} parent=1 // pred_check
      _
    $region19: #{tpu_custom_call.1} parent=1 // pred_check_branch
      %72 = sbr.rel (0) target = $region21
    $region20: #{tpu_custom_call.1} parent=1 // pred_region
      %74 = vsyncadd [#allocation13], 0
      %s76 = sshll.u32 %s4, 4
      %s77 = int_to_ptr.hbm [resolvable:$true] %s76
      %s78 = sshll.u32 [#allocation14], 4
      %s79 = int_to_ptr.vmem [resolvable:$true] %s78
      %81 = dma.hbm_to_vmem [thread:$0]  %s77, 64, %s79, [#allocation13]
    $region21: #{tpu_custom_call.1} parent=1 // pred_fallthru
      _
    // Predicated region
    $region22: #{tpu_custom_call.1} parent=1 // pred_check
      _
    $region23: #{tpu_custom_call.1} parent=1 // pred_check_branch
      %83 = sbr.rel (0) target = $region25
    $region24: #{tpu_custom_call.1} parent=1 // pred_region
      %85 = vsyncadd [#allocation16], 0
      %s86 = sshll.u32 %s5, 4
      %s87 = int_to_ptr.hbm [resolvable:$true] %s86
      %s88 = sshll.u32 [#allocation15], 4
      %s89 = int_to_ptr.vmem [resolvable:$true] %s88
      %94 = dma.hbm_to_vmem [thread:$0]  %s87, 8192, %s89, [#allocation16], 512, 512, 32
    $region25: #{tpu_custom_call.1} parent=1 // pred_fallthru
      _
    // Predicated region
    $region26: #{tpu_custom_call.1} parent=1 // pred_check
      _
    $region27: #{tpu_custom_call.1} parent=1 // pred_check_branch
      %96 = sbr.rel (0) target = $region29
    $region28: #{tpu_custom_call.1} parent=1 // pred_region
      %98 = vsyncadd [#allocation16], 0
      %s99 = sshll.u32 %s6, 4
      %s100 = int_to_ptr.hbm [resolvable:$true] %s99
      %s101 = sshll.u32 [#allocation17], 4
      %s102 = int_to_ptr.vmem [resolvable:$true] %s101
      %107 = dma.hbm_to_vmem [thread:$0]  %s100, 8192, %s102, [#allocation16], 512, 512, 32
    $region29: #{tpu_custom_call.1} parent=1 // pred_fallthru
      _
    // Predicated region
    $region30: #{tpu_custom_call.1} parent=1 // pred_check
      _
    $region31: #{tpu_custom_call.1} parent=1 // pred_check_branch
      %109 = sbr.rel (0) target = $region33
    $region32: #{tpu_custom_call.1} parent=1 // pred_region
      %111 = vsyncadd [#allocation19], 0
      %s112 = sshll.u32 %s7, 4
      %s113 = int_to_ptr.hbm [resolvable:$true] %s112
      %s114 = sshll.u32 [#allocation18], 4
      %s115 = int_to_ptr.vmem [resolvable:$true] %s114
      %120 = dma.hbm_to_vmem [thread:$0]  %s113, 2048, %s115, [#allocation19], 128, 128, 8
    $region33: #{tpu_custom_call.1} parent=1 // pred_fallthru
      _
    // Predicated region
    $region34: #{tpu_custom_call.1} parent=1 // pred_check
      _
    $region35: #{tpu_custom_call.1} parent=1 // pred_check_branch
      %122 = sbr.rel (0) target = $region37
    $region36: #{tpu_custom_call.1} parent=1 // pred_region
      %124 = vsyncadd [#allocation19], 0
      %s125 = sshll.u32 %s8, 4
      %s126 = int_to_ptr.hbm [resolvable:$true] %s125
      %s127 = sshll.u32 [#allocation20], 4
      %s128 = int_to_ptr.vmem [resolvable:$true] %s127
      %133 = dma.hbm_to_vmem [thread:$0]  %s126, 2048, %s128, [#allocation19], 128, 128, 8
    $region37: #{tpu_custom_call.1} parent=1 // pred_fallthru
      _
    // Predicated region
    $region38: #{tpu_custom_call.1} parent=1 // pred_check
      _
    $region39: #{tpu_custom_call.1} parent=1 // pred_check_branch
      %135 = sbr.rel (0) target = $region41
    $region40: #{tpu_custom_call.1} parent=1 // pred_region
      _
    $region41: #{tpu_custom_call.1} parent=1 // pred_fallthru
      _
    // Predicated region
    $region42: #{tpu_custom_call.1} parent=1 // pred_check
      _
    $region43: #{tpu_custom_call.1} parent=1 // pred_check_branch
      %137 = sbr.rel (0) target = $region45
    $region44: #{tpu_custom_call.1} parent=1 // pred_region
      %139 = dma.done [#allocation7], 1024
    $region45: #{tpu_custom_call.1} parent=1 // pred_fallthru
      _
    // Predicated region
    $region46: #{tpu_custom_call.1} parent=1 // pred_check
      _
    $region47: #{tpu_custom_call.1} parent=1 // pred_check_branch
      %141 = sbr.rel (0) target = $region49
    $region48: #{tpu_custom_call.1} parent=1 // pred_region
      %143 = dma.done [#allocation10], 2048
    $region49: #{tpu_custom_call.1} parent=1 // pred_fallthru
      _
    // Predicated region
    $region50: #{tpu_custom_call.1} parent=1 // pred_check
      _
    $region51: #{tpu_custom_call.1} parent=1 // pred_check_branch
      %145 = sbr.rel (0) target = $region53
    $region52: #{tpu_custom_call.1} parent=1 // pred_region
      %147 = dma.done [#allocation10], 2048
    $region53: #{tpu_custom_call.1} parent=1 // pred_fallthru
      _
    // Predicated region
    $region54: #{tpu_custom_call.1} parent=1 // pred_check
      _
    $region55: #{tpu_custom_call.1} parent=1 // pred_check_branch
      %149 = sbr.rel (0) target = $region57
    $region56: #{tpu_custom_call.1} parent=1 // pred_region
      %151 = dma.done [#allocation13], 64
    $region57: #{tpu_custom_call.1} parent=1 // pred_fallthru
      _
    // Predicated region
    $region58: #{tpu_custom_call.1} parent=1 // pred_check
      _
    $region59: #{tpu_custom_call.1} parent=1 // pred_check_branch
      %153 = sbr.rel (0) target = $region61
    $region60: #{tpu_custom_call.1} parent=1 // pred_region
      %155 = dma.done [#allocation13], 64
    $region61: #{tpu_custom_call.1} parent=1 // pred_fallthru
      _
    // Predicated region
    $region62: #{tpu_custom_call.1} parent=1 // pred_check
      _
    $region63: #{tpu_custom_call.1} parent=1 // pred_check_branch
      %157 = sbr.rel (0) target = $region65
    $region64: #{tpu_custom_call.1} parent=1 // pred_region
      %159 = dma.done [#allocation16], 8192
    $region65: #{tpu_custom_call.1} parent=1 // pred_fallthru
      _
    // Predicated region
    $region66: #{tpu_custom_call.1} parent=1 // pred_check
      _
    $region67: #{tpu_custom_call.1} parent=1 // pred_check_branch
      %161 = sbr.rel (0) target = $region69
    $region68: #{tpu_custom_call.1} parent=1 // pred_region
      %163 = dma.done [#allocation16], 8192
    $region69: #{tpu_custom_call.1} parent=1 // pred_fallthru
      _
    // Predicated region
    $region70: #{tpu_custom_call.1} parent=1 // pred_check
      _
    $region71: #{tpu_custom_call.1} parent=1 // pred_check_branch
      %165 = sbr.rel (0) target = $region73
    $region72: #{tpu_custom_call.1} parent=1 // pred_region
      %167 = dma.done [#allocation19], 2048
    $region73: #{tpu_custom_call.1} parent=1 // pred_fallthru
      _
    // Predicated region
    $region74: #{tpu_custom_call.1} parent=1 // pred_check
      _
    $region75: #{tpu_custom_call.1} parent=1 // pred_check_branch
      %169 = sbr.rel (0) target = $region77
    $region76: #{tpu_custom_call.1} parent=1 // pred_region
      %171 = dma.done [#allocation19], 2048
    $region77: #{tpu_custom_call.1} parent=1 // pred_fallthru
      _
    %v172 = vld [vmem:[#allocation6] sm:$0xff]
    %v173 = vld [vmem:[#allocation6 + $0x8] sm:$0xff]
    %v174 = vld [vmem:[#allocation6 + $0x10] sm:$0xff]
    %v175 = vld [vmem:[#allocation6 + $0x18] sm:$0xff]
    %v176 = vld [vmem:[#allocation6 + $0x20] sm:$0xff]
    %v177 = vld [vmem:[#allocation6 + $0x28] sm:$0xff]
    %v178 = vld [vmem:[#allocation6 + $0x30] sm:$0xff]
    %v179 = vld [vmem:[#allocation6 + $0x38] sm:$0xff]
    %v180 = vld [vmem:[#allocation9] sm:$0xff]
    %v181 = vld [vmem:[#allocation9 + $0x8] sm:$0xff]
    %v182 = vld [vmem:[#allocation9 + $0x10] sm:$0xff]
    %v183 = vld [vmem:[#allocation9 + $0x18] sm:$0xff]
    %v184 = vld [vmem:[#allocation9 + $0x20] sm:$0xff]
    %v185 = vld [vmem:[#allocation9 + $0x28] sm:$0xff]
    %v186 = vld [vmem:[#allocation9 + $0x30] sm:$0xff]
    %v187 = vld [vmem:[#allocation9 + $0x38] sm:$0xff]
    %v188 = vld [vmem:[#allocation9 + $0x40] sm:$0xff]
    %v189 = vld [vmem:[#allocation9 + $0x48] sm:$0xff]
    %v190 = vld [vmem:[#allocation9 + $0x50] sm:$0xff]
    %v191 = vld [vmem:[#allocation9 + $0x58] sm:$0xff]
    %v192 = vld [vmem:[#allocation9 + $0x60] sm:$0xff]
    %v193 = vld [vmem:[#allocation9 + $0x68] sm:$0xff]
    %v194 = vld [vmem:[#allocation9 + $0x70] sm:$0xff]
    %v195 = vld [vmem:[#allocation9 + $0x78] sm:$0xff]
    %v196 = vld [vmem:[#allocation12] sm:$0xf]
    %v198 = vperm.slane %v196, 0
    %v199 = vperm.slane %v196, 1
    %v200 = vperm.slane %v196, 2
    %v201 = vperm.slane %v196, 3
    %vm206 = vcmask 261120
    %v208 = vsel %vm206, %v172, 0
    %v211 = vsel %vm206, %v173, 0
    %v214 = vsel %vm206, %v174, 0
    %v217 = vsel %vm206, %v175, 0
    %v220 = vsel %vm206, %v176, 0
    %v223 = vsel %vm206, %v177, 0
    %v226 = vsel %vm206, %v178, 0
    %v229 = vsel %vm206, %v179, 0
    %231 = vmatpush.msra.mxu0 0.0
    %232 = vmatpush.msra.mxu0 0.0
    %233 = vmatpush.msra.mxu0 0.0
    %234 = vmatpush.msra.mxu0 0.0
    %235 = vmatpush.msra.mxu0 0.0
    %236 = vmatpush.msra.mxu0 0.0
    %237 = vmatpush.msra.mxu0 0.0
    %238 = vmatpush.msra.mxu0 0.0
    %239 = vmatpush.msra.mxu0 0.0
    %240 = vmatpush.msra.mxu0 0.0
    %241 = vmatpush.msra.mxu0 0.0
    %242 = vmatpush.msra.mxu0 0.0
    %243 = vmatpush.msra.mxu0 %v192
    %244 = vmatpush.msra.mxu0 %v188
    %245 = vmatpush.msra.mxu0 %v184
    %246 = vmatpush.msra.mxu0 %v180
    %247 = vmatmul.f32.gmra.mxu0 %v208
    %v248 = vpop.f32.mrf.mxu0
    %v249 = vadd.f32 %v198, %v248
    %250 = vmatmul.f32.gmra.mxu0 %v211
    %v251 = vpop.f32.mrf.mxu0
    %v252 = vadd.f32 %v198, %v251
    %253 = vmatmul.f32.gmra.mxu0 %v214
    %v254 = vpop.f32.mrf.mxu0
    %v255 = vadd.f32 %v198, %v254
    %256 = vmatmul.f32.gmra.mxu0 %v217
    %v257 = vpop.f32.mrf.mxu0
    %v258 = vadd.f32 %v198, %v257
    %259 = vmatmul.f32.gmra.mxu0 %v220
    %v260 = vpop.f32.mrf.mxu0
    %v261 = vadd.f32 %v198, %v260
    %262 = vmatmul.f32.gmra.mxu0 %v223
    %v263 = vpop.f32.mrf.mxu0
    %v264 = vadd.f32 %v198, %v263
    %265 = vmatmul.f32.gmra.mxu0 %v226
    %v266 = vpop.f32.mrf.mxu0
    %v267 = vadd.f32 %v198, %v266
    %268 = vmatmul.f32.gmra.mxu0 %v229
    %v269 = vpop.f32.mrf.mxu0
    %v270 = vadd.f32 %v198, %v269
    %271 = vdwg.mxu0
    %272 = vmatpush.msra.mxu0 0.0
    %273 = vmatpush.msra.mxu0 0.0
    %274 = vmatpush.msra.mxu0 0.0
    %275 = vmatpush.msra.mxu0 0.0
    %276 = vmatpush.msra.mxu0 0.0
    %277 = vmatpush.msra.mxu0 0.0
    %278 = vmatpush.msra.mxu0 0.0
    %279 = vmatpush.msra.mxu0 0.0
    %280 = vmatpush.msra.mxu0 0.0
    %281 = vmatpush.msra.mxu0 0.0
    %282 = vmatpush.msra.mxu0 0.0
    %283 = vmatpush.msra.mxu0 0.0
    %284 = vmatpush.msra.mxu0 %v193
    %285 = vmatpush.msra.mxu0 %v189
    %286 = vmatpush.msra.mxu0 %v185
    %287 = vmatpush.msra.mxu0 %v181
    %288 = vmatmul.f32.gmra.mxu0 %v208
    %v289 = vpop.f32.mrf.mxu0
    %v290 = vadd.f32 %v199, %v289
    %291 = vmatmul.f32.gmra.mxu0 %v211
    %v292 = vpop.f32.mrf.mxu0
    %v293 = vadd.f32 %v199, %v292
    %294 = vmatmul.f32.gmra.mxu0 %v214
    %v295 = vpop.f32.mrf.mxu0
    %v296 = vadd.f32 %v199, %v295
    %297 = vmatmul.f32.gmra.mxu0 %v217
    %v298 = vpop.f32.mrf.mxu0
    %v299 = vadd.f32 %v199, %v298
    %300 = vmatmul.f32.gmra.mxu0 %v220
    %v301 = vpop.f32.mrf.mxu0
    %v302 = vadd.f32 %v199, %v301
    %303 = vmatmul.f32.gmra.mxu0 %v223
    %v304 = vpop.f32.mrf.mxu0
    %v305 = vadd.f32 %v199, %v304
    %306 = vmatmul.f32.gmra.mxu0 %v226
    %v307 = vpop.f32.mrf.mxu0
    %v308 = vadd.f32 %v199, %v307
    %309 = vmatmul.f32.gmra.mxu0 %v229
    %v310 = vpop.f32.mrf.mxu0
    %v311 = vadd.f32 %v199, %v310
    %312 = vdwg.mxu0
    %313 = vmatpush.msra.mxu0 0.0
    %314 = vmatpush.msra.mxu0 0.0
    %315 = vmatpush.msra.mxu0 0.0
    %316 = vmatpush.msra.mxu0 0.0
    %317 = vmatpush.msra.mxu0 0.0
    %318 = vmatpush.msra.mxu0 0.0
    %319 = vmatpush.msra.mxu0 0.0
    %320 = vmatpush.msra.mxu0 0.0
    %321 = vmatpush.msra.mxu0 0.0
    %322 = vmatpush.msra.mxu0 0.0
    %323 = vmatpush.msra.mxu0 0.0
    %324 = vmatpush.msra.mxu0 0.0
    %325 = vmatpush.msra.mxu0 %v194
    %326 = vmatpush.msra.mxu0 %v190
    %327 = vmatpush.msra.mxu0 %v186
    %328 = vmatpush.msra.mxu0 %v182
    %329 = vmatmul.f32.gmra.mxu0 %v208
    %v330 = vpop.f32.mrf.mxu0
    %v331 = vadd.f32 %v200, %v330
    %332 = vmatmul.f32.gmra.mxu0 %v211
    %v333 = vpop.f32.mrf.mxu0
    %v334 = vadd.f32 %v200, %v333
    %335 = vmatmul.f32.gmra.mxu0 %v214
    %v336 = vpop.f32.mrf.mxu0
    %v337 = vadd.f32 %v200, %v336
    %338 = vmatmul.f32.gmra.mxu0 %v217
    %v339 = vpop.f32.mrf.mxu0
    %v340 = vadd.f32 %v200, %v339
    %341 = vmatmul.f32.gmra.mxu0 %v220
    %v342 = vpop.f32.mrf.mxu0
    %v343 = vadd.f32 %v200, %v342
    %344 = vmatmul.f32.gmra.mxu0 %v223
    %v345 = vpop.f32.mrf.mxu0
    %v346 = vadd.f32 %v200, %v345
    %347 = vmatmul.f32.gmra.mxu0 %v226
    %v348 = vpop.f32.mrf.mxu0
    %v349 = vadd.f32 %v200, %v348
    %350 = vmatmul.f32.gmra.mxu0 %v229
    %v351 = vpop.f32.mrf.mxu0
    %v352 = vadd.f32 %v200, %v351
    %353 = vdwg.mxu0
    %354 = vmatpush.msra.mxu0 0.0
    %355 = vmatpush.msra.mxu0 0.0
    %356 = vmatpush.msra.mxu0 0.0
    %357 = vmatpush.msra.mxu0 0.0
    %358 = vmatpush.msra.mxu0 0.0
    %359 = vmatpush.msra.mxu0 0.0
    %360 = vmatpush.msra.mxu0 0.0
    %361 = vmatpush.msra.mxu0 0.0
    %362 = vmatpush.msra.mxu0 0.0
    %363 = vmatpush.msra.mxu0 0.0
    %364 = vmatpush.msra.mxu0 0.0
    %365 = vmatpush.msra.mxu0 0.0
    %366 = vmatpush.msra.mxu0 %v195
    %367 = vmatpush.msra.mxu0 %v191
    %368 = vmatpush.msra.mxu0 %v187
    %369 = vmatpush.msra.mxu0 %v183
    %370 = vmatmul.f32.gmra.mxu0 %v208
    %v371 = vpop.f32.mrf.mxu0
    %v372 = vadd.f32 %v201, %v371
    %373 = vmatmul.f32.gmra.mxu0 %v211
    %v374 = vpop.f32.mrf.mxu0
    %v375 = vadd.f32 %v201, %v374
    %376 = vmatmul.f32.gmra.mxu0 %v214
    %v377 = vpop.f32.mrf.mxu0
    %v378 = vadd.f32 %v201, %v377
    %379 = vmatmul.f32.gmra.mxu0 %v217
    %v380 = vpop.f32.mrf.mxu0
    %v381 = vadd.f32 %v201, %v380
    %382 = vmatmul.f32.gmra.mxu0 %v220
    %v383 = vpop.f32.mrf.mxu0
    %v384 = vadd.f32 %v201, %v383
    %385 = vmatmul.f32.gmra.mxu0 %v223
    %v386 = vpop.f32.mrf.mxu0
    %v387 = vadd.f32 %v201, %v386
    %388 = vmatmul.f32.gmra.mxu0 %v226
    %v389 = vpop.f32.mrf.mxu0
    %v390 = vadd.f32 %v201, %v389
    %391 = vmatmul.f32.gmra.mxu0 %v229
    %v392 = vpop.f32.mrf.mxu0
    %v393 = vadd.f32 %v201, %v392
    %394 = vdwg.mxu0
    %395 = vst [vmem:[#allocation2] sm:$0xff] %v249
    %396 = vst [vmem:[#allocation2 + $0x8] sm:$0xff] %v290
    %397 = vst [vmem:[#allocation2 + $0x10] sm:$0xff] %v331
    %398 = vst [vmem:[#allocation2 + $0x18] sm:$0xff] %v372
    %399 = vst [vmem:[#allocation2 + $0x20] sm:$0xff] %v252
    %400 = vst [vmem:[#allocation2 + $0x28] sm:$0xff] %v293
    %401 = vst [vmem:[#allocation2 + $0x30] sm:$0xff] %v334
    %402 = vst [vmem:[#allocation2 + $0x38] sm:$0xff] %v375
    %403 = vst [vmem:[#allocation2 + $0x40] sm:$0xff] %v255
    %404 = vst [vmem:[#allocation2 + $0x48] sm:$0xff] %v296
    %405 = vst [vmem:[#allocation2 + $0x50] sm:$0xff] %v337
    %406 = vst [vmem:[#allocation2 + $0x58] sm:$0xff] %v378
    %407 = vst [vmem:[#allocation2 + $0x60] sm:$0xff] %v258
    %408 = vst [vmem:[#allocation2 + $0x68] sm:$0xff] %v299
    %409 = vst [vmem:[#allocation2 + $0x70] sm:$0xff] %v340
    %410 = vst [vmem:[#allocation2 + $0x78] sm:$0xff] %v381
    %411 = vst [vmem:[#allocation2 + $0x80] sm:$0xff] %v261
    %412 = vst [vmem:[#allocation2 + $0x88] sm:$0xff] %v302
    %413 = vst [vmem:[#allocation2 + $0x90] sm:$0xff] %v343
    %414 = vst [vmem:[#allocation2 + $0x98] sm:$0xff] %v384
    %415 = vst [vmem:[#allocation2 + $0xa0] sm:$0xff] %v264
    %416 = vst [vmem:[#allocation2 + $0xa8] sm:$0xff] %v305
    %417 = vst [vmem:[#allocation2 + $0xb0] sm:$0xff] %v346
    %418 = vst [vmem:[#allocation2 + $0xb8] sm:$0xff] %v387
    %419 = vst [vmem:[#allocation2 + $0xc0] sm:$0xff] %v267
    %420 = vst [vmem:[#allocation2 + $0xc8] sm:$0xff] %v308
    %421 = vst [vmem:[#allocation2 + $0xd0] sm:$0xff] %v349
    %422 = vst [vmem:[#allocation2 + $0xd8] sm:$0xff] %v390
    %423 = vst [vmem:[#allocation2 + $0xe0] sm:$0xff] %v270
    %424 = vst [vmem:[#allocation2 + $0xe8] sm:$0xff] %v311
    %425 = vst [vmem:[#allocation2 + $0xf0] sm:$0xff] %v352
    %426 = vst [vmem:[#allocation2 + $0xf8] sm:$0xff] %v393
    %v427 = vld [vmem:[#allocation11] sm:$0xff]
    %v428 = vld [vmem:[#allocation11 + $0x8] sm:$0xff]
    %v429 = vld [vmem:[#allocation11 + $0x10] sm:$0xff]
    %v430 = vld [vmem:[#allocation11 + $0x18] sm:$0xff]
    %v431 = vld [vmem:[#allocation11 + $0x20] sm:$0xff]
    %v432 = vld [vmem:[#allocation11 + $0x28] sm:$0xff]
    %v433 = vld [vmem:[#allocation11 + $0x30] sm:$0xff]
    %v434 = vld [vmem:[#allocation11 + $0x38] sm:$0xff]
    %v435 = vld [vmem:[#allocation11 + $0x40] sm:$0xff]
    %v436 = vld [vmem:[#allocation11 + $0x48] sm:$0xff]
    %v437 = vld [vmem:[#allocation11 + $0x50] sm:$0xff]
    %v438 = vld [vmem:[#allocation11 + $0x58] sm:$0xff]
    %v439 = vld [vmem:[#allocation11 + $0x60] sm:$0xff]
    %v440 = vld [vmem:[#allocation11 + $0x68] sm:$0xff]
    %v441 = vld [vmem:[#allocation11 + $0x70] sm:$0xff]
    %v442 = vld [vmem:[#allocation11 + $0x78] sm:$0xff]
    %v443 = vld [vmem:[#allocation14] sm:$0xf]
    %v445 = vperm.slane %v443, 0
    %v446 = vperm.slane %v443, 1
    %v447 = vperm.slane %v443, 2
    %v448 = vperm.slane %v443, 3
    %453 = vmatpush.msra.mxu0 0.0
    %454 = vmatpush.msra.mxu0 0.0
    %455 = vmatpush.msra.mxu0 0.0
    %456 = vmatpush.msra.mxu0 0.0
    %457 = vmatpush.msra.mxu0 0.0
    %458 = vmatpush.msra.mxu0 0.0
    %459 = vmatpush.msra.mxu0 0.0
    %460 = vmatpush.msra.mxu0 0.0
    %461 = vmatpush.msra.mxu0 0.0
    %462 = vmatpush.msra.mxu0 0.0
    %463 = vmatpush.msra.mxu0 0.0
    %464 = vmatpush.msra.mxu0 0.0
    %465 = vmatpush.msra.mxu0 %v439
    %466 = vmatpush.msra.mxu0 %v435
    %467 = vmatpush.msra.mxu0 %v431
    %468 = vmatpush.msra.mxu0 %v427
    %469 = vmatmul.f32.gmra.mxu0 %v208
    %v470 = vpop.f32.mrf.mxu0
    %v471 = vadd.f32 %v445, %v470
    %472 = vmatmul.f32.gmra.mxu0 %v211
    %v473 = vpop.f32.mrf.mxu0
    %v474 = vadd.f32 %v445, %v473
    %475 = vmatmul.f32.gmra.mxu0 %v214
    %v476 = vpop.f32.mrf.mxu0
    %v477 = vadd.f32 %v445, %v476
    %478 = vmatmul.f32.gmra.mxu0 %v217
    %v479 = vpop.f32.mrf.mxu0
    %v480 = vadd.f32 %v445, %v479
    %481 = vmatmul.f32.gmra.mxu0 %v220
    %v482 = vpop.f32.mrf.mxu0
    %v483 = vadd.f32 %v445, %v482
    %484 = vmatmul.f32.gmra.mxu0 %v223
    %v485 = vpop.f32.mrf.mxu0
    %v486 = vadd.f32 %v445, %v485
    %487 = vmatmul.f32.gmra.mxu0 %v226
    %v488 = vpop.f32.mrf.mxu0
    %v489 = vadd.f32 %v445, %v488
    %490 = vmatmul.f32.gmra.mxu0 %v229
    %v491 = vpop.f32.mrf.mxu0
    %v492 = vadd.f32 %v445, %v491
    %493 = vdwg.mxu0
    %494 = vmatpush.msra.mxu0 0.0
    %495 = vmatpush.msra.mxu0 0.0
    %496 = vmatpush.msra.mxu0 0.0
    %497 = vmatpush.msra.mxu0 0.0
    %498 = vmatpush.msra.mxu0 0.0
    %499 = vmatpush.msra.mxu0 0.0
    %500 = vmatpush.msra.mxu0 0.0
    %501 = vmatpush.msra.mxu0 0.0
    %502 = vmatpush.msra.mxu0 0.0
    %503 = vmatpush.msra.mxu0 0.0
    %504 = vmatpush.msra.mxu0 0.0
    %505 = vmatpush.msra.mxu0 0.0
    %506 = vmatpush.msra.mxu0 %v440
    %507 = vmatpush.msra.mxu0 %v436
    %508 = vmatpush.msra.mxu0 %v432
    %509 = vmatpush.msra.mxu0 %v428
    %510 = vmatmul.f32.gmra.mxu0 %v208
    %v511 = vpop.f32.mrf.mxu0
    %v512 = vadd.f32 %v446, %v511
    %513 = vmatmul.f32.gmra.mxu0 %v211
    %v514 = vpop.f32.mrf.mxu0
    %v515 = vadd.f32 %v446, %v514
    %516 = vmatmul.f32.gmra.mxu0 %v214
    %v517 = vpop.f32.mrf.mxu0
    %v518 = vadd.f32 %v446, %v517
    %519 = vmatmul.f32.gmra.mxu0 %v217
    %v520 = vpop.f32.mrf.mxu0
    %v521 = vadd.f32 %v446, %v520
    %522 = vmatmul.f32.gmra.mxu0 %v220
    %v523 = vpop.f32.mrf.mxu0
    %v524 = vadd.f32 %v446, %v523
    %525 = vmatmul.f32.gmra.mxu0 %v223
    %v526 = vpop.f32.mrf.mxu0
    %v527 = vadd.f32 %v446, %v526
    %528 = vmatmul.f32.gmra.mxu0 %v226
    %v529 = vpop.f32.mrf.mxu0
    %v530 = vadd.f32 %v446, %v529
    %531 = vmatmul.f32.gmra.mxu0 %v229
    %v532 = vpop.f32.mrf.mxu0
    %v533 = vadd.f32 %v446, %v532
    %534 = vdwg.mxu0
    %535 = vmatpush.msra.mxu0 0.0
    %536 = vmatpush.msra.mxu0 0.0
    %537 = vmatpush.msra.mxu0 0.0
    %538 = vmatpush.msra.mxu0 0.0
    %539 = vmatpush.msra.mxu0 0.0
    %540 = vmatpush.msra.mxu0 0.0
    %541 = vmatpush.msra.mxu0 0.0
    %542 = vmatpush.msra.mxu0 0.0
    %543 = vmatpush.msra.mxu0 0.0
    %544 = vmatpush.msra.mxu0 0.0
    %545 = vmatpush.msra.mxu0 0.0
    %546 = vmatpush.msra.mxu0 0.0
    %547 = vmatpush.msra.mxu0 %v441
    %548 = vmatpush.msra.mxu0 %v437
    %549 = vmatpush.msra.mxu0 %v433
    %550 = vmatpush.msra.mxu0 %v429
    %551 = vmatmul.f32.gmra.mxu0 %v208
    %v552 = vpop.f32.mrf.mxu0
    %v553 = vadd.f32 %v447, %v552
    %554 = vmatmul.f32.gmra.mxu0 %v211
    %v555 = vpop.f32.mrf.mxu0
    %v556 = vadd.f32 %v447, %v555
    %557 = vmatmul.f32.gmra.mxu0 %v214
    %v558 = vpop.f32.mrf.mxu0
    %v559 = vadd.f32 %v447, %v558
    %560 = vmatmul.f32.gmra.mxu0 %v217
    %v561 = vpop.f32.mrf.mxu0
    %v562 = vadd.f32 %v447, %v561
    %563 = vmatmul.f32.gmra.mxu0 %v220
    %v564 = vpop.f32.mrf.mxu0
    %v565 = vadd.f32 %v447, %v564
    %566 = vmatmul.f32.gmra.mxu0 %v223
    %v567 = vpop.f32.mrf.mxu0
    %v568 = vadd.f32 %v447, %v567
    %569 = vmatmul.f32.gmra.mxu0 %v226
    %v570 = vpop.f32.mrf.mxu0
    %v571 = vadd.f32 %v447, %v570
    %572 = vmatmul.f32.gmra.mxu0 %v229
    %v573 = vpop.f32.mrf.mxu0
    %v574 = vadd.f32 %v447, %v573
    %575 = vdwg.mxu0
    %576 = vmatpush.msra.mxu0 0.0
    %577 = vmatpush.msra.mxu0 0.0
    %578 = vmatpush.msra.mxu0 0.0
    %579 = vmatpush.msra.mxu0 0.0
    %580 = vmatpush.msra.mxu0 0.0
    %581 = vmatpush.msra.mxu0 0.0
    %582 = vmatpush.msra.mxu0 0.0
    %583 = vmatpush.msra.mxu0 0.0
    %584 = vmatpush.msra.mxu0 0.0
    %585 = vmatpush.msra.mxu0 0.0
    %586 = vmatpush.msra.mxu0 0.0
    %587 = vmatpush.msra.mxu0 0.0
    %588 = vmatpush.msra.mxu0 %v442
    %589 = vmatpush.msra.mxu0 %v438
    %590 = vmatpush.msra.mxu0 %v434
    %591 = vmatpush.msra.mxu0 %v430
    %592 = vmatmul.f32.gmra.mxu0 %v208
    %v593 = vpop.f32.mrf.mxu0
    %v594 = vadd.f32 %v448, %v593
    %595 = vmatmul.f32.gmra.mxu0 %v211
    %v596 = vpop.f32.mrf.mxu0
    %v597 = vadd.f32 %v448, %v596
    %598 = vmatmul.f32.gmra.mxu0 %v214
    %v599 = vpop.f32.mrf.mxu0
    %v600 = vadd.f32 %v448, %v599
    %601 = vmatmul.f32.gmra.mxu0 %v217
    %v602 = vpop.f32.mrf.mxu0
    %v603 = vadd.f32 %v448, %v602
    %604 = vmatmul.f32.gmra.mxu0 %v220
    %v605 = vpop.f32.mrf.mxu0
    %v606 = vadd.f32 %v448, %v605
    %607 = vmatmul.f32.gmra.mxu0 %v223
    %v608 = vpop.f32.mrf.mxu0
    %v609 = vadd.f32 %v448, %v608
    %610 = vmatmul.f32.gmra.mxu0 %v226
    %v611 = vpop.f32.mrf.mxu0
    %v612 = vadd.f32 %v448, %v611
    %613 = vmatmul.f32.gmra.mxu0 %v229
    %v614 = vpop.f32.mrf.mxu0
    %v615 = vadd.f32 %v448, %v614
    %616 = vdwg.mxu0
    %617 = vst [vmem:[#allocation3] sm:$0xff] %v471
    %618 = vst [vmem:[#allocation3 + $0x8] sm:$0xff] %v512
    %619 = vst [vmem:[#allocation3 + $0x10] sm:$0xff] %v553
    %620 = vst [vmem:[#allocation3 + $0x18] sm:$0xff] %v594
    %621 = vst [vmem:[#allocation3 + $0x20] sm:$0xff] %v474
    %622 = vst [vmem:[#allocation3 + $0x28] sm:$0xff] %v515
    %623 = vst [vmem:[#allocation3 + $0x30] sm:$0xff] %v556
    %624 = vst [vmem:[#allocation3 + $0x38] sm:$0xff] %v597
    %625 = vst [vmem:[#allocation3 + $0x40] sm:$0xff] %v477
    %626 = vst [vmem:[#allocation3 + $0x48] sm:$0xff] %v518
    %627 = vst [vmem:[#allocation3 + $0x50] sm:$0xff] %v559
    %628 = vst [vmem:[#allocation3 + $0x58] sm:$0xff] %v600
    %629 = vst [vmem:[#allocation3 + $0x60] sm:$0xff] %v480
    %630 = vst [vmem:[#allocation3 + $0x68] sm:$0xff] %v521
    %631 = vst [vmem:[#allocation3 + $0x70] sm:$0xff] %v562
    %632 = vst [vmem:[#allocation3 + $0x78] sm:$0xff] %v603
    %633 = vst [vmem:[#allocation3 + $0x80] sm:$0xff] %v483
    %634 = vst [vmem:[#allocation3 + $0x88] sm:$0xff] %v524
    %635 = vst [vmem:[#allocation3 + $0x90] sm:$0xff] %v565
    %636 = vst [vmem:[#allocation3 + $0x98] sm:$0xff] %v606
    %637 = vst [vmem:[#allocation3 + $0xa0] sm:$0xff] %v486
    %638 = vst [vmem:[#allocation3 + $0xa8] sm:$0xff] %v527
    %639 = vst [vmem:[#allocation3 + $0xb0] sm:$0xff] %v568
    %640 = vst [vmem:[#allocation3 + $0xb8] sm:$0xff] %v609
    %641 = vst [vmem:[#allocation3 + $0xc0] sm:$0xff] %v489
    %642 = vst [vmem:[#allocation3 + $0xc8] sm:$0xff] %v530
    %643 = vst [vmem:[#allocation3 + $0xd0] sm:$0xff] %v571
    %644 = vst [vmem:[#allocation3 + $0xd8] sm:$0xff] %v612
    %645 = vst [vmem:[#allocation3 + $0xe0] sm:$0xff] %v492
    %646 = vst [vmem:[#allocation3 + $0xe8] sm:$0xff] %v533
    %647 = vst [vmem:[#allocation3 + $0xf0] sm:$0xff] %v574
    %648 = vst [vmem:[#allocation3 + $0xf8] sm:$0xff] %v615
    %v649 = vld [vmem:[#allocation15] sm:$0xff]
    %v650 = vld [vmem:[#allocation15 + $0x8] sm:$0xff]
    %v651 = vld [vmem:[#allocation15 + $0x10] sm:$0xff]
    %v652 = vld [vmem:[#allocation15 + $0x18] sm:$0xff]
    %v653 = vld [vmem:[#allocation15 + $0x20] sm:$0xff]
    %v654 = vld [vmem:[#allocation15 + $0x28] sm:$0xff]
    %v655 = vld [vmem:[#allocation15 + $0x30] sm:$0xff]
    %v656 = vld [vmem:[#allocation15 + $0x38] sm:$0xff]
    %v657 = vld [vmem:[#allocation15 + $0x40] sm:$0xff]
    %v658 = vld [vmem:[#allocation15 + $0x48] sm:$0xff]
    %v659 = vld [vmem:[#allocation15 + $0x50] sm:$0xff]
    %v660 = vld [vmem:[#allocation15 + $0x58] sm:$0xff]
    %v661 = vld [vmem:[#allocation15 + $0x60] sm:$0xff]
    %v662 = vld [vmem:[#allocation15 + $0x68] sm:$0xff]
    %v663 = vld [vmem:[#allocation15 + $0x70] sm:$0xff]
    %v664 = vld [vmem:[#allocation15 + $0x78] sm:$0xff]
    %v665 = vld [vmem:[#allocation15 + $0x80] sm:$0xff]
    %v666 = vld [vmem:[#allocation15 + $0x88] sm:$0xff]
    %v667 = vld [vmem:[#allocation15 + $0x90] sm:$0xff]
    %v668 = vld [vmem:[#allocation15 + $0x98] sm:$0xff]
    %v669 = vld [vmem:[#allocation15 + $0xa0] sm:$0xff]
    %v670 = vld [vmem:[#allocation15 + $0xa8] sm:$0xff]
    %v671 = vld [vmem:[#allocation15 + $0xb0] sm:$0xff]
    %v672 = vld [vmem:[#allocation15 + $0xb8] sm:$0xff]
    %v673 = vld [vmem:[#allocation15 + $0xc0] sm:$0xff]
    %v674 = vld [vmem:[#allocation15 + $0xc8] sm:$0xff]
    %v675 = vld [vmem:[#allocation15 + $0xd0] sm:$0xff]
    %v676 = vld [vmem:[#allocation15 + $0xd8] sm:$0xff]
    %v677 = vld [vmem:[#allocation15 + $0xe0] sm:$0xff]
    %v678 = vld [vmem:[#allocation15 + $0xe8] sm:$0xff]
    %v679 = vld [vmem:[#allocation15 + $0xf0] sm:$0xff]
    %v680 = vld [vmem:[#allocation15 + $0xf8] sm:$0xff]
    %v681 = vld [vmem:[#allocation15 + $0x100] sm:$0xff]
    %v682 = vld [vmem:[#allocation15 + $0x108] sm:$0xff]
    %v683 = vld [vmem:[#allocation15 + $0x110] sm:$0xff]
    %v684 = vld [vmem:[#allocation15 + $0x118] sm:$0xff]
    %v685 = vld [vmem:[#allocation15 + $0x120] sm:$0xff]
    %v686 = vld [vmem:[#allocation15 + $0x128] sm:$0xff]
    %v687 = vld [vmem:[#allocation15 + $0x130] sm:$0xff]
    %v688 = vld [vmem:[#allocation15 + $0x138] sm:$0xff]
    %v689 = vld [vmem:[#allocation15 + $0x140] sm:$0xff]
    %v690 = vld [vmem:[#allocation15 + $0x148] sm:$0xff]
    %v691 = vld [vmem:[#allocation15 + $0x150] sm:$0xff]
    %v692 = vld [vmem:[#allocation15 + $0x158] sm:$0xff]
    %v693 = vld [vmem:[#allocation15 + $0x160] sm:$0xff]
    %v694 = vld [vmem:[#allocation15 + $0x168] sm:$0xff]
    %v695 = vld [vmem:[#allocation15 + $0x170] sm:$0xff]
    %v696 = vld [vmem:[#allocation15 + $0x178] sm:$0xff]
    %v697 = vld [vmem:[#allocation15 + $0x180] sm:$0xff]
    %v698 = vld [vmem:[#allocation15 + $0x188] sm:$0xff]
    %v699 = vld [vmem:[#allocation15 + $0x190] sm:$0xff]
    %v700 = vld [vmem:[#allocation15 + $0x198] sm:$0xff]
    %v701 = vld [vmem:[#allocation15 + $0x1a0] sm:$0xff]
    %v702 = vld [vmem:[#allocation15 + $0x1a8] sm:$0xff]
    %v703 = vld [vmem:[#allocation15 + $0x1b0] sm:$0xff]
    %v704 = vld [vmem:[#allocation15 + $0x1b8] sm:$0xff]
    %v705 = vld [vmem:[#allocation15 + $0x1c0] sm:$0xff]
    %v706 = vld [vmem:[#allocation15 + $0x1c8] sm:$0xff]
    %v707 = vld [vmem:[#allocation15 + $0x1d0] sm:$0xff]
    %v708 = vld [vmem:[#allocation15 + $0x1d8] sm:$0xff]
    %v709 = vld [vmem:[#allocation15 + $0x1e0] sm:$0xff]
    %v710 = vld [vmem:[#allocation15 + $0x1e8] sm:$0xff]
    %v711 = vld [vmem:[#allocation15 + $0x1f0] sm:$0xff]
    %v712 = vld [vmem:[#allocation15 + $0x1f8] sm:$0xff]
    %713 = vmatpush.msra.mxu0 %v709
    %714 = vmatpush.msra.mxu0 %v705
    %715 = vmatpush.msra.mxu0 %v701
    %716 = vmatpush.msra.mxu0 %v697
    %717 = vmatpush.msra.mxu0 %v693
    %718 = vmatpush.msra.mxu0 %v689
    %719 = vmatpush.msra.mxu0 %v685
    %720 = vmatpush.msra.mxu0 %v681
    %721 = vmatpush.msra.mxu0 %v677
    %722 = vmatpush.msra.mxu0 %v673
    %723 = vmatpush.msra.mxu0 %v669
    %724 = vmatpush.msra.mxu0 %v665
    %725 = vmatpush.msra.mxu0 %v661
    %726 = vmatpush.msra.mxu0 %v657
    %727 = vmatpush.msra.mxu0 %v653
    %728 = vmatpush.msra.mxu0 %v649
    %729 = vmatmul.f32.gmra.mxu0 0.0
    %v730 = vpop.f32.mrf.mxu0
    %v731 = vadd.f32 0.0, %v730
    %732 = vdwg.mxu0
    %733 = vmatpush.msra.mxu0 %v710
    %734 = vmatpush.msra.mxu0 %v706
    %735 = vmatpush.msra.mxu0 %v702
    %736 = vmatpush.msra.mxu0 %v698
    %737 = vmatpush.msra.mxu0 %v694
    %738 = vmatpush.msra.mxu0 %v690
    %739 = vmatpush.msra.mxu0 %v686
    %740 = vmatpush.msra.mxu0 %v682
    %741 = vmatpush.msra.mxu0 %v678
    %742 = vmatpush.msra.mxu0 %v674
    %743 = vmatpush.msra.mxu0 %v670
    %744 = vmatpush.msra.mxu0 %v666
    %745 = vmatpush.msra.mxu0 %v662
    %746 = vmatpush.msra.mxu0 %v658
    %747 = vmatpush.msra.mxu0 %v654
    %748 = vmatpush.msra.mxu0 %v650
    %749 = vmatmul.f32.gmra.mxu0 0.0
    %v750 = vpop.f32.mrf.mxu0
    %v751 = vadd.f32 0.0, %v750
    %752 = vdwg.mxu0
    %753 = vmatpush.msra.mxu0 %v711
    %754 = vmatpush.msra.mxu0 %v707
    %755 = vmatpush.msra.mxu0 %v703
    %756 = vmatpush.msra.mxu0 %v699
    %757 = vmatpush.msra.mxu0 %v695
    %758 = vmatpush.msra.mxu0 %v691
    %759 = vmatpush.msra.mxu0 %v687
    %760 = vmatpush.msra.mxu0 %v683
    %761 = vmatpush.msra.mxu0 %v679
    %762 = vmatpush.msra.mxu0 %v675
    %763 = vmatpush.msra.mxu0 %v671
    %764 = vmatpush.msra.mxu0 %v667
    %765 = vmatpush.msra.mxu0 %v663
    %766 = vmatpush.msra.mxu0 %v659
    %767 = vmatpush.msra.mxu0 %v655
    %768 = vmatpush.msra.mxu0 %v651
    %769 = vmatmul.f32.gmra.mxu0 0.0
    %v770 = vpop.f32.mrf.mxu0
    %v771 = vadd.f32 0.0, %v770
    %772 = vdwg.mxu0
    %773 = vmatpush.msra.mxu0 %v712
    %774 = vmatpush.msra.mxu0 %v708
    %775 = vmatpush.msra.mxu0 %v704
    %776 = vmatpush.msra.mxu0 %v700
    %777 = vmatpush.msra.mxu0 %v696
    %778 = vmatpush.msra.mxu0 %v692
    %779 = vmatpush.msra.mxu0 %v688
    %780 = vmatpush.msra.mxu0 %v684
    %781 = vmatpush.msra.mxu0 %v680
    %782 = vmatpush.msra.mxu0 %v676
    %783 = vmatpush.msra.mxu0 %v672
    %784 = vmatpush.msra.mxu0 %v668
    %785 = vmatpush.msra.mxu0 %v664
    %786 = vmatpush.msra.mxu0 %v660
    %787 = vmatpush.msra.mxu0 %v656
    %788 = vmatpush.msra.mxu0 %v652
    %789 = vmatmul.f32.gmra.mxu0 0.0
    %v790 = vpop.f32.mrf.mxu0
    %v791 = vadd.f32 0.0, %v790
    %792 = vdwg.mxu0
    %v793 = vld [vmem:[#allocation17] sm:$0xff]
    %v794 = vld [vmem:[#allocation17 + $0x8] sm:$0xff]
    %v795 = vld [vmem:[#allocation17 + $0x10] sm:$0xff]
    %v796 = vld [vmem:[#allocation17 + $0x18] sm:$0xff]
    %v797 = vld [vmem:[#allocation17 + $0x20] sm:$0xff]
    %v798 = vld [vmem:[#allocation17 + $0x28] sm:$0xff]
    %v799 = vld [vmem:[#allocation17 + $0x30] sm:$0xff]
    %v800 = vld [vmem:[#allocation17 + $0x38] sm:$0xff]
    %v801 = vld [vmem:[#allocation17 + $0x40] sm:$0xff]
    %v802 = vld [vmem:[#allocation17 + $0x48] sm:$0xff]
    %v803 = vld [vmem:[#allocation17 + $0x50] sm:$0xff]
    %v804 = vld [vmem:[#allocation17 + $0x58] sm:$0xff]
    %v805 = vld [vmem:[#allocation17 + $0x60] sm:$0xff]
    %v806 = vld [vmem:[#allocation17 + $0x68] sm:$0xff]
    %v807 = vld [vmem:[#allocation17 + $0x70] sm:$0xff]
    %v808 = vld [vmem:[#allocation17 + $0x78] sm:$0xff]
    %v809 = vld [vmem:[#allocation17 + $0x80] sm:$0xff]
    %v810 = vld [vmem:[#allocation17 + $0x88] sm:$0xff]
    %v811 = vld [vmem:[#allocation17 + $0x90] sm:$0xff]
    %v812 = vld [vmem:[#allocation17 + $0x98] sm:$0xff]
    %v813 = vld [vmem:[#allocation17 + $0xa0] sm:$0xff]
    %v814 = vld [vmem:[#allocation17 + $0xa8] sm:$0xff]
    %v815 = vld [vmem:[#allocation17 + $0xb0] sm:$0xff]
    %v816 = vld [vmem:[#allocation17 + $0xb8] sm:$0xff]
    %v817 = vld [vmem:[#allocation17 + $0xc0] sm:$0xff]
    %v818 = vld [vmem:[#allocation17 + $0xc8] sm:$0xff]
    %v819 = vld [vmem:[#allocation17 + $0xd0] sm:$0xff]
    %v820 = vld [vmem:[#allocation17 + $0xd8] sm:$0xff]
    %v821 = vld [vmem:[#allocation17 + $0xe0] sm:$0xff]
    %v822 = vld [vmem:[#allocation17 + $0xe8] sm:$0xff]
    %v823 = vld [vmem:[#allocation17 + $0xf0] sm:$0xff]
    %v824 = vld [vmem:[#allocation17 + $0xf8] sm:$0xff]
    %v825 = vld [vmem:[#allocation17 + $0x100] sm:$0xff]
    %v826 = vld [vmem:[#allocation17 + $0x108] sm:$0xff]
    %v827 = vld [vmem:[#allocation17 + $0x110] sm:$0xff]
    %v828 = vld [vmem:[#allocation17 + $0x118] sm:$0xff]
    %v829 = vld [vmem:[#allocation17 + $0x120] sm:$0xff]
    %v830 = vld [vmem:[#allocation17 + $0x128] sm:$0xff]
    %v831 = vld [vmem:[#allocation17 + $0x130] sm:$0xff]
    %v832 = vld [vmem:[#allocation17 + $0x138] sm:$0xff]
    %v833 = vld [vmem:[#allocation17 + $0x140] sm:$0xff]
    %v834 = vld [vmem:[#allocation17 + $0x148] sm:$0xff]
    %v835 = vld [vmem:[#allocation17 + $0x150] sm:$0xff]
    %v836 = vld [vmem:[#allocation17 + $0x158] sm:$0xff]
    %v837 = vld [vmem:[#allocation17 + $0x160] sm:$0xff]
    %v838 = vld [vmem:[#allocation17 + $0x168] sm:$0xff]
    %v839 = vld [vmem:[#allocation17 + $0x170] sm:$0xff]
    %v840 = vld [vmem:[#allocation17 + $0x178] sm:$0xff]
    %v841 = vld [vmem:[#allocation17 + $0x180] sm:$0xff]
    %v842 = vld [vmem:[#allocation17 + $0x188] sm:$0xff]
    %v843 = vld [vmem:[#allocation17 + $0x190] sm:$0xff]
    %v844 = vld [vmem:[#allocation17 + $0x198] sm:$0xff]
    %v845 = vld [vmem:[#allocation17 + $0x1a0] sm:$0xff]
    %v846 = vld [vmem:[#allocation17 + $0x1a8] sm:$0xff]
    %v847 = vld [vmem:[#allocation17 + $0x1b0] sm:$0xff]
    %v848 = vld [vmem:[#allocation17 + $0x1b8] sm:$0xff]
    %v849 = vld [vmem:[#allocation17 + $0x1c0] sm:$0xff]
    %v850 = vld [vmem:[#allocation17 + $0x1c8] sm:$0xff]
    %v851 = vld [vmem:[#allocation17 + $0x1d0] sm:$0xff]
    %v852 = vld [vmem:[#allocation17 + $0x1d8] sm:$0xff]
    %v853 = vld [vmem:[#allocation17 + $0x1e0] sm:$0xff]
    %v854 = vld [vmem:[#allocation17 + $0x1e8] sm:$0xff]
    %v855 = vld [vmem:[#allocation17 + $0x1f0] sm:$0xff]
    %v856 = vld [vmem:[#allocation17 + $0x1f8] sm:$0xff]
    %857 = vmatpush.msra.mxu0 %v853
    %858 = vmatpush.msra.mxu0 %v849
    %859 = vmatpush.msra.mxu0 %v845
    %860 = vmatpush.msra.mxu0 %v841
    %861 = vmatpush.msra.mxu0 %v837
    %862 = vmatpush.msra.mxu0 %v833
    %863 = vmatpush.msra.mxu0 %v829
    %864 = vmatpush.msra.mxu0 %v825
    %865 = vmatpush.msra.mxu0 %v821
    %866 = vmatpush.msra.mxu0 %v817
    %867 = vmatpush.msra.mxu0 %v813
    %868 = vmatpush.msra.mxu0 %v809
    %869 = vmatpush.msra.mxu0 %v805
    %870 = vmatpush.msra.mxu0 %v801
    %871 = vmatpush.msra.mxu0 %v797
    %872 = vmatpush.msra.mxu0 %v793
    %873 = vmatmul.f32.gmra.mxu0 0.0
    %v874 = vpop.f32.mrf.mxu0
    %v875 = vadd.f32 0.0, %v874
    %876 = vdwg.mxu0
    %877 = vmatpush.msra.mxu0 %v854
    %878 = vmatpush.msra.mxu0 %v850
    %879 = vmatpush.msra.mxu0 %v846
    %880 = vmatpush.msra.mxu0 %v842
    %881 = vmatpush.msra.mxu0 %v838
    %882 = vmatpush.msra.mxu0 %v834
    %883 = vmatpush.msra.mxu0 %v830
    %884 = vmatpush.msra.mxu0 %v826
    %885 = vmatpush.msra.mxu0 %v822
    %886 = vmatpush.msra.mxu0 %v818
    %887 = vmatpush.msra.mxu0 %v814
    %888 = vmatpush.msra.mxu0 %v810
    %889 = vmatpush.msra.mxu0 %v806
    %890 = vmatpush.msra.mxu0 %v802
    %891 = vmatpush.msra.mxu0 %v798
    %892 = vmatpush.msra.mxu0 %v794
    %893 = vmatmul.f32.gmra.mxu0 0.0
    %v894 = vpop.f32.mrf.mxu0
    %v895 = vadd.f32 0.0, %v894
    %896 = vdwg.mxu0
    %897 = vmatpush.msra.mxu0 %v855
    %898 = vmatpush.msra.mxu0 %v851
    %899 = vmatpush.msra.mxu0 %v847
    %900 = vmatpush.msra.mxu0 %v843
    %901 = vmatpush.msra.mxu0 %v839
    %902 = vmatpush.msra.mxu0 %v835
    %903 = vmatpush.msra.mxu0 %v831
    %904 = vmatpush.msra.mxu0 %v827
    %905 = vmatpush.msra.mxu0 %v823
    %906 = vmatpush.msra.mxu0 %v819
    %907 = vmatpush.msra.mxu0 %v815
    %908 = vmatpush.msra.mxu0 %v811
    %909 = vmatpush.msra.mxu0 %v807
    %910 = vmatpush.msra.mxu0 %v803
    %911 = vmatpush.msra.mxu0 %v799
    %912 = vmatpush.msra.mxu0 %v795
    %913 = vmatmul.f32.gmra.mxu0 0.0
    %v914 = vpop.f32.mrf.mxu0
    %v915 = vadd.f32 0.0, %v914
    %916 = vdwg.mxu0
    %917 = vmatpush.msra.mxu0 %v856
    %918 = vmatpush.msra.mxu0 %v852
    %919 = vmatpush.msra.mxu0 %v848
    %920 = vmatpush.msra.mxu0 %v844
    %921 = vmatpush.msra.mxu0 %v840
    %922 = vmatpush.msra.mxu0 %v836
    %923 = vmatpush.msra.mxu0 %v832
    %924 = vmatpush.msra.mxu0 %v828
    %925 = vmatpush.msra.mxu0 %v824
    %926 = vmatpush.msra.mxu0 %v820
    %927 = vmatpush.msra.mxu0 %v816
    %928 = vmatpush.msra.mxu0 %v812
    %929 = vmatpush.msra.mxu0 %v808
    %930 = vmatpush.msra.mxu0 %v804
    %931 = vmatpush.msra.mxu0 %v800
    %932 = vmatpush.msra.mxu0 %v796
    %933 = vmatmul.f32.gmra.mxu0 0.0
    %v934 = vpop.f32.mrf.mxu0
    %v935 = vadd.f32 0.0, %v934
    %936 = vdwg.mxu0
    %v937 = vld [vmem:[#allocation2] sm:$0xff]
    %v938 = vld [vmem:[#allocation2 + $0x8] sm:$0xff]
    %v939 = vld [vmem:[#allocation2 + $0x10] sm:$0xff]
    %v940 = vld [vmem:[#allocation2 + $0x18] sm:$0xff]
    %v941 = vadd.f32 %v937, %v731
    %v942 = vadd.f32 %v938, %v751
    %v943 = vadd.f32 %v939, %v771
    %v944 = vadd.f32 %v940, %v791
    %s945 = scalar_lea.vmem [#allocation3], 224
    %v946 = vld [vmem:[%s945] sm:$0xff]
    %v947 = vld [vmem:[%s945 + $0x8] sm:$0xff]
    %v948 = vld [vmem:[%s945 + $0x10] sm:$0xff]
    %v949 = vld [vmem:[%s945 + $0x18] sm:$0xff]
    %v950 = vadd.f32 %v946, %v875
    %v951 = vadd.f32 %v947, %v895
    %v952 = vadd.f32 %v948, %v915
    %v953 = vadd.f32 %v949, %v935
    %v954 = vxor.u32 %v941, 2147483648
    %v955 = vmul.f32 %v954, 1.442695
    %v956 = vpow.pop %v955
    %v957 = vadd.f32 %v956, 1.0
    %v958 = vrcp.pop %v957
    %v959 = vmul.f32 %v957, %v958
    %v960 = vsub.f32 1.0, %v959
    %v961 = vmul.f32 %v958, %v960
    %v962 = vadd.f32 %v958, %v961
    %vm963 = vweird.f32 %v957
    %vm964 = vweird.f32 %v958
    %vm965 = vmor %vm963, %vm964
    %v966 = vsel %vm965, %v958, %v962
    %v967 = vand.u32 2147483647, %v957
    %vm968 = vcmp.eq.f32.partialorder %v967, 8.507059e+37
    %v969 = vand.u32 %v957, 2147483648
    %v970 = vor.u32 1.1754944e-38, %v969
    %v971 = vsel %vm968, %v970, %v966
    %v972 = vmul.f32 1.0, %v971
    %v973 = vxor.u32 %v942, 2147483648
    %v974 = vmul.f32 %v973, 1.442695
    %v975 = vpow.pop %v974
    %v976 = vadd.f32 %v975, 1.0
    %v977 = vrcp.pop %v976
    %v978 = vmul.f32 %v976, %v977
    %v979 = vsub.f32 1.0, %v978
    %v980 = vmul.f32 %v977, %v979
    %v981 = vadd.f32 %v977, %v980
    %vm982 = vweird.f32 %v976
    %vm983 = vweird.f32 %v977
    %vm984 = vmor %vm982, %vm983
    %v985 = vsel %vm984, %v977, %v981
    %v986 = vand.u32 2147483647, %v976
    %vm987 = vcmp.eq.f32.partialorder %v986, 8.507059e+37
    %v988 = vand.u32 %v976, 2147483648
    %v989 = vor.u32 1.1754944e-38, %v988
    %v990 = vsel %vm987, %v989, %v985
    %v991 = vmul.f32 1.0, %v990
    %v992 = vtanh.pop %v943
    %v993 = vxor.u32 %v944, 2147483648
    %v994 = vmul.f32 %v993, 1.442695
    %v995 = vpow.pop %v994
    %v996 = vadd.f32 %v995, 1.0
    %v997 = vrcp.pop %v996
    %v998 = vmul.f32 %v996, %v997
    %v999 = vsub.f32 1.0, %v998
    %v1000 = vmul.f32 %v997, %v999
    %v1001 = vadd.f32 %v997, %v1000
    %vm1002 = vweird.f32 %v996
    %vm1003 = vweird.f32 %v997
    %vm1004 = vmor %vm1002, %vm1003
    %v1005 = vsel %vm1004, %v997, %v1001
    %v1006 = vand.u32 2147483647, %v996
    %vm1007 = vcmp.eq.f32.partialorder %v1006, 8.507059e+37
    %v1008 = vand.u32 %v996, 2147483648
    %v1009 = vor.u32 1.1754944e-38, %v1008
    %v1010 = vsel %vm1007, %v1009, %v1005
    %v1011 = vmul.f32 1.0, %v1010
    %v1012 = vmul.f32 %v991, 0.0
    %v1013 = vmul.f32 %v972, %v992
    %v1014 = vadd.f32 %v1012, %v1013
    %v1015 = vtanh.pop %v1014
    %v1016 = vmul.f32 %v1011, %v1015
    %v1017 = vxor.u32 %v950, 2147483648
    %v1018 = vmul.f32 %v1017, 1.442695
    %v1019 = vpow.pop %v1018
    %v1020 = vadd.f32 %v1019, 1.0
    %v1021 = vrcp.pop %v1020
    %v1022 = vmul.f32 %v1020, %v1021
    %v1023 = vsub.f32 1.0, %v1022
    %v1024 = vmul.f32 %v1021, %v1023
    %v1025 = vadd.f32 %v1021, %v1024
    %vm1026 = vweird.f32 %v1020
    %vm1027 = vweird.f32 %v1021
    %vm1028 = vmor %vm1026, %vm1027
    %v1029 = vsel %vm1028, %v1021, %v1025
    %v1030 = vand.u32 2147483647, %v1020
    %vm1031 = vcmp.eq.f32.partialorder %v1030, 8.507059e+37
    %v1032 = vand.u32 %v1020, 2147483648
    %v1033 = vor.u32 1.1754944e-38, %v1032
    %v1034 = vsel %vm1031, %v1033, %v1029
    %v1035 = vmul.f32 1.0, %v1034
    %v1036 = vxor.u32 %v951, 2147483648
    %v1037 = vmul.f32 %v1036, 1.442695
    %v1038 = vpow.pop %v1037
    %v1039 = vadd.f32 %v1038, 1.0
    %v1040 = vrcp.pop %v1039
    %v1041 = vmul.f32 %v1039, %v1040
    %v1042 = vsub.f32 1.0, %v1041
    %v1043 = vmul.f32 %v1040, %v1042
    %v1044 = vadd.f32 %v1040, %v1043
    %vm1045 = vweird.f32 %v1039
    %vm1046 = vweird.f32 %v1040
    %vm1047 = vmor %vm1045, %vm1046
    %v1048 = vsel %vm1047, %v1040, %v1044
    %v1049 = vand.u32 2147483647, %v1039
    %vm1050 = vcmp.eq.f32.partialorder %v1049, 8.507059e+37
    %v1051 = vand.u32 %v1039, 2147483648
    %v1052 = vor.u32 1.1754944e-38, %v1051
    %v1053 = vsel %vm1050, %v1052, %v1048
    %v1054 = vmul.f32 1.0, %v1053
    %v1055 = vtanh.pop %v952
    %v1056 = vxor.u32 %v953, 2147483648
    %v1057 = vmul.f32 %v1056, 1.442695
    %v1058 = vpow.pop %v1057
    %v1059 = vadd.f32 %v1058, 1.0
    %v1060 = vrcp.pop %v1059
    %v1061 = vmul.f32 %v1059, %v1060
    %v1062 = vsub.f32 1.0, %v1061
    %v1063 = vmul.f32 %v1060, %v1062
    %v1064 = vadd.f32 %v1060, %v1063
    %vm1065 = vweird.f32 %v1059
    %vm1066 = vweird.f32 %v1060
    %vm1067 = vmor %vm1065, %vm1066
    %v1068 = vsel %vm1067, %v1060, %v1064
    %v1069 = vand.u32 2147483647, %v1059
    %vm1070 = vcmp.eq.f32.partialorder %v1069, 8.507059e+37
    %v1071 = vand.u32 %v1059, 2147483648
    %v1072 = vor.u32 1.1754944e-38, %v1071
    %v1073 = vsel %vm1070, %v1072, %v1068
    %v1074 = vmul.f32 1.0, %v1073
    %v1075 = vmul.f32 %v1054, 0.0
    %v1076 = vmul.f32 %v1035, %v1055
    %v1077 = vadd.f32 %v1075, %v1076
    %v1078 = vtanh.pop %v1077
    %v1079 = vmul.f32 %v1074, %v1078
    %1080 = vst [vmem:[#allocation4] sm:$0xff] %v1016
    %s1081 = scalar_lea.vmem [#allocation5], 56
    %1082 = vst [vmem:[%s1081] sm:$0xff] %v1079
    %v1083 = vld [vmem:[#allocation15] sm:$0xff]
    %v1084 = vld [vmem:[#allocation15 + $0x8] sm:$0xff]
    %v1085 = vld [vmem:[#allocation15 + $0x10] sm:$0xff]
    %v1086 = vld [vmem:[#allocation15 + $0x18] sm:$0xff]
    %v1087 = vld [vmem:[#allocation15 + $0x20] sm:$0xff]
    %v1088 = vld [vmem:[#allocation15 + $0x28] sm:$0xff]
    %v1089 = vld [vmem:[#allocation15 + $0x30] sm:$0xff]
    %v1090 = vld [vmem:[#allocation15 + $0x38] sm:$0xff]
    %v1091 = vld [vmem:[#allocation15 + $0x40] sm:$0xff]
    %v1092 = vld [vmem:[#allocation15 + $0x48] sm:$0xff]
    %v1093 = vld [vmem:[#allocation15 + $0x50] sm:$0xff]
    %v1094 = vld [vmem:[#allocation15 + $0x58] sm:$0xff]
    %v1095 = vld [vmem:[#allocation15 + $0x60] sm:$0xff]
    %v1096 = vld [vmem:[#allocation15 + $0x68] sm:$0xff]
    %v1097 = vld [vmem:[#allocation15 + $0x70] sm:$0xff]
    %v1098 = vld [vmem:[#allocation15 + $0x78] sm:$0xff]
    %v1099 = vld [vmem:[#allocation15 + $0x80] sm:$0xff]
    %v1100 = vld [vmem:[#allocation15 + $0x88] sm:$0xff]
    %v1101 = vld [vmem:[#allocation15 + $0x90] sm:$0xff]
    %v1102 = vld [vmem:[#allocation15 + $0x98] sm:$0xff]
    %v1103 = vld [vmem:[#allocation15 + $0xa0] sm:$0xff]
    %v1104 = vld [vmem:[#allocation15 + $0xa8] sm:$0xff]
    %v1105 = vld [vmem:[#allocation15 + $0xb0] sm:$0xff]
    %v1106 = vld [vmem:[#allocation15 + $0xb8] sm:$0xff]
    %v1107 = vld [vmem:[#allocation15 + $0xc0] sm:$0xff]
    %v1108 = vld [vmem:[#allocation15 + $0xc8] sm:$0xff]
    %v1109 = vld [vmem:[#allocation15 + $0xd0] sm:$0xff]
    %v1110 = vld [vmem:[#allocation15 + $0xd8] sm:$0xff]
    %v1111 = vld [vmem:[#allocation15 + $0xe0] sm:$0xff]
    %v1112 = vld [vmem:[#allocation15 + $0xe8] sm:$0xff]
    %v1113 = vld [vmem:[#allocation15 + $0xf0] sm:$0xff]
    %v1114 = vld [vmem:[#allocation15 + $0xf8] sm:$0xff]
    %v1115 = vld [vmem:[#allocation15 + $0x100] sm:$0xff]
    %v1116 = vld [vmem:[#allocation15 + $0x108] sm:$0xff]
    %v1117 = vld [vmem:[#allocation15 + $0x110] sm:$0xff]
    %v1118 = vld [vmem:[#allocation15 + $0x118] sm:$0xff]
    %v1119 = vld [vmem:[#allocation15 + $0x120] sm:$0xff]
    %v1120 = vld [vmem:[#allocation15 + $0x128] sm:$0xff]
    %v1121 = vld [vmem:[#allocation15 + $0x130] sm:$0xff]
    %v1122 = vld [vmem:[#allocation15 + $0x138] sm:$0xff]
    %v1123 = vld [vmem:[#allocation15 + $0x140] sm:$0xff]
    %v1124 = vld [vmem:[#allocation15 + $0x148] sm:$0xff]
    %v1125 = vld [vmem:[#allocation15 + $0x150] sm:$0xff]
    %v1126 = vld [vmem:[#allocation15 + $0x158] sm:$0xff]
    %v1127 = vld [vmem:[#allocation15 + $0x160] sm:$0xff]
    %v1128 = vld [vmem:[#allocation15 + $0x168] sm:$0xff]
    %v1129 = vld [vmem:[#allocation15 + $0x170] sm:$0xff]
    %v1130 = vld [vmem:[#allocation15 + $0x178] sm:$0xff]
    %v1131 = vld [vmem:[#allocation15 + $0x180] sm:$0xff]
    %v1132 = vld [vmem:[#allocation15 + $0x188] sm:$0xff]
    %v1133 = vld [vmem:[#allocation15 + $0x190] sm:$0xff]
    %v1134 = vld [vmem:[#allocation15 + $0x198] sm:$0xff]
    %v1135 = vld [vmem:[#allocation15 + $0x1a0] sm:$0xff]
    %v1136 = vld [vmem:[#allocation15 + $0x1a8] sm:$0xff]
    %v1137 = vld [vmem:[#allocation15 + $0x1b0] sm:$0xff]
    %v1138 = vld [vmem:[#allocation15 + $0x1b8] sm:$0xff]
    %v1139 = vld [vmem:[#allocation15 + $0x1c0] sm:$0xff]
    %v1140 = vld [vmem:[#allocation15 + $0x1c8] sm:$0xff]
    %v1141 = vld [vmem:[#allocation15 + $0x1d0] sm:$0xff]
    %v1142 = vld [vmem:[#allocation15 + $0x1d8] sm:$0xff]
    %v1143 = vld [vmem:[#allocation15 + $0x1e0] sm:$0xff]
    %v1144 = vld [vmem:[#allocation15 + $0x1e8] sm:$0xff]
    %v1145 = vld [vmem:[#allocation15 + $0x1f0] sm:$0xff]
    %v1146 = vld [vmem:[#allocation15 + $0x1f8] sm:$0xff]
    %1147 = vmatpush.msra.mxu0 %v1143
    %1148 = vmatpush.msra.mxu0 %v1139
    %1149 = vmatpush.msra.mxu0 %v1135
    %1150 = vmatpush.msra.mxu0 %v1131
    %1151 = vmatpush.msra.mxu0 %v1127
    %1152 = vmatpush.msra.mxu0 %v1123
    %1153 = vmatpush.msra.mxu0 %v1119
    %1154 = vmatpush.msra.mxu0 %v1115
    %1155 = vmatpush.msra.mxu0 %v1111
    %1156 = vmatpush.msra.mxu0 %v1107
    %1157 = vmatpush.msra.mxu0 %v1103
    %1158 = vmatpush.msra.mxu0 %v1099
    %1159 = vmatpush.msra.mxu0 %v1095
    %1160 = vmatpush.msra.mxu0 %v1091
    %1161 = vmatpush.msra.mxu0 %v1087
    %1162 = vmatpush.msra.mxu0 %v1083
    %1163 = vmatmul.f32.gmra.mxu0 %v1016
    %v1164 = vpop.f32.mrf.mxu0
    %v1165 = vadd.f32 0.0, %v1164
    %1166 = vdwg.mxu0
    %1167 = vmatpush.msra.mxu0 %v1144
    %1168 = vmatpush.msra.mxu0 %v1140
    %1169 = vmatpush.msra.mxu0 %v1136
    %1170 = vmatpush.msra.mxu0 %v1132
    %1171 = vmatpush.msra.mxu0 %v1128
    %1172 = vmatpush.msra.mxu0 %v1124
    %1173 = vmatpush.msra.mxu0 %v1120
    %1174 = vmatpush.msra.mxu0 %v1116
    %1175 = vmatpush.msra.mxu0 %v1112
    %1176 = vmatpush.msra.mxu0 %v1108
    %1177 = vmatpush.msra.mxu0 %v1104
    %1178 = vmatpush.msra.mxu0 %v1100
    %1179 = vmatpush.msra.mxu0 %v1096
    %1180 = vmatpush.msra.mxu0 %v1092
    %1181 = vmatpush.msra.mxu0 %v1088
    %1182 = vmatpush.msra.mxu0 %v1084
    %1183 = vmatmul.f32.gmra.mxu0 %v1016
    %v1184 = vpop.f32.mrf.mxu0
    %v1185 = vadd.f32 0.0, %v1184
    %1186 = vdwg.mxu0
    %1187 = vmatpush.msra.mxu0 %v1145
    %1188 = vmatpush.msra.mxu0 %v1141
    %1189 = vmatpush.msra.mxu0 %v1137
    %1190 = vmatpush.msra.mxu0 %v1133
    %1191 = vmatpush.msra.mxu0 %v1129
    %1192 = vmatpush.msra.mxu0 %v1125
    %1193 = vmatpush.msra.mxu0 %v1121
    %1194 = vmatpush.msra.mxu0 %v1117
    %1195 = vmatpush.msra.mxu0 %v1113
    %1196 = vmatpush.msra.mxu0 %v1109
    %1197 = vmatpush.msra.mxu0 %v1105
    %1198 = vmatpush.msra.mxu0 %v1101
    %1199 = vmatpush.msra.mxu0 %v1097
    %1200 = vmatpush.msra.mxu0 %v1093
    %1201 = vmatpush.msra.mxu0 %v1089
    %1202 = vmatpush.msra.mxu0 %v1085
    %1203 = vmatmul.f32.gmra.mxu0 %v1016
    %v1204 = vpop.f32.mrf.mxu0
    %v1205 = vadd.f32 0.0, %v1204
    %1206 = vdwg.mxu0
    %1207 = vmatpush.msra.mxu0 %v1146
    %1208 = vmatpush.msra.mxu0 %v1142
    %1209 = vmatpush.msra.mxu0 %v1138
    %1210 = vmatpush.msra.mxu0 %v1134
    %1211 = vmatpush.msra.mxu0 %v1130
    %1212 = vmatpush.msra.mxu0 %v1126
    %1213 = vmatpush.msra.mxu0 %v1122
    %1214 = vmatpush.msra.mxu0 %v1118
    %1215 = vmatpush.msra.mxu0 %v1114
    %1216 = vmatpush.msra.mxu0 %v1110
    %1217 = vmatpush.msra.mxu0 %v1106
    %1218 = vmatpush.msra.mxu0 %v1102
    %1219 = vmatpush.msra.mxu0 %v1098
    %1220 = vmatpush.msra.mxu0 %v1094
    %1221 = vmatpush.msra.mxu0 %v1090
    %1222 = vmatpush.msra.mxu0 %v1086
    %1223 = vmatmul.f32.gmra.mxu0 %v1016
    %v1224 = vpop.f32.mrf.mxu0
    %v1225 = vadd.f32 0.0, %v1224
    %1226 = vdwg.mxu0
    %v1227 = vld [vmem:[#allocation17] sm:$0xff]
    %v1228 = vld [vmem:[#allocation17 + $0x8] sm:$0xff]
    %v1229 = vld [vmem:[#allocation17 + $0x10] sm:$0xff]
    %v1230 = vld [vmem:[#allocation17 + $0x18] sm:$0xff]
    %v1231 = vld [vmem:[#allocation17 + $0x20] sm:$0xff]
    %v1232 = vld [vmem:[#allocation17 + $0x28] sm:$0xff]
    %v1233 = vld [vmem:[#allocation17 + $0x30] sm:$0xff]
    %v1234 = vld [vmem:[#allocation17 + $0x38] sm:$0xff]
    %v1235 = vld [vmem:[#allocation17 + $0x40] sm:$0xff]
    %v1236 = vld [vmem:[#allocation17 + $0x48] sm:$0xff]
    %v1237 = vld [vmem:[#allocation17 + $0x50] sm:$0xff]
    %v1238 = vld [vmem:[#allocation17 + $0x58] sm:$0xff]
    %v1239 = vld [vmem:[#allocation17 + $0x60] sm:$0xff]
    %v1240 = vld [vmem:[#allocation17 + $0x68] sm:$0xff]
    %v1241 = vld [vmem:[#allocation17 + $0x70] sm:$0xff]
    %v1242 = vld [vmem:[#allocation17 + $0x78] sm:$0xff]
    %v1243 = vld [vmem:[#allocation17 + $0x80] sm:$0xff]
    %v1244 = vld [vmem:[#allocation17 + $0x88] sm:$0xff]
    %v1245 = vld [vmem:[#allocation17 + $0x90] sm:$0xff]
    %v1246 = vld [vmem:[#allocation17 + $0x98] sm:$0xff]
    %v1247 = vld [vmem:[#allocation17 + $0xa0] sm:$0xff]
    %v1248 = vld [vmem:[#allocation17 + $0xa8] sm:$0xff]
    %v1249 = vld [vmem:[#allocation17 + $0xb0] sm:$0xff]
    %v1250 = vld [vmem:[#allocation17 + $0xb8] sm:$0xff]
    %v1251 = vld [vmem:[#allocation17 + $0xc0] sm:$0xff]
    %v1252 = vld [vmem:[#allocation17 + $0xc8] sm:$0xff]
    %v1253 = vld [vmem:[#allocation17 + $0xd0] sm:$0xff]
    %v1254 = vld [vmem:[#allocation17 + $0xd8] sm:$0xff]
    %v1255 = vld [vmem:[#allocation17 + $0xe0] sm:$0xff]
    %v1256 = vld [vmem:[#allocation17 + $0xe8] sm:$0xff]
    %v1257 = vld [vmem:[#allocation17 + $0xf0] sm:$0xff]
    %v1258 = vld [vmem:[#allocation17 + $0xf8] sm:$0xff]
    %v1259 = vld [vmem:[#allocation17 + $0x100] sm:$0xff]
    %v1260 = vld [vmem:[#allocation17 + $0x108] sm:$0xff]
    %v1261 = vld [vmem:[#allocation17 + $0x110] sm:$0xff]
    %v1262 = vld [vmem:[#allocation17 + $0x118] sm:$0xff]
    %v1263 = vld [vmem:[#allocation17 + $0x120] sm:$0xff]
    %v1264 = vld [vmem:[#allocation17 + $0x128] sm:$0xff]
    %v1265 = vld [vmem:[#allocation17 + $0x130] sm:$0xff]
    %v1266 = vld [vmem:[#allocation17 + $0x138] sm:$0xff]
    %v1267 = vld [vmem:[#allocation17 + $0x140] sm:$0xff]
    %v1268 = vld [vmem:[#allocation17 + $0x148] sm:$0xff]
    %v1269 = vld [vmem:[#allocation17 + $0x150] sm:$0xff]
    %v1270 = vld [vmem:[#allocation17 + $0x158] sm:$0xff]
    %v1271 = vld [vmem:[#allocation17 + $0x160] sm:$0xff]
    %v1272 = vld [vmem:[#allocation17 + $0x168] sm:$0xff]
    %v1273 = vld [vmem:[#allocation17 + $0x170] sm:$0xff]
    %v1274 = vld [vmem:[#allocation17 + $0x178] sm:$0xff]
    %v1275 = vld [vmem:[#allocation17 + $0x180] sm:$0xff]
    %v1276 = vld [vmem:[#allocation17 + $0x188] sm:$0xff]
    %v1277 = vld [vmem:[#allocation17 + $0x190] sm:$0xff]
    %v1278 = vld [vmem:[#allocation17 + $0x198] sm:$0xff]
    %v1279 = vld [vmem:[#allocation17 + $0x1a0] sm:$0xff]
    %v1280 = vld [vmem:[#allocation17 + $0x1a8] sm:$0xff]
    %v1281 = vld [vmem:[#allocation17 + $0x1b0] sm:$0xff]
    %v1282 = vld [vmem:[#allocation17 + $0x1b8] sm:$0xff]
    %v1283 = vld [vmem:[#allocation17 + $0x1c0] sm:$0xff]
    %v1284 = vld [vmem:[#allocation17 + $0x1c8] sm:$0xff]
    %v1285 = vld [vmem:[#allocation17 + $0x1d0] sm:$0xff]
    %v1286 = vld [vmem:[#allocation17 + $0x1d8] sm:$0xff]
    %v1287 = vld [vmem:[#allocation17 + $0x1e0] sm:$0xff]
    %v1288 = vld [vmem:[#allocation17 + $0x1e8] sm:$0xff]
    %v1289 = vld [vmem:[#allocation17 + $0x1f0] sm:$0xff]
    %v1290 = vld [vmem:[#allocation17 + $0x1f8] sm:$0xff]
    %1291 = vmatpush.msra.mxu0 %v1287
    %1292 = vmatpush.msra.mxu0 %v1283
    %1293 = vmatpush.msra.mxu0 %v1279
    %1294 = vmatpush.msra.mxu0 %v1275
    %1295 = vmatpush.msra.mxu0 %v1271
    %1296 = vmatpush.msra.mxu0 %v1267
    %1297 = vmatpush.msra.mxu0 %v1263
    %1298 = vmatpush.msra.mxu0 %v1259
    %1299 = vmatpush.msra.mxu0 %v1255
    %1300 = vmatpush.msra.mxu0 %v1251
    %1301 = vmatpush.msra.mxu0 %v1247
    %1302 = vmatpush.msra.mxu0 %v1243
    %1303 = vmatpush.msra.mxu0 %v1239
    %1304 = vmatpush.msra.mxu0 %v1235
    %1305 = vmatpush.msra.mxu0 %v1231
    %1306 = vmatpush.msra.mxu0 %v1227
    %1307 = vmatmul.f32.gmra.mxu0 %v1079
    %v1308 = vpop.f32.mrf.mxu0
    %v1309 = vadd.f32 0.0, %v1308
    %1310 = vdwg.mxu0
    %1311 = vmatpush.msra.mxu0 %v1288
    %1312 = vmatpush.msra.mxu0 %v1284
    %1313 = vmatpush.msra.mxu0 %v1280
    %1314 = vmatpush.msra.mxu0 %v1276
    %1315 = vmatpush.msra.mxu0 %v1272
    %1316 = vmatpush.msra.mxu0 %v1268
    %1317 = vmatpush.msra.mxu0 %v1264
    %1318 = vmatpush.msra.mxu0 %v1260
    %1319 = vmatpush.msra.mxu0 %v1256
    %1320 = vmatpush.msra.mxu0 %v1252
    %1321 = vmatpush.msra.mxu0 %v1248
    %1322 = vmatpush.msra.mxu0 %v1244
    %1323 = vmatpush.msra.mxu0 %v1240
    %1324 = vmatpush.msra.mxu0 %v1236
    %1325 = vmatpush.msra.mxu0 %v1232
    %1326 = vmatpush.msra.mxu0 %v1228
    %1327 = vmatmul.f32.gmra.mxu0 %v1079
    %v1328 = vpop.f32.mrf.mxu0
    %v1329 = vadd.f32 0.0, %v1328
    %1330 = vdwg.mxu0
    %1331 = vmatpush.msra.mxu0 %v1289
    %1332 = vmatpush.msra.mxu0 %v1285
    %1333 = vmatpush.msra.mxu0 %v1281
    %1334 = vmatpush.msra.mxu0 %v1277
    %1335 = vmatpush.msra.mxu0 %v1273
    %1336 = vmatpush.msra.mxu0 %v1269
    %1337 = vmatpush.msra.mxu0 %v1265
    %1338 = vmatpush.msra.mxu0 %v1261
    %1339 = vmatpush.msra.mxu0 %v1257
    %1340 = vmatpush.msra.mxu0 %v1253
    %1341 = vmatpush.msra.mxu0 %v1249
    %1342 = vmatpush.msra.mxu0 %v1245
    %1343 = vmatpush.msra.mxu0 %v1241
    %1344 = vmatpush.msra.mxu0 %v1237
    %1345 = vmatpush.msra.mxu0 %v1233
    %1346 = vmatpush.msra.mxu0 %v1229
    %1347 = vmatmul.f32.gmra.mxu0 %v1079
    %v1348 = vpop.f32.mrf.mxu0
    %v1349 = vadd.f32 0.0, %v1348
    %1350 = vdwg.mxu0
    %1351 = vmatpush.msra.mxu0 %v1290
    %1352 = vmatpush.msra.mxu0 %v1286
    %1353 = vmatpush.msra.mxu0 %v1282
    %1354 = vmatpush.msra.mxu0 %v1278
    %1355 = vmatpush.msra.mxu0 %v1274
    %1356 = vmatpush.msra.mxu0 %v1270
    %1357 = vmatpush.msra.mxu0 %v1266
    %1358 = vmatpush.msra.mxu0 %v1262
    %1359 = vmatpush.msra.mxu0 %v1258
    %1360 = vmatpush.msra.mxu0 %v1254
    %1361 = vmatpush.msra.mxu0 %v1250
    %1362 = vmatpush.msra.mxu0 %v1246
    %1363 = vmatpush.msra.mxu0 %v1242
    %1364 = vmatpush.msra.mxu0 %v1238
    %1365 = vmatpush.msra.mxu0 %v1234
    %1366 = vmatpush.msra.mxu0 %v1230
    %1367 = vmatmul.f32.gmra.mxu0 %v1079
    %v1368 = vpop.f32.mrf.mxu0
    %v1369 = vadd.f32 0.0, %v1368
    %1370 = vdwg.mxu0
    %s1371 = scalar_lea.vmem [#allocation2], 32
    %v1372 = vld [vmem:[%s1371] sm:$0xff]
    %v1373 = vld [vmem:[%s1371 + $0x8] sm:$0xff]
    %v1374 = vld [vmem:[%s1371 + $0x10] sm:$0xff]
    %v1375 = vld [vmem:[%s1371 + $0x18] sm:$0xff]
    %v1376 = vadd.f32 %v1372, %v1165
    %v1377 = vadd.f32 %v1373, %v1185
    %v1378 = vadd.f32 %v1374, %v1205
    %v1379 = vadd.f32 %v1375, %v1225
    %s1380 = scalar_lea.vmem [#allocation3], 192
    %v1381 = vld [vmem:[%s1380] sm:$0xff]
    %v1382 = vld [vmem:[%s1380 + $0x8] sm:$0xff]
    %v1383 = vld [vmem:[%s1380 + $0x10] sm:$0xff]
    %v1384 = vld [vmem:[%s1380 + $0x18] sm:$0xff]
    %v1385 = vadd.f32 %v1381, %v1309
    %v1386 = vadd.f32 %v1382, %v1329
    %v1387 = vadd.f32 %v1383, %v1349
    %v1388 = vadd.f32 %v1384, %v1369
    %v1389 = vxor.u32 %v1376, 2147483648
    %v1390 = vmul.f32 %v1389, 1.442695
    %v1391 = vpow.pop %v1390
    %v1392 = vadd.f32 %v1391, 1.0
    %v1393 = vrcp.pop %v1392
    %v1394 = vmul.f32 %v1392, %v1393
    %v1395 = vsub.f32 1.0, %v1394
    %v1396 = vmul.f32 %v1393, %v1395
    %v1397 = vadd.f32 %v1393, %v1396
    %vm1398 = vweird.f32 %v1392
    %vm1399 = vweird.f32 %v1393
    %vm1400 = vmor %vm1398, %vm1399
    %v1401 = vsel %vm1400, %v1393, %v1397
    %v1402 = vand.u32 2147483647, %v1392
    %vm1403 = vcmp.eq.f32.partialorder %v1402, 8.507059e+37
    %v1404 = vand.u32 %v1392, 2147483648
    %v1405 = vor.u32 1.1754944e-38, %v1404
    %v1406 = vsel %vm1403, %v1405, %v1401
    %v1407 = vmul.f32 1.0, %v1406
    %v1408 = vxor.u32 %v1377, 2147483648
    %v1409 = vmul.f32 %v1408, 1.442695
    %v1410 = vpow.pop %v1409
    %v1411 = vadd.f32 %v1410, 1.0
    %v1412 = vrcp.pop %v1411
    %v1413 = vmul.f32 %v1411, %v1412
    %v1414 = vsub.f32 1.0, %v1413
    %v1415 = vmul.f32 %v1412, %v1414
    %v1416 = vadd.f32 %v1412, %v1415
    %vm1417 = vweird.f32 %v1411
    %vm1418 = vweird.f32 %v1412
    %vm1419 = vmor %vm1417, %vm1418
    %v1420 = vsel %vm1419, %v1412, %v1416
    %v1421 = vand.u32 2147483647, %v1411
    %vm1422 = vcmp.eq.f32.partialorder %v1421, 8.507059e+37
    %v1423 = vand.u32 %v1411, 2147483648
    %v1424 = vor.u32 1.1754944e-38, %v1423
    %v1425 = vsel %vm1422, %v1424, %v1420
    %v1426 = vmul.f32 1.0, %v1425
    %v1427 = vtanh.pop %v1378
    %v1428 = vxor.u32 %v1379, 2147483648
    %v1429 = vmul.f32 %v1428, 1.442695
    %v1430 = vpow.pop %v1429
    %v1431 = vadd.f32 %v1430, 1.0
    %v1432 = vrcp.pop %v1431
    %v1433 = vmul.f32 %v1431, %v1432
    %v1434 = vsub.f32 1.0, %v1433
    %v1435 = vmul.f32 %v1432, %v1434
    %v1436 = vadd.f32 %v1432, %v1435
    %vm1437 = vweird.f32 %v1431
    %vm1438 = vweird.f32 %v1432
    %vm1439 = vmor %vm1437, %vm1438
    %v1440 = vsel %vm1439, %v1432, %v1436
    %v1441 = vand.u32 2147483647, %v1431
    %vm1442 = vcmp.eq.f32.partialorder %v1441, 8.507059e+37
    %v1443 = vand.u32 %v1431, 2147483648
    %v1444 = vor.u32 1.1754944e-38, %v1443
    %v1445 = vsel %vm1442, %v1444, %v1440
    %v1446 = vmul.f32 1.0, %v1445
    %v1447 = vmul.f32 %v1426, %v1014
    %v1448 = vmul.f32 %v1407, %v1427
    %v1449 = vadd.f32 %v1447, %v1448
    %v1450 = vtanh.pop %v1449
    %v1451 = vmul.f32 %v1446, %v1450
    %v1452 = vxor.u32 %v1385, 2147483648
    %v1453 = vmul.f32 %v1452, 1.442695
    %v1454 = vpow.pop %v1453
    %v1455 = vadd.f32 %v1454, 1.0
    %v1456 = vrcp.pop %v1455
    %v1457 = vmul.f32 %v1455, %v1456
    %v1458 = vsub.f32 1.0, %v1457
    %v1459 = vmul.f32 %v1456, %v1458
    %v1460 = vadd.f32 %v1456, %v1459
    %vm1461 = vweird.f32 %v1455
    %vm1462 = vweird.f32 %v1456
    %vm1463 = vmor %vm1461, %vm1462
    %v1464 = vsel %vm1463, %v1456, %v1460
    %v1465 = vand.u32 2147483647, %v1455
    %vm1466 = vcmp.eq.f32.partialorder %v1465, 8.507059e+37
    %v1467 = vand.u32 %v1455, 2147483648
    %v1468 = vor.u32 1.1754944e-38, %v1467
    %v1469 = vsel %vm1466, %v1468, %v1464
    %v1470 = vmul.f32 1.0, %v1469
    %v1471 = vxor.u32 %v1386, 2147483648
    %v1472 = vmul.f32 %v1471, 1.442695
    %v1473 = vpow.pop %v1472
    %v1474 = vadd.f32 %v1473, 1.0
    %v1475 = vrcp.pop %v1474
    %v1476 = vmul.f32 %v1474, %v1475
    %v1477 = vsub.f32 1.0, %v1476
    %v1478 = vmul.f32 %v1475, %v1477
    %v1479 = vadd.f32 %v1475, %v1478
    %vm1480 = vweird.f32 %v1474
    %vm1481 = vweird.f32 %v1475
    %vm1482 = vmor %vm1480, %vm1481
    %v1483 = vsel %vm1482, %v1475, %v1479
    %v1484 = vand.u32 2147483647, %v1474
    %vm1485 = vcmp.eq.f32.partialorder %v1484, 8.507059e+37
    %v1486 = vand.u32 %v1474, 2147483648
    %v1487 = vor.u32 1.1754944e-38, %v1486
    %v1488 = vsel %vm1485, %v1487, %v1483
    %v1489 = vmul.f32 1.0, %v1488
    %v1490 = vtanh.pop %v1387
    %v1491 = vxor.u32 %v1388, 2147483648
    %v1492 = vmul.f32 %v1491, 1.442695
    %v1493 = vpow.pop %v1492
    %v1494 = vadd.f32 %v1493, 1.0
    %v1495 = vrcp.pop %v1494
    %v1496 = vmul.f32 %v1494, %v1495
    %v1497 = vsub.f32 1.0, %v1496
    %v1498 = vmul.f32 %v1495, %v1497
    %v1499 = vadd.f32 %v1495, %v1498
    %vm1500 = vweird.f32 %v1494
    %vm1501 = vweird.f32 %v1495
    %vm1502 = vmor %vm1500, %vm1501
    %v1503 = vsel %vm1502, %v1495, %v1499
    %v1504 = vand.u32 2147483647, %v1494
    %vm1505 = vcmp.eq.f32.partialorder %v1504, 8.507059e+37
    %v1506 = vand.u32 %v1494, 2147483648
    %v1507 = vor.u32 1.1754944e-38, %v1506
    %v1508 = vsel %vm1505, %v1507, %v1503
    %v1509 = vmul.f32 1.0, %v1508
    %v1510 = vmul.f32 %v1489, %v1077
    %v1511 = vmul.f32 %v1470, %v1490
    %v1512 = vadd.f32 %v1510, %v1511
    %v1513 = vtanh.pop %v1512
    %v1514 = vmul.f32 %v1509, %v1513
    %s1515 = scalar_lea.vmem [#allocation4], 8
    %1516 = vst [vmem:[%s1515] sm:$0xff] %v1451
    %s1517 = scalar_lea.vmem [#allocation5], 48
    %1518 = vst [vmem:[%s1517] sm:$0xff] %v1514
    %v1519 = vld [vmem:[#allocation15] sm:$0xff]
    %v1520 = vld [vmem:[#allocation15 + $0x8] sm:$0xff]
    %v1521 = vld [vmem:[#allocation15 + $0x10] sm:$0xff]
    %v1522 = vld [vmem:[#allocation15 + $0x18] sm:$0xff]
    %v1523 = vld [vmem:[#allocation15 + $0x20] sm:$0xff]
    %v1524 = vld [vmem:[#allocation15 + $0x28] sm:$0xff]
    %v1525 = vld [vmem:[#allocation15 + $0x30] sm:$0xff]
    %v1526 = vld [vmem:[#allocation15 + $0x38] sm:$0xff]
    %v1527 = vld [vmem:[#allocation15 + $0x40] sm:$0xff]
    %v1528 = vld [vmem:[#allocation15 + $0x48] sm:$0xff]
    %v1529 = vld [vmem:[#allocation15 + $0x50] sm:$0xff]
    %v1530 = vld [vmem:[#allocation15 + $0x58] sm:$0xff]
    %v1531 = vld [vmem:[#allocation15 + $0x60] sm:$0xff]
    %v1532 = vld [vmem:[#allocation15 + $0x68] sm:$0xff]
    %v1533 = vld [vmem:[#allocation15 + $0x70] sm:$0xff]
    %v1534 = vld [vmem:[#allocation15 + $0x78] sm:$0xff]
    %v1535 = vld [vmem:[#allocation15 + $0x80] sm:$0xff]
    %v1536 = vld [vmem:[#allocation15 + $0x88] sm:$0xff]
    %v1537 = vld [vmem:[#allocation15 + $0x90] sm:$0xff]
    %v1538 = vld [vmem:[#allocation15 + $0x98] sm:$0xff]
    %v1539 = vld [vmem:[#allocation15 + $0xa0] sm:$0xff]
    %v1540 = vld [vmem:[#allocation15 + $0xa8] sm:$0xff]
    %v1541 = vld [vmem:[#allocation15 + $0xb0] sm:$0xff]
    %v1542 = vld [vmem:[#allocation15 + $0xb8] sm:$0xff]
    %v1543 = vld [vmem:[#allocation15 + $0xc0] sm:$0xff]
    %v1544 = vld [vmem:[#allocation15 + $0xc8] sm:$0xff]
    %v1545 = vld [vmem:[#allocation15 + $0xd0] sm:$0xff]
    %v1546 = vld [vmem:[#allocation15 + $0xd8] sm:$0xff]
    %v1547 = vld [vmem:[#allocation15 + $0xe0] sm:$0xff]
    %v1548 = vld [vmem:[#allocation15 + $0xe8] sm:$0xff]
    %v1549 = vld [vmem:[#allocation15 + $0xf0] sm:$0xff]
    %v1550 = vld [vmem:[#allocation15 + $0xf8] sm:$0xff]
    %v1551 = vld [vmem:[#allocation15 + $0x100] sm:$0xff]
    %v1552 = vld [vmem:[#allocation15 + $0x108] sm:$0xff]
    %v1553 = vld [vmem:[#allocation15 + $0x110] sm:$0xff]
    %v1554 = vld [vmem:[#allocation15 + $0x118] sm:$0xff]
    %v1555 = vld [vmem:[#allocation15 + $0x120] sm:$0xff]
    %v1556 = vld [vmem:[#allocation15 + $0x128] sm:$0xff]
    %v1557 = vld [vmem:[#allocation15 + $0x130] sm:$0xff]
    %v1558 = vld [vmem:[#allocation15 + $0x138] sm:$0xff]
    %v1559 = vld [vmem:[#allocation15 + $0x140] sm:$0xff]
    %v1560 = vld [vmem:[#allocation15 + $0x148] sm:$0xff]
    %v1561 = vld [vmem:[#allocation15 + $0x150] sm:$0xff]
    %v1562 = vld [vmem:[#allocation15 + $0x158] sm:$0xff]
    %v1563 = vld [vmem:[#allocation15 + $0x160] sm:$0xff]
    %v1564 = vld [vmem:[#allocation15 + $0x168] sm:$0xff]
    %v1565 = vld [vmem:[#allocation15 + $0x170] sm:$0xff]
    %v1566 = vld [vmem:[#allocation15 + $0x178] sm:$0xff]
    %v1567 = vld [vmem:[#allocation15 + $0x180] sm:$0xff]
    %v1568 = vld [vmem:[#allocation15 + $0x188] sm:$0xff]
    %v1569 = vld [vmem:[#allocation15 + $0x190] sm:$0xff]
    %v1570 = vld [vmem:[#allocation15 + $0x198] sm:$0xff]
    %v1571 = vld [vmem:[#allocation15 + $0x1a0] sm:$0xff]
    %v1572 = vld [vmem:[#allocation15 + $0x1a8] sm:$0xff]
    %v1573 = vld [vmem:[#allocation15 + $0x1b0] sm:$0xff]
    %v1574 = vld [vmem:[#allocation15 + $0x1b8] sm:$0xff]
    %v1575 = vld [vmem:[#allocation15 + $0x1c0] sm:$0xff]
    %v1576 = vld [vmem:[#allocation15 + $0x1c8] sm:$0xff]
    %v1577 = vld [vmem:[#allocation15 + $0x1d0] sm:$0xff]
    %v1578 = vld [vmem:[#allocation15 + $0x1d8] sm:$0xff]
    %v1579 = vld [vmem:[#allocation15 + $0x1e0] sm:$0xff]
    %v1580 = vld [vmem:[#allocation15 + $0x1e8] sm:$0xff]
    %v1581 = vld [vmem:[#allocation15 + $0x1f0] sm:$0xff]
    %v1582 = vld [vmem:[#allocation15 + $0x1f8] sm:$0xff]
    %1583 = vmatpush.msra.mxu0 %v1579
    %1584 = vmatpush.msra.mxu0 %v1575
    %1585 = vmatpush.msra.mxu0 %v1571
    %1586 = vmatpush.msra.mxu0 %v1567
    %1587 = vmatpush.msra.mxu0 %v1563
    %1588 = vmatpush.msra.mxu0 %v1559
    %1589 = vmatpush.msra.mxu0 %v1555
    %1590 = vmatpush.msra.mxu0 %v1551
    %1591 = vmatpush.msra.mxu0 %v1547
    %1592 = vmatpush.msra.mxu0 %v1543
    %1593 = vmatpush.msra.mxu0 %v1539
    %1594 = vmatpush.msra.mxu0 %v1535
    %1595 = vmatpush.msra.mxu0 %v1531
    %1596 = vmatpush.msra.mxu0 %v1527
    %1597 = vmatpush.msra.mxu0 %v1523
    %1598 = vmatpush.msra.mxu0 %v1519
    %1599 = vmatmul.f32.gmra.mxu0 %v1451
    %v1600 = vpop.f32.mrf.mxu0
    %v1601 = vadd.f32 0.0, %v1600
    %1602 = vdwg.mxu0
    %1603 = vmatpush.msra.mxu0 %v1580
    %1604 = vmatpush.msra.mxu0 %v1576
    %1605 = vmatpush.msra.mxu0 %v1572
    %1606 = vmatpush.msra.mxu0 %v1568
    %1607 = vmatpush.msra.mxu0 %v1564
    %1608 = vmatpush.msra.mxu0 %v1560
    %1609 = vmatpush.msra.mxu0 %v1556
    %1610 = vmatpush.msra.mxu0 %v1552
    %1611 = vmatpush.msra.mxu0 %v1548
    %1612 = vmatpush.msra.mxu0 %v1544
    %1613 = vmatpush.msra.mxu0 %v1540
    %1614 = vmatpush.msra.mxu0 %v1536
    %1615 = vmatpush.msra.mxu0 %v1532
    %1616 = vmatpush.msra.mxu0 %v1528
    %1617 = vmatpush.msra.mxu0 %v1524
    %1618 = vmatpush.msra.mxu0 %v1520
    %1619 = vmatmul.f32.gmra.mxu0 %v1451
    %v1620 = vpop.f32.mrf.mxu0
    %v1621 = vadd.f32 0.0, %v1620
    %1622 = vdwg.mxu0
    %1623 = vmatpush.msra.mxu0 %v1581
    %1624 = vmatpush.msra.mxu0 %v1577
    %1625 = vmatpush.msra.mxu0 %v1573
    %1626 = vmatpush.msra.mxu0 %v1569
    %1627 = vmatpush.msra.mxu0 %v1565
    %1628 = vmatpush.msra.mxu0 %v1561
    %1629 = vmatpush.msra.mxu0 %v1557
    %1630 = vmatpush.msra.mxu0 %v1553
    %1631 = vmatpush.msra.mxu0 %v1549
    %1632 = vmatpush.msra.mxu0 %v1545
    %1633 = vmatpush.msra.mxu0 %v1541
    %1634 = vmatpush.msra.mxu0 %v1537
    %1635 = vmatpush.msra.mxu0 %v1533
    %1636 = vmatpush.msra.mxu0 %v1529
    %1637 = vmatpush.msra.mxu0 %v1525
    %1638 = vmatpush.msra.mxu0 %v1521
    %1639 = vmatmul.f32.gmra.mxu0 %v1451
    %v1640 = vpop.f32.mrf.mxu0
    %v1641 = vadd.f32 0.0, %v1640
    %1642 = vdwg.mxu0
    %1643 = vmatpush.msra.mxu0 %v1582
    %1644 = vmatpush.msra.mxu0 %v1578
    %1645 = vmatpush.msra.mxu0 %v1574
    %1646 = vmatpush.msra.mxu0 %v1570
    %1647 = vmatpush.msra.mxu0 %v1566
    %1648 = vmatpush.msra.mxu0 %v1562
    %1649 = vmatpush.msra.mxu0 %v1558
    %1650 = vmatpush.msra.mxu0 %v1554
    %1651 = vmatpush.msra.mxu0 %v1550
    %1652 = vmatpush.msra.mxu0 %v1546
    %1653 = vmatpush.msra.mxu0 %v1542
    %1654 = vmatpush.msra.mxu0 %v1538
    %1655 = vmatpush.msra.mxu0 %v1534
    %1656 = vmatpush.msra.mxu0 %v1530
    %1657 = vmatpush.msra.mxu0 %v1526
    %1658 = vmatpush.msra.mxu0 %v1522
    %1659 = vmatmul.f32.gmra.mxu0 %v1451
    %v1660 = vpop.f32.mrf.mxu0
    %v1661 = vadd.f32 0.0, %v1660
    %1662 = vdwg.mxu0
    %v1663 = vld [vmem:[#allocation17] sm:$0xff]
    %v1664 = vld [vmem:[#allocation17 + $0x8] sm:$0xff]
    %v1665 = vld [vmem:[#allocation17 + $0x10] sm:$0xff]
    %v1666 = vld [vmem:[#allocation17 + $0x18] sm:$0xff]
    %v1667 = vld [vmem:[#allocation17 + $0x20] sm:$0xff]
    %v1668 = vld [vmem:[#allocation17 + $0x28] sm:$0xff]
    %v1669 = vld [vmem:[#allocation17 + $0x30] sm:$0xff]
    %v1670 = vld [vmem:[#allocation17 + $0x38] sm:$0xff]
    %v1671 = vld [vmem:[#allocation17 + $0x40] sm:$0xff]
    %v1672 = vld [vmem:[#allocation17 + $0x48] sm:$0xff]
    %v1673 = vld [vmem:[#allocation17 + $0x50] sm:$0xff]
    %v1674 = vld [vmem:[#allocation17 + $0x58] sm:$0xff]
    %v1675 = vld [vmem:[#allocation17 + $0x60] sm:$0xff]
    %v1676 = vld [vmem:[#allocation17 + $0x68] sm:$0xff]
    %v1677 = vld [vmem:[#allocation17 + $0x70] sm:$0xff]
    %v1678 = vld [vmem:[#allocation17 + $0x78] sm:$0xff]
    %v1679 = vld [vmem:[#allocation17 + $0x80] sm:$0xff]
    %v1680 = vld [vmem:[#allocation17 + $0x88] sm:$0xff]
    %v1681 = vld [vmem:[#allocation17 + $0x90] sm:$0xff]
    %v1682 = vld [vmem:[#allocation17 + $0x98] sm:$0xff]
    %v1683 = vld [vmem:[#allocation17 + $0xa0] sm:$0xff]
    %v1684 = vld [vmem:[#allocation17 + $0xa8] sm:$0xff]
    %v1685 = vld [vmem:[#allocation17 + $0xb0] sm:$0xff]
    %v1686 = vld [vmem:[#allocation17 + $0xb8] sm:$0xff]
    %v1687 = vld [vmem:[#allocation17 + $0xc0] sm:$0xff]
    %v1688 = vld [vmem:[#allocation17 + $0xc8] sm:$0xff]
    %v1689 = vld [vmem:[#allocation17 + $0xd0] sm:$0xff]
    %v1690 = vld [vmem:[#allocation17 + $0xd8] sm:$0xff]
    %v1691 = vld [vmem:[#allocation17 + $0xe0] sm:$0xff]
    %v1692 = vld [vmem:[#allocation17 + $0xe8] sm:$0xff]
    %v1693 = vld [vmem:[#allocation17 + $0xf0] sm:$0xff]
    %v1694 = vld [vmem:[#allocation17 + $0xf8] sm:$0xff]
    %v1695 = vld [vmem:[#allocation17 + $0x100] sm:$0xff]
    %v1696 = vld [vmem:[#allocation17 + $0x108] sm:$0xff]
    %v1697 = vld [vmem:[#allocation17 + $0x110] sm:$0xff]
    %v1698 = vld [vmem:[#allocation17 + $0x118] sm:$0xff]
    %v1699 = vld [vmem:[#allocation17 + $0x120] sm:$0xff]
    %v1700 = vld [vmem:[#allocation17 + $0x128] sm:$0xff]
    %v1701 = vld [vmem:[#allocation17 + $0x130] sm:$0xff]
    %v1702 = vld [vmem:[#allocation17 + $0x138] sm:$0xff]
    %v1703 = vld [vmem:[#allocation17 + $0x140] sm:$0xff]
    %v1704 = vld [vmem:[#allocation17 + $0x148] sm:$0xff]
    %v1705 = vld [vmem:[#allocation17 + $0x150] sm:$0xff]
    %v1706 = vld [vmem:[#allocation17 + $0x158] sm:$0xff]
    %v1707 = vld [vmem:[#allocation17 + $0x160] sm:$0xff]
    %v1708 = vld [vmem:[#allocation17 + $0x168] sm:$0xff]
    %v1709 = vld [vmem:[#allocation17 + $0x170] sm:$0xff]
    %v1710 = vld [vmem:[#allocation17 + $0x178] sm:$0xff]
    %v1711 = vld [vmem:[#allocation17 + $0x180] sm:$0xff]
    %v1712 = vld [vmem:[#allocation17 + $0x188] sm:$0xff]
    %v1713 = vld [vmem:[#allocation17 + $0x190] sm:$0xff]
    %v1714 = vld [vmem:[#allocation17 + $0x198] sm:$0xff]
    %v1715 = vld [vmem:[#allocation17 + $0x1a0] sm:$0xff]
    %v1716 = vld [vmem:[#allocation17 + $0x1a8] sm:$0xff]
    %v1717 = vld [vmem:[#allocation17 + $0x1b0] sm:$0xff]
    %v1718 = vld [vmem:[#allocation17 + $0x1b8] sm:$0xff]
    %v1719 = vld [vmem:[#allocation17 + $0x1c0] sm:$0xff]
    %v1720 = vld [vmem:[#allocation17 + $0x1c8] sm:$0xff]
    %v1721 = vld [vmem:[#allocation17 + $0x1d0] sm:$0xff]
    %v1722 = vld [vmem:[#allocation17 + $0x1d8] sm:$0xff]
    %v1723 = vld [vmem:[#allocation17 + $0x1e0] sm:$0xff]
    %v1724 = vld [vmem:[#allocation17 + $0x1e8] sm:$0xff]
    %v1725 = vld [vmem:[#allocation17 + $0x1f0] sm:$0xff]
    %v1726 = vld [vmem:[#allocation17 + $0x1f8] sm:$0xff]
    %1727 = vmatpush.msra.mxu0 %v1723
    %1728 = vmatpush.msra.mxu0 %v1719
    %1729 = vmatpush.msra.mxu0 %v1715
    %1730 = vmatpush.msra.mxu0 %v1711
    %1731 = vmatpush.msra.mxu0 %v1707
    %1732 = vmatpush.msra.mxu0 %v1703
    %1733 = vmatpush.msra.mxu0 %v1699
    %1734 = vmatpush.msra.mxu0 %v1695
    %1735 = vmatpush.msra.mxu0 %v1691
    %1736 = vmatpush.msra.mxu0 %v1687
    %1737 = vmatpush.msra.mxu0 %v1683
    %1738 = vmatpush.msra.mxu0 %v1679
    %1739 = vmatpush.msra.mxu0 %v1675
    %1740 = vmatpush.msra.mxu0 %v1671
    %1741 = vmatpush.msra.mxu0 %v1667
    %1742 = vmatpush.msra.mxu0 %v1663
    %1743 = vmatmul.f32.gmra.mxu0 %v1514
    %v1744 = vpop.f32.mrf.mxu0
    %v1745 = vadd.f32 0.0, %v1744
    %1746 = vdwg.mxu0
    %1747 = vmatpush.msra.mxu0 %v1724
    %1748 = vmatpush.msra.mxu0 %v1720
    %1749 = vmatpush.msra.mxu0 %v1716
    %1750 = vmatpush.msra.mxu0 %v1712
    %1751 = vmatpush.msra.mxu0 %v1708
    %1752 = vmatpush.msra.mxu0 %v1704
    %1753 = vmatpush.msra.mxu0 %v1700
    %1754 = vmatpush.msra.mxu0 %v1696
    %1755 = vmatpush.msra.mxu0 %v1692
    %1756 = vmatpush.msra.mxu0 %v1688
    %1757 = vmatpush.msra.mxu0 %v1684
    %1758 = vmatpush.msra.mxu0 %v1680
    %1759 = vmatpush.msra.mxu0 %v1676
    %1760 = vmatpush.msra.mxu0 %v1672
    %1761 = vmatpush.msra.mxu0 %v1668
    %1762 = vmatpush.msra.mxu0 %v1664
    %1763 = vmatmul.f32.gmra.mxu0 %v1514
    %v1764 = vpop.f32.mrf.mxu0
    %v1765 = vadd.f32 0.0, %v1764
    %1766 = vdwg.mxu0
    %1767 = vmatpush.msra.mxu0 %v1725
    %1768 = vmatpush.msra.mxu0 %v1721
    %1769 = vmatpush.msra.mxu0 %v1717
    %1770 = vmatpush.msra.mxu0 %v1713
    %1771 = vmatpush.msra.mxu0 %v1709
    %1772 = vmatpush.msra.mxu0 %v1705
    %1773 = vmatpush.msra.mxu0 %v1701
    %1774 = vmatpush.msra.mxu0 %v1697
    %1775 = vmatpush.msra.mxu0 %v1693
    %1776 = vmatpush.msra.mxu0 %v1689
    %1777 = vmatpush.msra.mxu0 %v1685
    %1778 = vmatpush.msra.mxu0 %v1681
    %1779 = vmatpush.msra.mxu0 %v1677
    %1780 = vmatpush.msra.mxu0 %v1673
    %1781 = vmatpush.msra.mxu0 %v1669
    %1782 = vmatpush.msra.mxu0 %v1665
    %1783 = vmatmul.f32.gmra.mxu0 %v1514
    %v1784 = vpop.f32.mrf.mxu0
    %v1785 = vadd.f32 0.0, %v1784
    %1786 = vdwg.mxu0
    %1787 = vmatpush.msra.mxu0 %v1726
    %1788 = vmatpush.msra.mxu0 %v1722
    %1789 = vmatpush.msra.mxu0 %v1718
    %1790 = vmatpush.msra.mxu0 %v1714
    %1791 = vmatpush.msra.mxu0 %v1710
    %1792 = vmatpush.msra.mxu0 %v1706
    %1793 = vmatpush.msra.mxu0 %v1702
    %1794 = vmatpush.msra.mxu0 %v1698
    %1795 = vmatpush.msra.mxu0 %v1694
    %1796 = vmatpush.msra.mxu0 %v1690
    %1797 = vmatpush.msra.mxu0 %v1686
    %1798 = vmatpush.msra.mxu0 %v1682
    %1799 = vmatpush.msra.mxu0 %v1678
    %1800 = vmatpush.msra.mxu0 %v1674
    %1801 = vmatpush.msra.mxu0 %v1670
    %1802 = vmatpush.msra.mxu0 %v1666
    %1803 = vmatmul.f32.gmra.mxu0 %v1514
    %v1804 = vpop.f32.mrf.mxu0
    %v1805 = vadd.f32 0.0, %v1804
    %1806 = vdwg.mxu0
    %s1807 = scalar_lea.vmem [#allocation2], 64
    %v1808 = vld [vmem:[%s1807] sm:$0xff]
    %v1809 = vld [vmem:[%s1807 + $0x8] sm:$0xff]
    %v1810 = vld [vmem:[%s1807 + $0x10] sm:$0xff]
    %v1811 = vld [vmem:[%s1807 + $0x18] sm:$0xff]
    %v1812 = vadd.f32 %v1808, %v1601
    %v1813 = vadd.f32 %v1809, %v1621
    %v1814 = vadd.f32 %v1810, %v1641
    %v1815 = vadd.f32 %v1811, %v1661
    %s1816 = scalar_lea.vmem [#allocation3], 160
    %v1817 = vld [vmem:[%s1816] sm:$0xff]
    %v1818 = vld [vmem:[%s1816 + $0x8] sm:$0xff]
    %v1819 = vld [vmem:[%s1816 + $0x10] sm:$0xff]
    %v1820 = vld [vmem:[%s1816 + $0x18] sm:$0xff]
    %v1821 = vadd.f32 %v1817, %v1745
    %v1822 = vadd.f32 %v1818, %v1765
    %v1823 = vadd.f32 %v1819, %v1785
    %v1824 = vadd.f32 %v1820, %v1805
    %v1825 = vxor.u32 %v1812, 2147483648
    %v1826 = vmul.f32 %v1825, 1.442695
    %v1827 = vpow.pop %v1826
    %v1828 = vadd.f32 %v1827, 1.0
    %v1829 = vrcp.pop %v1828
    %v1830 = vmul.f32 %v1828, %v1829
    %v1831 = vsub.f32 1.0, %v1830
    %v1832 = vmul.f32 %v1829, %v1831
    %v1833 = vadd.f32 %v1829, %v1832
    %vm1834 = vweird.f32 %v1828
    %vm1835 = vweird.f32 %v1829
    %vm1836 = vmor %vm1834, %vm1835
    %v1837 = vsel %vm1836, %v1829, %v1833
    %v1838 = vand.u32 2147483647, %v1828
    %vm1839 = vcmp.eq.f32.partialorder %v1838, 8.507059e+37
    %v1840 = vand.u32 %v1828, 2147483648
    %v1841 = vor.u32 1.1754944e-38, %v1840
    %v1842 = vsel %vm1839, %v1841, %v1837
    %v1843 = vmul.f32 1.0, %v1842
    %v1844 = vxor.u32 %v1813, 2147483648
    %v1845 = vmul.f32 %v1844, 1.442695
    %v1846 = vpow.pop %v1845
    %v1847 = vadd.f32 %v1846, 1.0
    %v1848 = vrcp.pop %v1847
    %v1849 = vmul.f32 %v1847, %v1848
    %v1850 = vsub.f32 1.0, %v1849
    %v1851 = vmul.f32 %v1848, %v1850
    %v1852 = vadd.f32 %v1848, %v1851
    %vm1853 = vweird.f32 %v1847
    %vm1854 = vweird.f32 %v1848
    %vm1855 = vmor %vm1853, %vm1854
    %v1856 = vsel %vm1855, %v1848, %v1852
    %v1857 = vand.u32 2147483647, %v1847
    %vm1858 = vcmp.eq.f32.partialorder %v1857, 8.507059e+37
    %v1859 = vand.u32 %v1847, 2147483648
    %v1860 = vor.u32 1.1754944e-38, %v1859
    %v1861 = vsel %vm1858, %v1860, %v1856
    %v1862 = vmul.f32 1.0, %v1861
    %v1863 = vtanh.pop %v1814
    %v1864 = vxor.u32 %v1815, 2147483648
    %v1865 = vmul.f32 %v1864, 1.442695
    %v1866 = vpow.pop %v1865
    %v1867 = vadd.f32 %v1866, 1.0
    %v1868 = vrcp.pop %v1867
    %v1869 = vmul.f32 %v1867, %v1868
    %v1870 = vsub.f32 1.0, %v1869
    %v1871 = vmul.f32 %v1868, %v1870
    %v1872 = vadd.f32 %v1868, %v1871
    %vm1873 = vweird.f32 %v1867
    %vm1874 = vweird.f32 %v1868
    %vm1875 = vmor %vm1873, %vm1874
    %v1876 = vsel %vm1875, %v1868, %v1872
    %v1877 = vand.u32 2147483647, %v1867
    %vm1878 = vcmp.eq.f32.partialorder %v1877, 8.507059e+37
    %v1879 = vand.u32 %v1867, 2147483648
    %v1880 = vor.u32 1.1754944e-38, %v1879
    %v1881 = vsel %vm1878, %v1880, %v1876
    %v1882 = vmul.f32 1.0, %v1881
    %v1883 = vmul.f32 %v1862, %v1449
    %v1884 = vmul.f32 %v1843, %v1863
    %v1885 = vadd.f32 %v1883, %v1884
    %v1886 = vtanh.pop %v1885
    %v1887 = vmul.f32 %v1882, %v1886
    %v1888 = vxor.u32 %v1821, 2147483648
    %v1889 = vmul.f32 %v1888, 1.442695
    %v1890 = vpow.pop %v1889
    %v1891 = vadd.f32 %v1890, 1.0
    %v1892 = vrcp.pop %v1891
    %v1893 = vmul.f32 %v1891, %v1892
    %v1894 = vsub.f32 1.0, %v1893
    %v1895 = vmul.f32 %v1892, %v1894
    %v1896 = vadd.f32 %v1892, %v1895
    %vm1897 = vweird.f32 %v1891
    %vm1898 = vweird.f32 %v1892
    %vm1899 = vmor %vm1897, %vm1898
    %v1900 = vsel %vm1899, %v1892, %v1896
    %v1901 = vand.u32 2147483647, %v1891
    %vm1902 = vcmp.eq.f32.partialorder %v1901, 8.507059e+37
    %v1903 = vand.u32 %v1891, 2147483648
    %v1904 = vor.u32 1.1754944e-38, %v1903
    %v1905 = vsel %vm1902, %v1904, %v1900
    %v1906 = vmul.f32 1.0, %v1905
    %v1907 = vxor.u32 %v1822, 2147483648
    %v1908 = vmul.f32 %v1907, 1.442695
    %v1909 = vpow.pop %v1908
    %v1910 = vadd.f32 %v1909, 1.0
    %v1911 = vrcp.pop %v1910
    %v1912 = vmul.f32 %v1910, %v1911
    %v1913 = vsub.f32 1.0, %v1912
    %v1914 = vmul.f32 %v1911, %v1913
    %v1915 = vadd.f32 %v1911, %v1914
    %vm1916 = vweird.f32 %v1910
    %vm1917 = vweird.f32 %v1911
    %vm1918 = vmor %vm1916, %vm1917
    %v1919 = vsel %vm1918, %v1911, %v1915
    %v1920 = vand.u32 2147483647, %v1910
    %vm1921 = vcmp.eq.f32.partialorder %v1920, 8.507059e+37
    %v1922 = vand.u32 %v1910, 2147483648
    %v1923 = vor.u32 1.1754944e-38, %v1922
    %v1924 = vsel %vm1921, %v1923, %v1919
    %v1925 = vmul.f32 1.0, %v1924
    %v1926 = vtanh.pop %v1823
    %v1927 = vxor.u32 %v1824, 2147483648
    %v1928 = vmul.f32 %v1927, 1.442695
    %v1929 = vpow.pop %v1928
    %v1930 = vadd.f32 %v1929, 1.0
    %v1931 = vrcp.pop %v1930
    %v1932 = vmul.f32 %v1930, %v1931
    %v1933 = vsub.f32 1.0, %v1932
    %v1934 = vmul.f32 %v1931, %v1933
    %v1935 = vadd.f32 %v1931, %v1934
    %vm1936 = vweird.f32 %v1930
    %vm1937 = vweird.f32 %v1931
    %vm1938 = vmor %vm1936, %vm1937
    %v1939 = vsel %vm1938, %v1931, %v1935
    %v1940 = vand.u32 2147483647, %v1930
    %vm1941 = vcmp.eq.f32.partialorder %v1940, 8.507059e+37
    %v1942 = vand.u32 %v1930, 2147483648
    %v1943 = vor.u32 1.1754944e-38, %v1942
    %v1944 = vsel %vm1941, %v1943, %v1939
    %v1945 = vmul.f32 1.0, %v1944
    %v1946 = vmul.f32 %v1925, %v1512
    %v1947 = vmul.f32 %v1906, %v1926
    %v1948 = vadd.f32 %v1946, %v1947
    %v1949 = vtanh.pop %v1948
    %v1950 = vmul.f32 %v1945, %v1949
    %s1951 = scalar_lea.vmem [#allocation4], 16
    %1952 = vst [vmem:[%s1951] sm:$0xff] %v1887
    %s1953 = scalar_lea.vmem [#allocation5], 40
    %1954 = vst [vmem:[%s1953] sm:$0xff] %v1950
    %v1955 = vld [vmem:[#allocation15] sm:$0xff]
    %v1956 = vld [vmem:[#allocation15 + $0x8] sm:$0xff]
    %v1957 = vld [vmem:[#allocation15 + $0x10] sm:$0xff]
    %v1958 = vld [vmem:[#allocation15 + $0x18] sm:$0xff]
    %v1959 = vld [vmem:[#allocation15 + $0x20] sm:$0xff]
    %v1960 = vld [vmem:[#allocation15 + $0x28] sm:$0xff]
    %v1961 = vld [vmem:[#allocation15 + $0x30] sm:$0xff]
    %v1962 = vld [vmem:[#allocation15 + $0x38] sm:$0xff]
    %v1963 = vld [vmem:[#allocation15 + $0x40] sm:$0xff]
    %v1964 = vld [vmem:[#allocation15 + $0x48] sm:$0xff]
    %v1965 = vld [vmem:[#allocation15 + $0x50] sm:$0xff]
    %v1966 = vld [vmem:[#allocation15 + $0x58] sm:$0xff]
    %v1967 = vld [vmem:[#allocation15 + $0x60] sm:$0xff]
    %v1968 = vld [vmem:[#allocation15 + $0x68] sm:$0xff]
    %v1969 = vld [vmem:[#allocation15 + $0x70] sm:$0xff]
    %v1970 = vld [vmem:[#allocation15 + $0x78] sm:$0xff]
    %v1971 = vld [vmem:[#allocation15 + $0x80] sm:$0xff]
    %v1972 = vld [vmem:[#allocation15 + $0x88] sm:$0xff]
    %v1973 = vld [vmem:[#allocation15 + $0x90] sm:$0xff]
    %v1974 = vld [vmem:[#allocation15 + $0x98] sm:$0xff]
    %v1975 = vld [vmem:[#allocation15 + $0xa0] sm:$0xff]
    %v1976 = vld [vmem:[#allocation15 + $0xa8] sm:$0xff]
    %v1977 = vld [vmem:[#allocation15 + $0xb0] sm:$0xff]
    %v1978 = vld [vmem:[#allocation15 + $0xb8] sm:$0xff]
    %v1979 = vld [vmem:[#allocation15 + $0xc0] sm:$0xff]
    %v1980 = vld [vmem:[#allocation15 + $0xc8] sm:$0xff]
    %v1981 = vld [vmem:[#allocation15 + $0xd0] sm:$0xff]
    %v1982 = vld [vmem:[#allocation15 + $0xd8] sm:$0xff]
    %v1983 = vld [vmem:[#allocation15 + $0xe0] sm:$0xff]
    %v1984 = vld [vmem:[#allocation15 + $0xe8] sm:$0xff]
    %v1985 = vld [vmem:[#allocation15 + $0xf0] sm:$0xff]
    %v1986 = vld [vmem:[#allocation15 + $0xf8] sm:$0xff]
    %v1987 = vld [vmem:[#allocation15 + $0x100] sm:$0xff]
    %v1988 = vld [vmem:[#allocation15 + $0x108] sm:$0xff]
    %v1989 = vld [vmem:[#allocation15 + $0x110] sm:$0xff]
    %v1990 = vld [vmem:[#allocation15 + $0x118] sm:$0xff]
    %v1991 = vld [vmem:[#allocation15 + $0x120] sm:$0xff]
    %v1992 = vld [vmem:[#allocation15 + $0x128] sm:$0xff]
    %v1993 = vld [vmem:[#allocation15 + $0x130] sm:$0xff]
    %v1994 = vld [vmem:[#allocation15 + $0x138] sm:$0xff]
    %v1995 = vld [vmem:[#allocation15 + $0x140] sm:$0xff]
    %v1996 = vld [vmem:[#allocation15 + $0x148] sm:$0xff]
    %v1997 = vld [vmem:[#allocation15 + $0x150] sm:$0xff]
    %v1998 = vld [vmem:[#allocation15 + $0x158] sm:$0xff]
    %v1999 = vld [vmem:[#allocation15 + $0x160] sm:$0xff]
    %v2000 = vld [vmem:[#allocation15 + $0x168] sm:$0xff]
    %v2001 = vld [vmem:[#allocation15 + $0x170] sm:$0xff]
    %v2002 = vld [vmem:[#allocation15 + $0x178] sm:$0xff]
    %v2003 = vld [vmem:[#allocation15 + $0x180] sm:$0xff]
    %v2004 = vld [vmem:[#allocation15 + $0x188] sm:$0xff]
    %v2005 = vld [vmem:[#allocation15 + $0x190] sm:$0xff]
    %v2006 = vld [vmem:[#allocation15 + $0x198] sm:$0xff]
    %v2007 = vld [vmem:[#allocation15 + $0x1a0] sm:$0xff]
    %v2008 = vld [vmem:[#allocation15 + $0x1a8] sm:$0xff]
    %v2009 = vld [vmem:[#allocation15 + $0x1b0] sm:$0xff]
    %v2010 = vld [vmem:[#allocation15 + $0x1b8] sm:$0xff]
    %v2011 = vld [vmem:[#allocation15 + $0x1c0] sm:$0xff]
    %v2012 = vld [vmem:[#allocation15 + $0x1c8] sm:$0xff]
    %v2013 = vld [vmem:[#allocation15 + $0x1d0] sm:$0xff]
    %v2014 = vld [vmem:[#allocation15 + $0x1d8] sm:$0xff]
    %v2015 = vld [vmem:[#allocation15 + $0x1e0] sm:$0xff]
    %v2016 = vld [vmem:[#allocation15 + $0x1e8] sm:$0xff]
    %v2017 = vld [vmem:[#allocation15 + $0x1f0] sm:$0xff]
    %v2018 = vld [vmem:[#allocation15 + $0x1f8] sm:$0xff]
    %2019 = vmatpush.msra.mxu0 %v2015
    %2020 = vmatpush.msra.mxu0 %v2011
    %2021 = vmatpush.msra.mxu0 %v2007
    %2022 = vmatpush.msra.mxu0 %v2003
    %2023 = vmatpush.msra.mxu0 %v1999
    %2024 = vmatpush.msra.mxu0 %v1995
    %2025 = vmatpush.msra.mxu0 %v1991
    %2026 = vmatpush.msra.mxu0 %v1987
    %2027 = vmatpush.msra.mxu0 %v1983
    %2028 = vmatpush.msra.mxu0 %v1979
    %2029 = vmatpush.msra.mxu0 %v1975
    %2030 = vmatpush.msra.mxu0 %v1971
    %2031 = vmatpush.msra.mxu0 %v1967
    %2032 = vmatpush.msra.mxu0 %v1963
    %2033 = vmatpush.msra.mxu0 %v1959
    %2034 = vmatpush.msra.mxu0 %v1955
    %2035 = vmatmul.f32.gmra.mxu0 %v1887
    %v2036 = vpop.f32.mrf.mxu0
    %v2037 = vadd.f32 0.0, %v2036
    %2038 = vdwg.mxu0
    %2039 = vmatpush.msra.mxu0 %v2016
    %2040 = vmatpush.msra.mxu0 %v2012
    %2041 = vmatpush.msra.mxu0 %v2008
    %2042 = vmatpush.msra.mxu0 %v2004
    %2043 = vmatpush.msra.mxu0 %v2000
    %2044 = vmatpush.msra.mxu0 %v1996
    %2045 = vmatpush.msra.mxu0 %v1992
    %2046 = vmatpush.msra.mxu0 %v1988
    %2047 = vmatpush.msra.mxu0 %v1984
    %2048 = vmatpush.msra.mxu0 %v1980
    %2049 = vmatpush.msra.mxu0 %v1976
    %2050 = vmatpush.msra.mxu0 %v1972
    %2051 = vmatpush.msra.mxu0 %v1968
    %2052 = vmatpush.msra.mxu0 %v1964
    %2053 = vmatpush.msra.mxu0 %v1960
    %2054 = vmatpush.msra.mxu0 %v1956
    %2055 = vmatmul.f32.gmra.mxu0 %v1887
    %v2056 = vpop.f32.mrf.mxu0
    %v2057 = vadd.f32 0.0, %v2056
    %2058 = vdwg.mxu0
    %2059 = vmatpush.msra.mxu0 %v2017
    %2060 = vmatpush.msra.mxu0 %v2013
    %2061 = vmatpush.msra.mxu0 %v2009
    %2062 = vmatpush.msra.mxu0 %v2005
    %2063 = vmatpush.msra.mxu0 %v2001
    %2064 = vmatpush.msra.mxu0 %v1997
    %2065 = vmatpush.msra.mxu0 %v1993
    %2066 = vmatpush.msra.mxu0 %v1989
    %2067 = vmatpush.msra.mxu0 %v1985
    %2068 = vmatpush.msra.mxu0 %v1981
    %2069 = vmatpush.msra.mxu0 %v1977
    %2070 = vmatpush.msra.mxu0 %v1973
    %2071 = vmatpush.msra.mxu0 %v1969
    %2072 = vmatpush.msra.mxu0 %v1965
    %2073 = vmatpush.msra.mxu0 %v1961
    %2074 = vmatpush.msra.mxu0 %v1957
    %2075 = vmatmul.f32.gmra.mxu0 %v1887
    %v2076 = vpop.f32.mrf.mxu0
    %v2077 = vadd.f32 0.0, %v2076
    %2078 = vdwg.mxu0
    %2079 = vmatpush.msra.mxu0 %v2018
    %2080 = vmatpush.msra.mxu0 %v2014
    %2081 = vmatpush.msra.mxu0 %v2010
    %2082 = vmatpush.msra.mxu0 %v2006
    %2083 = vmatpush.msra.mxu0 %v2002
    %2084 = vmatpush.msra.mxu0 %v1998
    %2085 = vmatpush.msra.mxu0 %v1994
    %2086 = vmatpush.msra.mxu0 %v1990
    %2087 = vmatpush.msra.mxu0 %v1986
    %2088 = vmatpush.msra.mxu0 %v1982
    %2089 = vmatpush.msra.mxu0 %v1978
    %2090 = vmatpush.msra.mxu0 %v1974
    %2091 = vmatpush.msra.mxu0 %v1970
    %2092 = vmatpush.msra.mxu0 %v1966
    %2093 = vmatpush.msra.mxu0 %v1962
    %2094 = vmatpush.msra.mxu0 %v1958
    %2095 = vmatmul.f32.gmra.mxu0 %v1887
    %v2096 = vpop.f32.mrf.mxu0
    %v2097 = vadd.f32 0.0, %v2096
    %2098 = vdwg.mxu0
    %v2099 = vld [vmem:[#allocation17] sm:$0xff]
    %v2100 = vld [vmem:[#allocation17 + $0x8] sm:$0xff]
    %v2101 = vld [vmem:[#allocation17 + $0x10] sm:$0xff]
    %v2102 = vld [vmem:[#allocation17 + $0x18] sm:$0xff]
    %v2103 = vld [vmem:[#allocation17 + $0x20] sm:$0xff]
    %v2104 = vld [vmem:[#allocation17 + $0x28] sm:$0xff]
    %v2105 = vld [vmem:[#allocation17 + $0x30] sm:$0xff]
    %v2106 = vld [vmem:[#allocation17 + $0x38] sm:$0xff]
    %v2107 = vld [vmem:[#allocation17 + $0x40] sm:$0xff]
    %v2108 = vld [vmem:[#allocation17 + $0x48] sm:$0xff]
    %v2109 = vld [vmem:[#allocation17 + $0x50] sm:$0xff]
    %v2110 = vld [vmem:[#allocation17 + $0x58] sm:$0xff]
    %v2111 = vld [vmem:[#allocation17 + $0x60] sm:$0xff]
    %v2112 = vld [vmem:[#allocation17 + $0x68] sm:$0xff]
    %v2113 = vld [vmem:[#allocation17 + $0x70] sm:$0xff]
    %v2114 = vld [vmem:[#allocation17 + $0x78] sm:$0xff]
    %v2115 = vld [vmem:[#allocation17 + $0x80] sm:$0xff]
    %v2116 = vld [vmem:[#allocation17 + $0x88] sm:$0xff]
    %v2117 = vld [vmem:[#allocation17 + $0x90] sm:$0xff]
    %v2118 = vld [vmem:[#allocation17 + $0x98] sm:$0xff]
    %v2119 = vld [vmem:[#allocation17 + $0xa0] sm:$0xff]
    %v2120 = vld [vmem:[#allocation17 + $0xa8] sm:$0xff]
    %v2121 = vld [vmem:[#allocation17 + $0xb0] sm:$0xff]
    %v2122 = vld [vmem:[#allocation17 + $0xb8] sm:$0xff]
    %v2123 = vld [vmem:[#allocation17 + $0xc0] sm:$0xff]
    %v2124 = vld [vmem:[#allocation17 + $0xc8] sm:$0xff]
    %v2125 = vld [vmem:[#allocation17 + $0xd0] sm:$0xff]
    %v2126 = vld [vmem:[#allocation17 + $0xd8] sm:$0xff]
    %v2127 = vld [vmem:[#allocation17 + $0xe0] sm:$0xff]
    %v2128 = vld [vmem:[#allocation17 + $0xe8] sm:$0xff]
    %v2129 = vld [vmem:[#allocation17 + $0xf0] sm:$0xff]
    %v2130 = vld [vmem:[#allocation17 + $0xf8] sm:$0xff]
    %v2131 = vld [vmem:[#allocation17 + $0x100] sm:$0xff]
    %v2132 = vld [vmem:[#allocation17 + $0x108] sm:$0xff]
    %v2133 = vld [vmem:[#allocation17 + $0x110] sm:$0xff]
    %v2134 = vld [vmem:[#allocation17 + $0x118] sm:$0xff]
    %v2135 = vld [vmem:[#allocation17 + $0x120] sm:$0xff]
    %v2136 = vld [vmem:[#allocation17 + $0x128] sm:$0xff]
    %v2137 = vld [vmem:[#allocation17 + $0x130] sm:$0xff]
    %v2138 = vld [vmem:[#allocation17 + $0x138] sm:$0xff]
    %v2139 = vld [vmem:[#allocation17 + $0x140] sm:$0xff]
    %v2140 = vld [vmem:[#allocation17 + $0x148] sm:$0xff]
    %v2141 = vld [vmem:[#allocation17 + $0x150] sm:$0xff]
    %v2142 = vld [vmem:[#allocation17 + $0x158] sm:$0xff]
    %v2143 = vld [vmem:[#allocation17 + $0x160] sm:$0xff]
    %v2144 = vld [vmem:[#allocation17 + $0x168] sm:$0xff]
    %v2145 = vld [vmem:[#allocation17 + $0x170] sm:$0xff]
    %v2146 = vld [vmem:[#allocation17 + $0x178] sm:$0xff]
    %v2147 = vld [vmem:[#allocation17 + $0x180] sm:$0xff]
    %v2148 = vld [vmem:[#allocation17 + $0x188] sm:$0xff]
    %v2149 = vld [vmem:[#allocation17 + $0x190] sm:$0xff]
    %v2150 = vld [vmem:[#allocation17 + $0x198] sm:$0xff]
    %v2151 = vld [vmem:[#allocation17 + $0x1a0] sm:$0xff]
    %v2152 = vld [vmem:[#allocation17 + $0x1a8] sm:$0xff]
    %v2153 = vld [vmem:[#allocation17 + $0x1b0] sm:$0xff]
    %v2154 = vld [vmem:[#allocation17 + $0x1b8] sm:$0xff]
    %v2155 = vld [vmem:[#allocation17 + $0x1c0] sm:$0xff]
    %v2156 = vld [vmem:[#allocation17 + $0x1c8] sm:$0xff]
    %v2157 = vld [vmem:[#allocation17 + $0x1d0] sm:$0xff]
    %v2158 = vld [vmem:[#allocation17 + $0x1d8] sm:$0xff]
    %v2159 = vld [vmem:[#allocation17 + $0x1e0] sm:$0xff]
    %v2160 = vld [vmem:[#allocation17 + $0x1e8] sm:$0xff]
    %v2161 = vld [vmem:[#allocation17 + $0x1f0] sm:$0xff]
    %v2162 = vld [vmem:[#allocation17 + $0x1f8] sm:$0xff]
    %2163 = vmatpush.msra.mxu0 %v2159
    %2164 = vmatpush.msra.mxu0 %v2155
    %2165 = vmatpush.msra.mxu0 %v2151
    %2166 = vmatpush.msra.mxu0 %v2147
    %2167 = vmatpush.msra.mxu0 %v2143
    %2168 = vmatpush.msra.mxu0 %v2139
    %2169 = vmatpush.msra.mxu0 %v2135
    %2170 = vmatpush.msra.mxu0 %v2131
    %2171 = vmatpush.msra.mxu0 %v2127
    %2172 = vmatpush.msra.mxu0 %v2123
    %2173 = vmatpush.msra.mxu0 %v2119
    %2174 = vmatpush.msra.mxu0 %v2115
    %2175 = vmatpush.msra.mxu0 %v2111
    %2176 = vmatpush.msra.mxu0 %v2107
    %2177 = vmatpush.msra.mxu0 %v2103
    %2178 = vmatpush.msra.mxu0 %v2099
    %2179 = vmatmul.f32.gmra.mxu0 %v1950
    %v2180 = vpop.f32.mrf.mxu0
    %v2181 = vadd.f32 0.0, %v2180
    %2182 = vdwg.mxu0
    %2183 = vmatpush.msra.mxu0 %v2160
    %2184 = vmatpush.msra.mxu0 %v2156
    %2185 = vmatpush.msra.mxu0 %v2152
    %2186 = vmatpush.msra.mxu0 %v2148
    %2187 = vmatpush.msra.mxu0 %v2144
    %2188 = vmatpush.msra.mxu0 %v2140
    %2189 = vmatpush.msra.mxu0 %v2136
    %2190 = vmatpush.msra.mxu0 %v2132
    %2191 = vmatpush.msra.mxu0 %v2128
    %2192 = vmatpush.msra.mxu0 %v2124
    %2193 = vmatpush.msra.mxu0 %v2120
    %2194 = vmatpush.msra.mxu0 %v2116
    %2195 = vmatpush.msra.mxu0 %v2112
    %2196 = vmatpush.msra.mxu0 %v2108
    %2197 = vmatpush.msra.mxu0 %v2104
    %2198 = vmatpush.msra.mxu0 %v2100
    %2199 = vmatmul.f32.gmra.mxu0 %v1950
    %v2200 = vpop.f32.mrf.mxu0
    %v2201 = vadd.f32 0.0, %v2200
    %2202 = vdwg.mxu0
    %2203 = vmatpush.msra.mxu0 %v2161
    %2204 = vmatpush.msra.mxu0 %v2157
    %2205 = vmatpush.msra.mxu0 %v2153
    %2206 = vmatpush.msra.mxu0 %v2149
    %2207 = vmatpush.msra.mxu0 %v2145
    %2208 = vmatpush.msra.mxu0 %v2141
    %2209 = vmatpush.msra.mxu0 %v2137
    %2210 = vmatpush.msra.mxu0 %v2133
    %2211 = vmatpush.msra.mxu0 %v2129
    %2212 = vmatpush.msra.mxu0 %v2125
    %2213 = vmatpush.msra.mxu0 %v2121
    %2214 = vmatpush.msra.mxu0 %v2117
    %2215 = vmatpush.msra.mxu0 %v2113
    %2216 = vmatpush.msra.mxu0 %v2109
    %2217 = vmatpush.msra.mxu0 %v2105
    %2218 = vmatpush.msra.mxu0 %v2101
    %2219 = vmatmul.f32.gmra.mxu0 %v1950
    %v2220 = vpop.f32.mrf.mxu0
    %v2221 = vadd.f32 0.0, %v2220
    %2222 = vdwg.mxu0
    %2223 = vmatpush.msra.mxu0 %v2162
    %2224 = vmatpush.msra.mxu0 %v2158
    %2225 = vmatpush.msra.mxu0 %v2154
    %2226 = vmatpush.msra.mxu0 %v2150
    %2227 = vmatpush.msra.mxu0 %v2146
    %2228 = vmatpush.msra.mxu0 %v2142
    %2229 = vmatpush.msra.mxu0 %v2138
    %2230 = vmatpush.msra.mxu0 %v2134
    %2231 = vmatpush.msra.mxu0 %v2130
    %2232 = vmatpush.msra.mxu0 %v2126
    %2233 = vmatpush.msra.mxu0 %v2122
    %2234 = vmatpush.msra.mxu0 %v2118
    %2235 = vmatpush.msra.mxu0 %v2114
    %2236 = vmatpush.msra.mxu0 %v2110
    %2237 = vmatpush.msra.mxu0 %v2106
    %2238 = vmatpush.msra.mxu0 %v2102
    %2239 = vmatmul.f32.gmra.mxu0 %v1950
    %v2240 = vpop.f32.mrf.mxu0
    %v2241 = vadd.f32 0.0, %v2240
    %2242 = vdwg.mxu0
    %s2243 = scalar_lea.vmem [#allocation2], 96
    %v2244 = vld [vmem:[%s2243] sm:$0xff]
    %v2245 = vld [vmem:[%s2243 + $0x8] sm:$0xff]
    %v2246 = vld [vmem:[%s2243 + $0x10] sm:$0xff]
    %v2247 = vld [vmem:[%s2243 + $0x18] sm:$0xff]
    %v2248 = vadd.f32 %v2244, %v2037
    %v2249 = vadd.f32 %v2245, %v2057
    %v2250 = vadd.f32 %v2246, %v2077
    %v2251 = vadd.f32 %v2247, %v2097
    %s2252 = scalar_lea.vmem [#allocation3], 128
    %v2253 = vld [vmem:[%s2252] sm:$0xff]
    %v2254 = vld [vmem:[%s2252 + $0x8] sm:$0xff]
    %v2255 = vld [vmem:[%s2252 + $0x10] sm:$0xff]
    %v2256 = vld [vmem:[%s2252 + $0x18] sm:$0xff]
    %v2257 = vadd.f32 %v2253, %v2181
    %v2258 = vadd.f32 %v2254, %v2201
    %v2259 = vadd.f32 %v2255, %v2221
    %v2260 = vadd.f32 %v2256, %v2241
    %v2261 = vxor.u32 %v2248, 2147483648
    %v2262 = vmul.f32 %v2261, 1.442695
    %v2263 = vpow.pop %v2262
    %v2264 = vadd.f32 %v2263, 1.0
    %v2265 = vrcp.pop %v2264
    %v2266 = vmul.f32 %v2264, %v2265
    %v2267 = vsub.f32 1.0, %v2266
    %v2268 = vmul.f32 %v2265, %v2267
    %v2269 = vadd.f32 %v2265, %v2268
    %vm2270 = vweird.f32 %v2264
    %vm2271 = vweird.f32 %v2265
    %vm2272 = vmor %vm2270, %vm2271
    %v2273 = vsel %vm2272, %v2265, %v2269
    %v2274 = vand.u32 2147483647, %v2264
    %vm2275 = vcmp.eq.f32.partialorder %v2274, 8.507059e+37
    %v2276 = vand.u32 %v2264, 2147483648
    %v2277 = vor.u32 1.1754944e-38, %v2276
    %v2278 = vsel %vm2275, %v2277, %v2273
    %v2279 = vmul.f32 1.0, %v2278
    %v2280 = vxor.u32 %v2249, 2147483648
    %v2281 = vmul.f32 %v2280, 1.442695
    %v2282 = vpow.pop %v2281
    %v2283 = vadd.f32 %v2282, 1.0
    %v2284 = vrcp.pop %v2283
    %v2285 = vmul.f32 %v2283, %v2284
    %v2286 = vsub.f32 1.0, %v2285
    %v2287 = vmul.f32 %v2284, %v2286
    %v2288 = vadd.f32 %v2284, %v2287
    %vm2289 = vweird.f32 %v2283
    %vm2290 = vweird.f32 %v2284
    %vm2291 = vmor %vm2289, %vm2290
    %v2292 = vsel %vm2291, %v2284, %v2288
    %v2293 = vand.u32 2147483647, %v2283
    %vm2294 = vcmp.eq.f32.partialorder %v2293, 8.507059e+37
    %v2295 = vand.u32 %v2283, 2147483648
    %v2296 = vor.u32 1.1754944e-38, %v2295
    %v2297 = vsel %vm2294, %v2296, %v2292
    %v2298 = vmul.f32 1.0, %v2297
    %v2299 = vtanh.pop %v2250
    %v2300 = vxor.u32 %v2251, 2147483648
    %v2301 = vmul.f32 %v2300, 1.442695
    %v2302 = vpow.pop %v2301
    %v2303 = vadd.f32 %v2302, 1.0
    %v2304 = vrcp.pop %v2303
    %v2305 = vmul.f32 %v2303, %v2304
    %v2306 = vsub.f32 1.0, %v2305
    %v2307 = vmul.f32 %v2304, %v2306
    %v2308 = vadd.f32 %v2304, %v2307
    %vm2309 = vweird.f32 %v2303
    %vm2310 = vweird.f32 %v2304
    %vm2311 = vmor %vm2309, %vm2310
    %v2312 = vsel %vm2311, %v2304, %v2308
    %v2313 = vand.u32 2147483647, %v2303
    %vm2314 = vcmp.eq.f32.partialorder %v2313, 8.507059e+37
    %v2315 = vand.u32 %v2303, 2147483648
    %v2316 = vor.u32 1.1754944e-38, %v2315
    %v2317 = vsel %vm2314, %v2316, %v2312
    %v2318 = vmul.f32 1.0, %v2317
    %v2319 = vmul.f32 %v2298, %v1885
    %v2320 = vmul.f32 %v2279, %v2299
    %v2321 = vadd.f32 %v2319, %v2320
    %v2322 = vtanh.pop %v2321
    %v2323 = vmul.f32 %v2318, %v2322
    %v2324 = vxor.u32 %v2257, 2147483648
    %v2325 = vmul.f32 %v2324, 1.442695
    %v2326 = vpow.pop %v2325
    %v2327 = vadd.f32 %v2326, 1.0
    %v2328 = vrcp.pop %v2327
    %v2329 = vmul.f32 %v2327, %v2328
    %v2330 = vsub.f32 1.0, %v2329
    %v2331 = vmul.f32 %v2328, %v2330
    %v2332 = vadd.f32 %v2328, %v2331
    %vm2333 = vweird.f32 %v2327
    %vm2334 = vweird.f32 %v2328
    %vm2335 = vmor %vm2333, %vm2334
    %v2336 = vsel %vm2335, %v2328, %v2332
    %v2337 = vand.u32 2147483647, %v2327
    %vm2338 = vcmp.eq.f32.partialorder %v2337, 8.507059e+37
    %v2339 = vand.u32 %v2327, 2147483648
    %v2340 = vor.u32 1.1754944e-38, %v2339
    %v2341 = vsel %vm2338, %v2340, %v2336
    %v2342 = vmul.f32 1.0, %v2341
    %v2343 = vxor.u32 %v2258, 2147483648
    %v2344 = vmul.f32 %v2343, 1.442695
    %v2345 = vpow.pop %v2344
    %v2346 = vadd.f32 %v2345, 1.0
    %v2347 = vrcp.pop %v2346
    %v2348 = vmul.f32 %v2346, %v2347
    %v2349 = vsub.f32 1.0, %v2348
    %v2350 = vmul.f32 %v2347, %v2349
    %v2351 = vadd.f32 %v2347, %v2350
    %vm2352 = vweird.f32 %v2346
    %vm2353 = vweird.f32 %v2347
    %vm2354 = vmor %vm2352, %vm2353
    %v2355 = vsel %vm2354, %v2347, %v2351
    %v2356 = vand.u32 2147483647, %v2346
    %vm2357 = vcmp.eq.f32.partialorder %v2356, 8.507059e+37
    %v2358 = vand.u32 %v2346, 2147483648
    %v2359 = vor.u32 1.1754944e-38, %v2358
    %v2360 = vsel %vm2357, %v2359, %v2355
    %v2361 = vmul.f32 1.0, %v2360
    %v2362 = vtanh.pop %v2259
    %v2363 = vxor.u32 %v2260, 2147483648
    %v2364 = vmul.f32 %v2363, 1.442695
    %v2365 = vpow.pop %v2364
    %v2366 = vadd.f32 %v2365, 1.0
    %v2367 = vrcp.pop %v2366
    %v2368 = vmul.f32 %v2366, %v2367
    %v2369 = vsub.f32 1.0, %v2368
    %v2370 = vmul.f32 %v2367, %v2369
    %v2371 = vadd.f32 %v2367, %v2370
    %vm2372 = vweird.f32 %v2366
    %vm2373 = vweird.f32 %v2367
    %vm2374 = vmor %vm2372, %vm2373
    %v2375 = vsel %vm2374, %v2367, %v2371
    %v2376 = vand.u32 2147483647, %v2366
    %vm2377 = vcmp.eq.f32.partialorder %v2376, 8.507059e+37
    %v2378 = vand.u32 %v2366, 2147483648
    %v2379 = vor.u32 1.1754944e-38, %v2378
    %v2380 = vsel %vm2377, %v2379, %v2375
    %v2381 = vmul.f32 1.0, %v2380
    %v2382 = vmul.f32 %v2361, %v1948
    %v2383 = vmul.f32 %v2342, %v2362
    %v2384 = vadd.f32 %v2382, %v2383
    %v2385 = vtanh.pop %v2384
    %v2386 = vmul.f32 %v2381, %v2385
    %s2387 = scalar_lea.vmem [#allocation4], 24
    %2388 = vst [vmem:[%s2387] sm:$0xff] %v2323
    %s2389 = scalar_lea.vmem [#allocation5], 32
    %2390 = vst [vmem:[%s2389] sm:$0xff] %v2386
    %v2391 = vld [vmem:[#allocation15] sm:$0xff]
    %v2392 = vld [vmem:[#allocation15 + $0x8] sm:$0xff]
    %v2393 = vld [vmem:[#allocation15 + $0x10] sm:$0xff]
    %v2394 = vld [vmem:[#allocation15 + $0x18] sm:$0xff]
    %v2395 = vld [vmem:[#allocation15 + $0x20] sm:$0xff]
    %v2396 = vld [vmem:[#allocation15 + $0x28] sm:$0xff]
    %v2397 = vld [vmem:[#allocation15 + $0x30] sm:$0xff]
    %v2398 = vld [vmem:[#allocation15 + $0x38] sm:$0xff]
    %v2399 = vld [vmem:[#allocation15 + $0x40] sm:$0xff]
    %v2400 = vld [vmem:[#allocation15 + $0x48] sm:$0xff]
    %v2401 = vld [vmem:[#allocation15 + $0x50] sm:$0xff]
    %v2402 = vld [vmem:[#allocation15 + $0x58] sm:$0xff]
    %v2403 = vld [vmem:[#allocation15 + $0x60] sm:$0xff]
    %v2404 = vld [vmem:[#allocation15 + $0x68] sm:$0xff]
    %v2405 = vld [vmem:[#allocation15 + $0x70] sm:$0xff]
    %v2406 = vld [vmem:[#allocation15 + $0x78] sm:$0xff]
    %v2407 = vld [vmem:[#allocation15 + $0x80] sm:$0xff]
    %v2408 = vld [vmem:[#allocation15 + $0x88] sm:$0xff]
    %v2409 = vld [vmem:[#allocation15 + $0x90] sm:$0xff]
    %v2410 = vld [vmem:[#allocation15 + $0x98] sm:$0xff]
    %v2411 = vld [vmem:[#allocation15 + $0xa0] sm:$0xff]
    %v2412 = vld [vmem:[#allocation15 + $0xa8] sm:$0xff]
    %v2413 = vld [vmem:[#allocation15 + $0xb0] sm:$0xff]
    %v2414 = vld [vmem:[#allocation15 + $0xb8] sm:$0xff]
    %v2415 = vld [vmem:[#allocation15 + $0xc0] sm:$0xff]
    %v2416 = vld [vmem:[#allocation15 + $0xc8] sm:$0xff]
    %v2417 = vld [vmem:[#allocation15 + $0xd0] sm:$0xff]
    %v2418 = vld [vmem:[#allocation15 + $0xd8] sm:$0xff]
    %v2419 = vld [vmem:[#allocation15 + $0xe0] sm:$0xff]
    %v2420 = vld [vmem:[#allocation15 + $0xe8] sm:$0xff]
    %v2421 = vld [vmem:[#allocation15 + $0xf0] sm:$0xff]
    %v2422 = vld [vmem:[#allocation15 + $0xf8] sm:$0xff]
    %v2423 = vld [vmem:[#allocation15 + $0x100] sm:$0xff]
    %v2424 = vld [vmem:[#allocation15 + $0x108] sm:$0xff]
    %v2425 = vld [vmem:[#allocation15 + $0x110] sm:$0xff]
    %v2426 = vld [vmem:[#allocation15 + $0x118] sm:$0xff]
    %v2427 = vld [vmem:[#allocation15 + $0x120] sm:$0xff]
    %v2428 = vld [vmem:[#allocation15 + $0x128] sm:$0xff]
    %v2429 = vld [vmem:[#allocation15 + $0x130] sm:$0xff]
    %v2430 = vld [vmem:[#allocation15 + $0x138] sm:$0xff]
    %v2431 = vld [vmem:[#allocation15 + $0x140] sm:$0xff]
    %v2432 = vld [vmem:[#allocation15 + $0x148] sm:$0xff]
    %v2433 = vld [vmem:[#allocation15 + $0x150] sm:$0xff]
    %v2434 = vld [vmem:[#allocation15 + $0x158] sm:$0xff]
    %v2435 = vld [vmem:[#allocation15 + $0x160] sm:$0xff]
    %v2436 = vld [vmem:[#allocation15 + $0x168] sm:$0xff]
    %v2437 = vld [vmem:[#allocation15 + $0x170] sm:$0xff]
    %v2438 = vld [vmem:[#allocation15 + $0x178] sm:$0xff]
    %v2439 = vld [vmem:[#allocation15 + $0x180] sm:$0xff]
    %v2440 = vld [vmem:[#allocation15 + $0x188] sm:$0xff]
    %v2441 = vld [vmem:[#allocation15 + $0x190] sm:$0xff]
    %v2442 = vld [vmem:[#allocation15 + $0x198] sm:$0xff]
    %v2443 = vld [vmem:[#allocation15 + $0x1a0] sm:$0xff]
    %v2444 = vld [vmem:[#allocation15 + $0x1a8] sm:$0xff]
    %v2445 = vld [vmem:[#allocation15 + $0x1b0] sm:$0xff]
    %v2446 = vld [vmem:[#allocation15 + $0x1b8] sm:$0xff]
    %v2447 = vld [vmem:[#allocation15 + $0x1c0] sm:$0xff]
    %v2448 = vld [vmem:[#allocation15 + $0x1c8] sm:$0xff]
    %v2449 = vld [vmem:[#allocation15 + $0x1d0] sm:$0xff]
    %v2450 = vld [vmem:[#allocation15 + $0x1d8] sm:$0xff]
    %v2451 = vld [vmem:[#allocation15 + $0x1e0] sm:$0xff]
    %v2452 = vld [vmem:[#allocation15 + $0x1e8] sm:$0xff]
    %v2453 = vld [vmem:[#allocation15 + $0x1f0] sm:$0xff]
    %v2454 = vld [vmem:[#allocation15 + $0x1f8] sm:$0xff]
    %2455 = vmatpush.msra.mxu0 %v2451
    %2456 = vmatpush.msra.mxu0 %v2447
    %2457 = vmatpush.msra.mxu0 %v2443
    %2458 = vmatpush.msra.mxu0 %v2439
    %2459 = vmatpush.msra.mxu0 %v2435
    %2460 = vmatpush.msra.mxu0 %v2431
    %2461 = vmatpush.msra.mxu0 %v2427
    %2462 = vmatpush.msra.mxu0 %v2423
    %2463 = vmatpush.msra.mxu0 %v2419
    %2464 = vmatpush.msra.mxu0 %v2415
    %2465 = vmatpush.msra.mxu0 %v2411
    %2466 = vmatpush.msra.mxu0 %v2407
    %2467 = vmatpush.msra.mxu0 %v2403
    %2468 = vmatpush.msra.mxu0 %v2399
    %2469 = vmatpush.msra.mxu0 %v2395
    %2470 = vmatpush.msra.mxu0 %v2391
    %2471 = vmatmul.f32.gmra.mxu0 %v2323
    %v2472 = vpop.f32.mrf.mxu0
    %v2473 = vadd.f32 0.0, %v2472
    %2474 = vdwg.mxu0
    %2475 = vmatpush.msra.mxu0 %v2452
    %2476 = vmatpush.msra.mxu0 %v2448
    %2477 = vmatpush.msra.mxu0 %v2444
    %2478 = vmatpush.msra.mxu0 %v2440
    %2479 = vmatpush.msra.mxu0 %v2436
    %2480 = vmatpush.msra.mxu0 %v2432
    %2481 = vmatpush.msra.mxu0 %v2428
    %2482 = vmatpush.msra.mxu0 %v2424
    %2483 = vmatpush.msra.mxu0 %v2420
    %2484 = vmatpush.msra.mxu0 %v2416
    %2485 = vmatpush.msra.mxu0 %v2412
    %2486 = vmatpush.msra.mxu0 %v2408
    %2487 = vmatpush.msra.mxu0 %v2404
    %2488 = vmatpush.msra.mxu0 %v2400
    %2489 = vmatpush.msra.mxu0 %v2396
    %2490 = vmatpush.msra.mxu0 %v2392
    %2491 = vmatmul.f32.gmra.mxu0 %v2323
    %v2492 = vpop.f32.mrf.mxu0
    %v2493 = vadd.f32 0.0, %v2492
    %2494 = vdwg.mxu0
    %2495 = vmatpush.msra.mxu0 %v2453
    %2496 = vmatpush.msra.mxu0 %v2449
    %2497 = vmatpush.msra.mxu0 %v2445
    %2498 = vmatpush.msra.mxu0 %v2441
    %2499 = vmatpush.msra.mxu0 %v2437
    %2500 = vmatpush.msra.mxu0 %v2433
    %2501 = vmatpush.msra.mxu0 %v2429
    %2502 = vmatpush.msra.mxu0 %v2425
    %2503 = vmatpush.msra.mxu0 %v2421
    %2504 = vmatpush.msra.mxu0 %v2417
    %2505 = vmatpush.msra.mxu0 %v2413
    %2506 = vmatpush.msra.mxu0 %v2409
    %2507 = vmatpush.msra.mxu0 %v2405
    %2508 = vmatpush.msra.mxu0 %v2401
    %2509 = vmatpush.msra.mxu0 %v2397
    %2510 = vmatpush.msra.mxu0 %v2393
    %2511 = vmatmul.f32.gmra.mxu0 %v2323
    %v2512 = vpop.f32.mrf.mxu0
    %v2513 = vadd.f32 0.0, %v2512
    %2514 = vdwg.mxu0
    %2515 = vmatpush.msra.mxu0 %v2454
    %2516 = vmatpush.msra.mxu0 %v2450
    %2517 = vmatpush.msra.mxu0 %v2446
    %2518 = vmatpush.msra.mxu0 %v2442
    %2519 = vmatpush.msra.mxu0 %v2438
    %2520 = vmatpush.msra.mxu0 %v2434
    %2521 = vmatpush.msra.mxu0 %v2430
    %2522 = vmatpush.msra.mxu0 %v2426
    %2523 = vmatpush.msra.mxu0 %v2422
    %2524 = vmatpush.msra.mxu0 %v2418
    %2525 = vmatpush.msra.mxu0 %v2414
    %2526 = vmatpush.msra.mxu0 %v2410
    %2527 = vmatpush.msra.mxu0 %v2406
    %2528 = vmatpush.msra.mxu0 %v2402
    %2529 = vmatpush.msra.mxu0 %v2398
    %2530 = vmatpush.msra.mxu0 %v2394
    %2531 = vmatmul.f32.gmra.mxu0 %v2323
    %v2532 = vpop.f32.mrf.mxu0
    %v2533 = vadd.f32 0.0, %v2532
    %2534 = vdwg.mxu0
    %v2535 = vld [vmem:[#allocation17] sm:$0xff]
    %v2536 = vld [vmem:[#allocation17 + $0x8] sm:$0xff]
    %v2537 = vld [vmem:[#allocation17 + $0x10] sm:$0xff]
    %v2538 = vld [vmem:[#allocation17 + $0x18] sm:$0xff]
    %v2539 = vld [vmem:[#allocation17 + $0x20] sm:$0xff]
    %v2540 = vld [vmem:[#allocation17 + $0x28] sm:$0xff]
    %v2541 = vld [vmem:[#allocation17 + $0x30] sm:$0xff]
    %v2542 = vld [vmem:[#allocation17 + $0x38] sm:$0xff]
    %v2543 = vld [vmem:[#allocation17 + $0x40] sm:$0xff]
    %v2544 = vld [vmem:[#allocation17 + $0x48] sm:$0xff]
    %v2545 = vld [vmem:[#allocation17 + $0x50] sm:$0xff]
    %v2546 = vld [vmem:[#allocation17 + $0x58] sm:$0xff]
    %v2547 = vld [vmem:[#allocation17 + $0x60] sm:$0xff]
    %v2548 = vld [vmem:[#allocation17 + $0x68] sm:$0xff]
    %v2549 = vld [vmem:[#allocation17 + $0x70] sm:$0xff]
    %v2550 = vld [vmem:[#allocation17 + $0x78] sm:$0xff]
    %v2551 = vld [vmem:[#allocation17 + $0x80] sm:$0xff]
    %v2552 = vld [vmem:[#allocation17 + $0x88] sm:$0xff]
    %v2553 = vld [vmem:[#allocation17 + $0x90] sm:$0xff]
    %v2554 = vld [vmem:[#allocation17 + $0x98] sm:$0xff]
    %v2555 = vld [vmem:[#allocation17 + $0xa0] sm:$0xff]
    %v2556 = vld [vmem:[#allocation17 + $0xa8] sm:$0xff]
    %v2557 = vld [vmem:[#allocation17 + $0xb0] sm:$0xff]
    %v2558 = vld [vmem:[#allocation17 + $0xb8] sm:$0xff]
    %v2559 = vld [vmem:[#allocation17 + $0xc0] sm:$0xff]
    %v2560 = vld [vmem:[#allocation17 + $0xc8] sm:$0xff]
    %v2561 = vld [vmem:[#allocation17 + $0xd0] sm:$0xff]
    %v2562 = vld [vmem:[#allocation17 + $0xd8] sm:$0xff]
    %v2563 = vld [vmem:[#allocation17 + $0xe0] sm:$0xff]
    %v2564 = vld [vmem:[#allocation17 + $0xe8] sm:$0xff]
    %v2565 = vld [vmem:[#allocation17 + $0xf0] sm:$0xff]
    %v2566 = vld [vmem:[#allocation17 + $0xf8] sm:$0xff]
    %v2567 = vld [vmem:[#allocation17 + $0x100] sm:$0xff]
    %v2568 = vld [vmem:[#allocation17 + $0x108] sm:$0xff]
    %v2569 = vld [vmem:[#allocation17 + $0x110] sm:$0xff]
    %v2570 = vld [vmem:[#allocation17 + $0x118] sm:$0xff]
    %v2571 = vld [vmem:[#allocation17 + $0x120] sm:$0xff]
    %v2572 = vld [vmem:[#allocation17 + $0x128] sm:$0xff]
    %v2573 = vld [vmem:[#allocation17 + $0x130] sm:$0xff]
    %v2574 = vld [vmem:[#allocation17 + $0x138] sm:$0xff]
    %v2575 = vld [vmem:[#allocation17 + $0x140] sm:$0xff]
    %v2576 = vld [vmem:[#allocation17 + $0x148] sm:$0xff]
    %v2577 = vld [vmem:[#allocation17 + $0x150] sm:$0xff]
    %v2578 = vld [vmem:[#allocation17 + $0x158] sm:$0xff]
    %v2579 = vld [vmem:[#allocation17 + $0x160] sm:$0xff]
    %v2580 = vld [vmem:[#allocation17 + $0x168] sm:$0xff]
    %v2581 = vld [vmem:[#allocation17 + $0x170] sm:$0xff]
    %v2582 = vld [vmem:[#allocation17 + $0x178] sm:$0xff]
    %v2583 = vld [vmem:[#allocation17 + $0x180] sm:$0xff]
    %v2584 = vld [vmem:[#allocation17 + $0x188] sm:$0xff]
    %v2585 = vld [vmem:[#allocation17 + $0x190] sm:$0xff]
    %v2586 = vld [vmem:[#allocation17 + $0x198] sm:$0xff]
    %v2587 = vld [vmem:[#allocation17 + $0x1a0] sm:$0xff]
    %v2588 = vld [vmem:[#allocation17 + $0x1a8] sm:$0xff]
    %v2589 = vld [vmem:[#allocation17 + $0x1b0] sm:$0xff]
    %v2590 = vld [vmem:[#allocation17 + $0x1b8] sm:$0xff]
    %v2591 = vld [vmem:[#allocation17 + $0x1c0] sm:$0xff]
    %v2592 = vld [vmem:[#allocation17 + $0x1c8] sm:$0xff]
    %v2593 = vld [vmem:[#allocation17 + $0x1d0] sm:$0xff]
    %v2594 = vld [vmem:[#allocation17 + $0x1d8] sm:$0xff]
    %v2595 = vld [vmem:[#allocation17 + $0x1e0] sm:$0xff]
    %v2596 = vld [vmem:[#allocation17 + $0x1e8] sm:$0xff]
    %v2597 = vld [vmem:[#allocation17 + $0x1f0] sm:$0xff]
    %v2598 = vld [vmem:[#allocation17 + $0x1f8] sm:$0xff]
    %2599 = vmatpush.msra.mxu0 %v2595
    %2600 = vmatpush.msra.mxu0 %v2591
    %2601 = vmatpush.msra.mxu0 %v2587
    %2602 = vmatpush.msra.mxu0 %v2583
    %2603 = vmatpush.msra.mxu0 %v2579
    %2604 = vmatpush.msra.mxu0 %v2575
    %2605 = vmatpush.msra.mxu0 %v2571
    %2606 = vmatpush.msra.mxu0 %v2567
    %2607 = vmatpush.msra.mxu0 %v2563
    %2608 = vmatpush.msra.mxu0 %v2559
    %2609 = vmatpush.msra.mxu0 %v2555
    %2610 = vmatpush.msra.mxu0 %v2551
    %2611 = vmatpush.msra.mxu0 %v2547
    %2612 = vmatpush.msra.mxu0 %v2543
    %2613 = vmatpush.msra.mxu0 %v2539
    %2614 = vmatpush.msra.mxu0 %v2535
    %2615 = vmatmul.f32.gmra.mxu0 %v2386
    %v2616 = vpop.f32.mrf.mxu0
    %v2617 = vadd.f32 0.0, %v2616
    %2618 = vdwg.mxu0
    %2619 = vmatpush.msra.mxu0 %v2596
    %2620 = vmatpush.msra.mxu0 %v2592
    %2621 = vmatpush.msra.mxu0 %v2588
    %2622 = vmatpush.msra.mxu0 %v2584
    %2623 = vmatpush.msra.mxu0 %v2580
    %2624 = vmatpush.msra.mxu0 %v2576
    %2625 = vmatpush.msra.mxu0 %v2572
    %2626 = vmatpush.msra.mxu0 %v2568
    %2627 = vmatpush.msra.mxu0 %v2564
    %2628 = vmatpush.msra.mxu0 %v2560
    %2629 = vmatpush.msra.mxu0 %v2556
    %2630 = vmatpush.msra.mxu0 %v2552
    %2631 = vmatpush.msra.mxu0 %v2548
    %2632 = vmatpush.msra.mxu0 %v2544
    %2633 = vmatpush.msra.mxu0 %v2540
    %2634 = vmatpush.msra.mxu0 %v2536
    %2635 = vmatmul.f32.gmra.mxu0 %v2386
    %v2636 = vpop.f32.mrf.mxu0
    %v2637 = vadd.f32 0.0, %v2636
    %2638 = vdwg.mxu0
    %2639 = vmatpush.msra.mxu0 %v2597
    %2640 = vmatpush.msra.mxu0 %v2593
    %2641 = vmatpush.msra.mxu0 %v2589
    %2642 = vmatpush.msra.mxu0 %v2585
    %2643 = vmatpush.msra.mxu0 %v2581
    %2644 = vmatpush.msra.mxu0 %v2577
    %2645 = vmatpush.msra.mxu0 %v2573
    %2646 = vmatpush.msra.mxu0 %v2569
    %2647 = vmatpush.msra.mxu0 %v2565
    %2648 = vmatpush.msra.mxu0 %v2561
    %2649 = vmatpush.msra.mxu0 %v2557
    %2650 = vmatpush.msra.mxu0 %v2553
    %2651 = vmatpush.msra.mxu0 %v2549
    %2652 = vmatpush.msra.mxu0 %v2545
    %2653 = vmatpush.msra.mxu0 %v2541
    %2654 = vmatpush.msra.mxu0 %v2537
    %2655 = vmatmul.f32.gmra.mxu0 %v2386
    %v2656 = vpop.f32.mrf.mxu0
    %v2657 = vadd.f32 0.0, %v2656
    %2658 = vdwg.mxu0
    %2659 = vmatpush.msra.mxu0 %v2598
    %2660 = vmatpush.msra.mxu0 %v2594
    %2661 = vmatpush.msra.mxu0 %v2590
    %2662 = vmatpush.msra.mxu0 %v2586
    %2663 = vmatpush.msra.mxu0 %v2582
    %2664 = vmatpush.msra.mxu0 %v2578
    %2665 = vmatpush.msra.mxu0 %v2574
    %2666 = vmatpush.msra.mxu0 %v2570
    %2667 = vmatpush.msra.mxu0 %v2566
    %2668 = vmatpush.msra.mxu0 %v2562
    %2669 = vmatpush.msra.mxu0 %v2558
    %2670 = vmatpush.msra.mxu0 %v2554
    %2671 = vmatpush.msra.mxu0 %v2550
    %2672 = vmatpush.msra.mxu0 %v2546
    %2673 = vmatpush.msra.mxu0 %v2542
    %2674 = vmatpush.msra.mxu0 %v2538
    %2675 = vmatmul.f32.gmra.mxu0 %v2386
    %v2676 = vpop.f32.mrf.mxu0
    %v2677 = vadd.f32 0.0, %v2676
    %2678 = vdwg.mxu0
    %s2679 = scalar_lea.vmem [#allocation2], 128
    %v2680 = vld [vmem:[%s2679] sm:$0xff]
    %v2681 = vld [vmem:[%s2679 + $0x8] sm:$0xff]
    %v2682 = vld [vmem:[%s2679 + $0x10] sm:$0xff]
    %v2683 = vld [vmem:[%s2679 + $0x18] sm:$0xff]
    %v2684 = vadd.f32 %v2680, %v2473
    %v2685 = vadd.f32 %v2681, %v2493
    %v2686 = vadd.f32 %v2682, %v2513
    %v2687 = vadd.f32 %v2683, %v2533
    %s2688 = scalar_lea.vmem [#allocation3], 96
    %v2689 = vld [vmem:[%s2688] sm:$0xff]
    %v2690 = vld [vmem:[%s2688 + $0x8] sm:$0xff]
    %v2691 = vld [vmem:[%s2688 + $0x10] sm:$0xff]
    %v2692 = vld [vmem:[%s2688 + $0x18] sm:$0xff]
    %v2693 = vadd.f32 %v2689, %v2617
    %v2694 = vadd.f32 %v2690, %v2637
    %v2695 = vadd.f32 %v2691, %v2657
    %v2696 = vadd.f32 %v2692, %v2677
    %v2697 = vxor.u32 %v2684, 2147483648
    %v2698 = vmul.f32 %v2697, 1.442695
    %v2699 = vpow.pop %v2698
    %v2700 = vadd.f32 %v2699, 1.0
    %v2701 = vrcp.pop %v2700
    %v2702 = vmul.f32 %v2700, %v2701
    %v2703 = vsub.f32 1.0, %v2702
    %v2704 = vmul.f32 %v2701, %v2703
    %v2705 = vadd.f32 %v2701, %v2704
    %vm2706 = vweird.f32 %v2700
    %vm2707 = vweird.f32 %v2701
    %vm2708 = vmor %vm2706, %vm2707
    %v2709 = vsel %vm2708, %v2701, %v2705
    %v2710 = vand.u32 2147483647, %v2700
    %vm2711 = vcmp.eq.f32.partialorder %v2710, 8.507059e+37
    %v2712 = vand.u32 %v2700, 2147483648
    %v2713 = vor.u32 1.1754944e-38, %v2712
    %v2714 = vsel %vm2711, %v2713, %v2709
    %v2715 = vmul.f32 1.0, %v2714
    %v2716 = vxor.u32 %v2685, 2147483648
    %v2717 = vmul.f32 %v2716, 1.442695
    %v2718 = vpow.pop %v2717
    %v2719 = vadd.f32 %v2718, 1.0
    %v2720 = vrcp.pop %v2719
    %v2721 = vmul.f32 %v2719, %v2720
    %v2722 = vsub.f32 1.0, %v2721
    %v2723 = vmul.f32 %v2720, %v2722
    %v2724 = vadd.f32 %v2720, %v2723
    %vm2725 = vweird.f32 %v2719
    %vm2726 = vweird.f32 %v2720
    %vm2727 = vmor %vm2725, %vm2726
    %v2728 = vsel %vm2727, %v2720, %v2724
    %v2729 = vand.u32 2147483647, %v2719
    %vm2730 = vcmp.eq.f32.partialorder %v2729, 8.507059e+37
    %v2731 = vand.u32 %v2719, 2147483648
    %v2732 = vor.u32 1.1754944e-38, %v2731
    %v2733 = vsel %vm2730, %v2732, %v2728
    %v2734 = vmul.f32 1.0, %v2733
    %v2735 = vtanh.pop %v2686
    %v2736 = vxor.u32 %v2687, 2147483648
    %v2737 = vmul.f32 %v2736, 1.442695
    %v2738 = vpow.pop %v2737
    %v2739 = vadd.f32 %v2738, 1.0
    %v2740 = vrcp.pop %v2739
    %v2741 = vmul.f32 %v2739, %v2740
    %v2742 = vsub.f32 1.0, %v2741
    %v2743 = vmul.f32 %v2740, %v2742
    %v2744 = vadd.f32 %v2740, %v2743
    %vm2745 = vweird.f32 %v2739
    %vm2746 = vweird.f32 %v2740
    %vm2747 = vmor %vm2745, %vm2746
    %v2748 = vsel %vm2747, %v2740, %v2744
    %v2749 = vand.u32 2147483647, %v2739
    %vm2750 = vcmp.eq.f32.partialorder %v2749, 8.507059e+37
    %v2751 = vand.u32 %v2739, 2147483648
    %v2752 = vor.u32 1.1754944e-38, %v2751
    %v2753 = vsel %vm2750, %v2752, %v2748
    %v2754 = vmul.f32 1.0, %v2753
    %v2755 = vmul.f32 %v2734, %v2321
    %v2756 = vmul.f32 %v2715, %v2735
    %v2757 = vadd.f32 %v2755, %v2756
    %v2758 = vtanh.pop %v2757
    %v2759 = vmul.f32 %v2754, %v2758
    %v2760 = vxor.u32 %v2693, 2147483648
    %v2761 = vmul.f32 %v2760, 1.442695
    %v2762 = vpow.pop %v2761
    %v2763 = vadd.f32 %v2762, 1.0
    %v2764 = vrcp.pop %v2763
    %v2765 = vmul.f32 %v2763, %v2764
    %v2766 = vsub.f32 1.0, %v2765
    %v2767 = vmul.f32 %v2764, %v2766
    %v2768 = vadd.f32 %v2764, %v2767
    %vm2769 = vweird.f32 %v2763
    %vm2770 = vweird.f32 %v2764
    %vm2771 = vmor %vm2769, %vm2770
    %v2772 = vsel %vm2771, %v2764, %v2768
    %v2773 = vand.u32 2147483647, %v2763
    %vm2774 = vcmp.eq.f32.partialorder %v2773, 8.507059e+37
    %v2775 = vand.u32 %v2763, 2147483648
    %v2776 = vor.u32 1.1754944e-38, %v2775
    %v2777 = vsel %vm2774, %v2776, %v2772
    %v2778 = vmul.f32 1.0, %v2777
    %v2779 = vxor.u32 %v2694, 2147483648
    %v2780 = vmul.f32 %v2779, 1.442695
    %v2781 = vpow.pop %v2780
    %v2782 = vadd.f32 %v2781, 1.0
    %v2783 = vrcp.pop %v2782
    %v2784 = vmul.f32 %v2782, %v2783
    %v2785 = vsub.f32 1.0, %v2784
    %v2786 = vmul.f32 %v2783, %v2785
    %v2787 = vadd.f32 %v2783, %v2786
    %vm2788 = vweird.f32 %v2782
    %vm2789 = vweird.f32 %v2783
    %vm2790 = vmor %vm2788, %vm2789
    %v2791 = vsel %vm2790, %v2783, %v2787
    %v2792 = vand.u32 2147483647, %v2782
    %vm2793 = vcmp.eq.f32.partialorder %v2792, 8.507059e+37
    %v2794 = vand.u32 %v2782, 2147483648
    %v2795 = vor.u32 1.1754944e-38, %v2794
    %v2796 = vsel %vm2793, %v2795, %v2791
    %v2797 = vmul.f32 1.0, %v2796
    %v2798 = vtanh.pop %v2695
    %v2799 = vxor.u32 %v2696, 2147483648
    %v2800 = vmul.f32 %v2799, 1.442695
    %v2801 = vpow.pop %v2800
    %v2802 = vadd.f32 %v2801, 1.0
    %v2803 = vrcp.pop %v2802
    %v2804 = vmul.f32 %v2802, %v2803
    %v2805 = vsub.f32 1.0, %v2804
    %v2806 = vmul.f32 %v2803, %v2805
    %v2807 = vadd.f32 %v2803, %v2806
    %vm2808 = vweird.f32 %v2802
    %vm2809 = vweird.f32 %v2803
    %vm2810 = vmor %vm2808, %vm2809
    %v2811 = vsel %vm2810, %v2803, %v2807
    %v2812 = vand.u32 2147483647, %v2802
    %vm2813 = vcmp.eq.f32.partialorder %v2812, 8.507059e+37
    %v2814 = vand.u32 %v2802, 2147483648
    %v2815 = vor.u32 1.1754944e-38, %v2814
    %v2816 = vsel %vm2813, %v2815, %v2811
    %v2817 = vmul.f32 1.0, %v2816
    %v2818 = vmul.f32 %v2797, %v2384
    %v2819 = vmul.f32 %v2778, %v2798
    %v2820 = vadd.f32 %v2818, %v2819
    %v2821 = vtanh.pop %v2820
    %v2822 = vmul.f32 %v2817, %v2821
    %s2823 = scalar_lea.vmem [#allocation4], 32
    %2824 = vst [vmem:[%s2823] sm:$0xff] %v2759
    %s2825 = scalar_lea.vmem [#allocation5], 24
    %2826 = vst [vmem:[%s2825] sm:$0xff] %v2822
    %v2827 = vld [vmem:[#allocation15] sm:$0xff]
    %v2828 = vld [vmem:[#allocation15 + $0x8] sm:$0xff]
    %v2829 = vld [vmem:[#allocation15 + $0x10] sm:$0xff]
    %v2830 = vld [vmem:[#allocation15 + $0x18] sm:$0xff]
    %v2831 = vld [vmem:[#allocation15 + $0x20] sm:$0xff]
    %v2832 = vld [vmem:[#allocation15 + $0x28] sm:$0xff]
    %v2833 = vld [vmem:[#allocation15 + $0x30] sm:$0xff]
    %v2834 = vld [vmem:[#allocation15 + $0x38] sm:$0xff]
    %v2835 = vld [vmem:[#allocation15 + $0x40] sm:$0xff]
    %v2836 = vld [vmem:[#allocation15 + $0x48] sm:$0xff]
    %v2837 = vld [vmem:[#allocation15 + $0x50] sm:$0xff]
    %v2838 = vld [vmem:[#allocation15 + $0x58] sm:$0xff]
    %v2839 = vld [vmem:[#allocation15 + $0x60] sm:$0xff]
    %v2840 = vld [vmem:[#allocation15 + $0x68] sm:$0xff]
    %v2841 = vld [vmem:[#allocation15 + $0x70] sm:$0xff]
    %v2842 = vld [vmem:[#allocation15 + $0x78] sm:$0xff]
    %v2843 = vld [vmem:[#allocation15 + $0x80] sm:$0xff]
    %v2844 = vld [vmem:[#allocation15 + $0x88] sm:$0xff]
    %v2845 = vld [vmem:[#allocation15 + $0x90] sm:$0xff]
    %v2846 = vld [vmem:[#allocation15 + $0x98] sm:$0xff]
    %v2847 = vld [vmem:[#allocation15 + $0xa0] sm:$0xff]
    %v2848 = vld [vmem:[#allocation15 + $0xa8] sm:$0xff]
    %v2849 = vld [vmem:[#allocation15 + $0xb0] sm:$0xff]
    %v2850 = vld [vmem:[#allocation15 + $0xb8] sm:$0xff]
    %v2851 = vld [vmem:[#allocation15 + $0xc0] sm:$0xff]
    %v2852 = vld [vmem:[#allocation15 + $0xc8] sm:$0xff]
    %v2853 = vld [vmem:[#allocation15 + $0xd0] sm:$0xff]
    %v2854 = vld [vmem:[#allocation15 + $0xd8] sm:$0xff]
    %v2855 = vld [vmem:[#allocation15 + $0xe0] sm:$0xff]
    %v2856 = vld [vmem:[#allocation15 + $0xe8] sm:$0xff]
    %v2857 = vld [vmem:[#allocation15 + $0xf0] sm:$0xff]
    %v2858 = vld [vmem:[#allocation15 + $0xf8] sm:$0xff]
    %v2859 = vld [vmem:[#allocation15 + $0x100] sm:$0xff]
    %v2860 = vld [vmem:[#allocation15 + $0x108] sm:$0xff]
    %v2861 = vld [vmem:[#allocation15 + $0x110] sm:$0xff]
    %v2862 = vld [vmem:[#allocation15 + $0x118] sm:$0xff]
    %v2863 = vld [vmem:[#allocation15 + $0x120] sm:$0xff]
    %v2864 = vld [vmem:[#allocation15 + $0x128] sm:$0xff]
    %v2865 = vld [vmem:[#allocation15 + $0x130] sm:$0xff]
    %v2866 = vld [vmem:[#allocation15 + $0x138] sm:$0xff]
    %v2867 = vld [vmem:[#allocation15 + $0x140] sm:$0xff]
    %v2868 = vld [vmem:[#allocation15 + $0x148] sm:$0xff]
    %v2869 = vld [vmem:[#allocation15 + $0x150] sm:$0xff]
    %v2870 = vld [vmem:[#allocation15 + $0x158] sm:$0xff]
    %v2871 = vld [vmem:[#allocation15 + $0x160] sm:$0xff]
    %v2872 = vld [vmem:[#allocation15 + $0x168] sm:$0xff]
    %v2873 = vld [vmem:[#allocation15 + $0x170] sm:$0xff]
    %v2874 = vld [vmem:[#allocation15 + $0x178] sm:$0xff]
    %v2875 = vld [vmem:[#allocation15 + $0x180] sm:$0xff]
    %v2876 = vld [vmem:[#allocation15 + $0x188] sm:$0xff]
    %v2877 = vld [vmem:[#allocation15 + $0x190] sm:$0xff]
    %v2878 = vld [vmem:[#allocation15 + $0x198] sm:$0xff]
    %v2879 = vld [vmem:[#allocation15 + $0x1a0] sm:$0xff]
    %v2880 = vld [vmem:[#allocation15 + $0x1a8] sm:$0xff]
    %v2881 = vld [vmem:[#allocation15 + $0x1b0] sm:$0xff]
    %v2882 = vld [vmem:[#allocation15 + $0x1b8] sm:$0xff]
    %v2883 = vld [vmem:[#allocation15 + $0x1c0] sm:$0xff]
    %v2884 = vld [vmem:[#allocation15 + $0x1c8] sm:$0xff]
    %v2885 = vld [vmem:[#allocation15 + $0x1d0] sm:$0xff]
    %v2886 = vld [vmem:[#allocation15 + $0x1d8] sm:$0xff]
    %v2887 = vld [vmem:[#allocation15 + $0x1e0] sm:$0xff]
    %v2888 = vld [vmem:[#allocation15 + $0x1e8] sm:$0xff]
    %v2889 = vld [vmem:[#allocation15 + $0x1f0] sm:$0xff]
    %v2890 = vld [vmem:[#allocation15 + $0x1f8] sm:$0xff]
    %2891 = vmatpush.msra.mxu0 %v2887
    %2892 = vmatpush.msra.mxu0 %v2883
    %2893 = vmatpush.msra.mxu0 %v2879
    %2894 = vmatpush.msra.mxu0 %v2875
    %2895 = vmatpush.msra.mxu0 %v2871
    %2896 = vmatpush.msra.mxu0 %v2867
    %2897 = vmatpush.msra.mxu0 %v2863
    %2898 = vmatpush.msra.mxu0 %v2859
    %2899 = vmatpush.msra.mxu0 %v2855
    %2900 = vmatpush.msra.mxu0 %v2851
    %2901 = vmatpush.msra.mxu0 %v2847
    %2902 = vmatpush.msra.mxu0 %v2843
    %2903 = vmatpush.msra.mxu0 %v2839
    %2904 = vmatpush.msra.mxu0 %v2835
    %2905 = vmatpush.msra.mxu0 %v2831
    %2906 = vmatpush.msra.mxu0 %v2827
    %2907 = vmatmul.f32.gmra.mxu0 %v2759
    %v2908 = vpop.f32.mrf.mxu0
    %v2909 = vadd.f32 0.0, %v2908
    %2910 = vdwg.mxu0
    %2911 = vmatpush.msra.mxu0 %v2888
    %2912 = vmatpush.msra.mxu0 %v2884
    %2913 = vmatpush.msra.mxu0 %v2880
    %2914 = vmatpush.msra.mxu0 %v2876
    %2915 = vmatpush.msra.mxu0 %v2872
    %2916 = vmatpush.msra.mxu0 %v2868
    %2917 = vmatpush.msra.mxu0 %v2864
    %2918 = vmatpush.msra.mxu0 %v2860
    %2919 = vmatpush.msra.mxu0 %v2856
    %2920 = vmatpush.msra.mxu0 %v2852
    %2921 = vmatpush.msra.mxu0 %v2848
    %2922 = vmatpush.msra.mxu0 %v2844
    %2923 = vmatpush.msra.mxu0 %v2840
    %2924 = vmatpush.msra.mxu0 %v2836
    %2925 = vmatpush.msra.mxu0 %v2832
    %2926 = vmatpush.msra.mxu0 %v2828
    %2927 = vmatmul.f32.gmra.mxu0 %v2759
    %v2928 = vpop.f32.mrf.mxu0
    %v2929 = vadd.f32 0.0, %v2928
    %2930 = vdwg.mxu0
    %2931 = vmatpush.msra.mxu0 %v2889
    %2932 = vmatpush.msra.mxu0 %v2885
    %2933 = vmatpush.msra.mxu0 %v2881
    %2934 = vmatpush.msra.mxu0 %v2877
    %2935 = vmatpush.msra.mxu0 %v2873
    %2936 = vmatpush.msra.mxu0 %v2869
    %2937 = vmatpush.msra.mxu0 %v2865
    %2938 = vmatpush.msra.mxu0 %v2861
    %2939 = vmatpush.msra.mxu0 %v2857
    %2940 = vmatpush.msra.mxu0 %v2853
    %2941 = vmatpush.msra.mxu0 %v2849
    %2942 = vmatpush.msra.mxu0 %v2845
    %2943 = vmatpush.msra.mxu0 %v2841
    %2944 = vmatpush.msra.mxu0 %v2837
    %2945 = vmatpush.msra.mxu0 %v2833
    %2946 = vmatpush.msra.mxu0 %v2829
    %2947 = vmatmul.f32.gmra.mxu0 %v2759
    %v2948 = vpop.f32.mrf.mxu0
    %v2949 = vadd.f32 0.0, %v2948
    %2950 = vdwg.mxu0
    %2951 = vmatpush.msra.mxu0 %v2890
    %2952 = vmatpush.msra.mxu0 %v2886
    %2953 = vmatpush.msra.mxu0 %v2882
    %2954 = vmatpush.msra.mxu0 %v2878
    %2955 = vmatpush.msra.mxu0 %v2874
    %2956 = vmatpush.msra.mxu0 %v2870
    %2957 = vmatpush.msra.mxu0 %v2866
    %2958 = vmatpush.msra.mxu0 %v2862
    %2959 = vmatpush.msra.mxu0 %v2858
    %2960 = vmatpush.msra.mxu0 %v2854
    %2961 = vmatpush.msra.mxu0 %v2850
    %2962 = vmatpush.msra.mxu0 %v2846
    %2963 = vmatpush.msra.mxu0 %v2842
    %2964 = vmatpush.msra.mxu0 %v2838
    %2965 = vmatpush.msra.mxu0 %v2834
    %2966 = vmatpush.msra.mxu0 %v2830
    %2967 = vmatmul.f32.gmra.mxu0 %v2759
    %v2968 = vpop.f32.mrf.mxu0
    %v2969 = vadd.f32 0.0, %v2968
    %2970 = vdwg.mxu0
    %v2971 = vld [vmem:[#allocation17] sm:$0xff]
    %v2972 = vld [vmem:[#allocation17 + $0x8] sm:$0xff]
    %v2973 = vld [vmem:[#allocation17 + $0x10] sm:$0xff]
    %v2974 = vld [vmem:[#allocation17 + $0x18] sm:$0xff]
    %v2975 = vld [vmem:[#allocation17 + $0x20] sm:$0xff]
    %v2976 = vld [vmem:[#allocation17 + $0x28] sm:$0xff]
    %v2977 = vld [vmem:[#allocation17 + $0x30] sm:$0xff]
    %v2978 = vld [vmem:[#allocation17 + $0x38] sm:$0xff]
    %v2979 = vld [vmem:[#allocation17 + $0x40] sm:$0xff]
    %v2980 = vld [vmem:[#allocation17 + $0x48] sm:$0xff]
    %v2981 = vld [vmem:[#allocation17 + $0x50] sm:$0xff]
    %v2982 = vld [vmem:[#allocation17 + $0x58] sm:$0xff]
    %v2983 = vld [vmem:[#allocation17 + $0x60] sm:$0xff]
    %v2984 = vld [vmem:[#allocation17 + $0x68] sm:$0xff]
    %v2985 = vld [vmem:[#allocation17 + $0x70] sm:$0xff]
    %v2986 = vld [vmem:[#allocation17 + $0x78] sm:$0xff]
    %v2987 = vld [vmem:[#allocation17 + $0x80] sm:$0xff]
    %v2988 = vld [vmem:[#allocation17 + $0x88] sm:$0xff]
    %v2989 = vld [vmem:[#allocation17 + $0x90] sm:$0xff]
    %v2990 = vld [vmem:[#allocation17 + $0x98] sm:$0xff]
    %v2991 = vld [vmem:[#allocation17 + $0xa0] sm:$0xff]
    %v2992 = vld [vmem:[#allocation17 + $0xa8] sm:$0xff]
    %v2993 = vld [vmem:[#allocation17 + $0xb0] sm:$0xff]
    %v2994 = vld [vmem:[#allocation17 + $0xb8] sm:$0xff]
    %v2995 = vld [vmem:[#allocation17 + $0xc0] sm:$0xff]
    %v2996 = vld [vmem:[#allocation17 + $0xc8] sm:$0xff]
    %v2997 = vld [vmem:[#allocation17 + $0xd0] sm:$0xff]
    %v2998 = vld [vmem:[#allocation17 + $0xd8] sm:$0xff]
    %v2999 = vld [vmem:[#allocation17 + $0xe0] sm:$0xff]
    %v3000 = vld [vmem:[#allocation17 + $0xe8] sm:$0xff]
    %v3001 = vld [vmem:[#allocation17 + $0xf0] sm:$0xff]
    %v3002 = vld [vmem:[#allocation17 + $0xf8] sm:$0xff]
    %v3003 = vld [vmem:[#allocation17 + $0x100] sm:$0xff]
    %v3004 = vld [vmem:[#allocation17 + $0x108] sm:$0xff]
    %v3005 = vld [vmem:[#allocation17 + $0x110] sm:$0xff]
    %v3006 = vld [vmem:[#allocation17 + $0x118] sm:$0xff]
    %v3007 = vld [vmem:[#allocation17 + $0x120] sm:$0xff]
    %v3008 = vld [vmem:[#allocation17 + $0x128] sm:$0xff]
    %v3009 = vld [vmem:[#allocation17 + $0x130] sm:$0xff]
    %v3010 = vld [vmem:[#allocation17 + $0x138] sm:$0xff]
    %v3011 = vld [vmem:[#allocation17 + $0x140] sm:$0xff]
    %v3012 = vld [vmem:[#allocation17 + $0x148] sm:$0xff]
    %v3013 = vld [vmem:[#allocation17 + $0x150] sm:$0xff]
    %v3014 = vld [vmem:[#allocation17 + $0x158] sm:$0xff]
    %v3015 = vld [vmem:[#allocation17 + $0x160] sm:$0xff]
    %v3016 = vld [vmem:[#allocation17 + $0x168] sm:$0xff]
    %v3017 = vld [vmem:[#allocation17 + $0x170] sm:$0xff]
    %v3018 = vld [vmem:[#allocation17 + $0x178] sm:$0xff]
    %v3019 = vld [vmem:[#allocation17 + $0x180] sm:$0xff]
    %v3020 = vld [vmem:[#allocation17 + $0x188] sm:$0xff]
    %v3021 = vld [vmem:[#allocation17 + $0x190] sm:$0xff]
    %v3022 = vld [vmem:[#allocation17 + $0x198] sm:$0xff]
    %v3023 = vld [vmem:[#allocation17 + $0x1a0] sm:$0xff]
    %v3024 = vld [vmem:[#allocation17 + $0x1a8] sm:$0xff]
    %v3025 = vld [vmem:[#allocation17 + $0x1b0] sm:$0xff]
    %v3026 = vld [vmem:[#allocation17 + $0x1b8] sm:$0xff]
    %v3027 = vld [vmem:[#allocation17 + $0x1c0] sm:$0xff]
    %v3028 = vld [vmem:[#allocation17 + $0x1c8] sm:$0xff]
    %v3029 = vld [vmem:[#allocation17 + $0x1d0] sm:$0xff]
    %v3030 = vld [vmem:[#allocation17 + $0x1d8] sm:$0xff]
    %v3031 = vld [vmem:[#allocation17 + $0x1e0] sm:$0xff]
    %v3032 = vld [vmem:[#allocation17 + $0x1e8] sm:$0xff]
    %v3033 = vld [vmem:[#allocation17 + $0x1f0] sm:$0xff]
    %v3034 = vld [vmem:[#allocation17 + $0x1f8] sm:$0xff]
    %3035 = vmatpush.msra.mxu0 %v3031
    %3036 = vmatpush.msra.mxu0 %v3027
    %3037 = vmatpush.msra.mxu0 %v3023
    %3038 = vmatpush.msra.mxu0 %v3019
    %3039 = vmatpush.msra.mxu0 %v3015
    %3040 = vmatpush.msra.mxu0 %v3011
    %3041 = vmatpush.msra.mxu0 %v3007
    %3042 = vmatpush.msra.mxu0 %v3003
    %3043 = vmatpush.msra.mxu0 %v2999
    %3044 = vmatpush.msra.mxu0 %v2995
    %3045 = vmatpush.msra.mxu0 %v2991
    %3046 = vmatpush.msra.mxu0 %v2987
    %3047 = vmatpush.msra.mxu0 %v2983
    %3048 = vmatpush.msra.mxu0 %v2979
    %3049 = vmatpush.msra.mxu0 %v2975
    %3050 = vmatpush.msra.mxu0 %v2971
    %3051 = vmatmul.f32.gmra.mxu0 %v2822
    %v3052 = vpop.f32.mrf.mxu0
    %v3053 = vadd.f32 0.0, %v3052
    %3054 = vdwg.mxu0
    %3055 = vmatpush.msra.mxu0 %v3032
    %3056 = vmatpush.msra.mxu0 %v3028
    %3057 = vmatpush.msra.mxu0 %v3024
    %3058 = vmatpush.msra.mxu0 %v3020
    %3059 = vmatpush.msra.mxu0 %v3016
    %3060 = vmatpush.msra.mxu0 %v3012
    %3061 = vmatpush.msra.mxu0 %v3008
    %3062 = vmatpush.msra.mxu0 %v3004
    %3063 = vmatpush.msra.mxu0 %v3000
    %3064 = vmatpush.msra.mxu0 %v2996
    %3065 = vmatpush.msra.mxu0 %v2992
    %3066 = vmatpush.msra.mxu0 %v2988
    %3067 = vmatpush.msra.mxu0 %v2984
    %3068 = vmatpush.msra.mxu0 %v2980
    %3069 = vmatpush.msra.mxu0 %v2976
    %3070 = vmatpush.msra.mxu0 %v2972
    %3071 = vmatmul.f32.gmra.mxu0 %v2822
    %v3072 = vpop.f32.mrf.mxu0
    %v3073 = vadd.f32 0.0, %v3072
    %3074 = vdwg.mxu0
    %3075 = vmatpush.msra.mxu0 %v3033
    %3076 = vmatpush.msra.mxu0 %v3029
    %3077 = vmatpush.msra.mxu0 %v3025
    %3078 = vmatpush.msra.mxu0 %v3021
    %3079 = vmatpush.msra.mxu0 %v3017
    %3080 = vmatpush.msra.mxu0 %v3013
    %3081 = vmatpush.msra.mxu0 %v3009
    %3082 = vmatpush.msra.mxu0 %v3005
    %3083 = vmatpush.msra.mxu0 %v3001
    %3084 = vmatpush.msra.mxu0 %v2997
    %3085 = vmatpush.msra.mxu0 %v2993
    %3086 = vmatpush.msra.mxu0 %v2989
    %3087 = vmatpush.msra.mxu0 %v2985
    %3088 = vmatpush.msra.mxu0 %v2981
    %3089 = vmatpush.msra.mxu0 %v2977
    %3090 = vmatpush.msra.mxu0 %v2973
    %3091 = vmatmul.f32.gmra.mxu0 %v2822
    %v3092 = vpop.f32.mrf.mxu0
    %v3093 = vadd.f32 0.0, %v3092
    %3094 = vdwg.mxu0
    %3095 = vmatpush.msra.mxu0 %v3034
    %3096 = vmatpush.msra.mxu0 %v3030
    %3097 = vmatpush.msra.mxu0 %v3026
    %3098 = vmatpush.msra.mxu0 %v3022
    %3099 = vmatpush.msra.mxu0 %v3018
    %3100 = vmatpush.msra.mxu0 %v3014
    %3101 = vmatpush.msra.mxu0 %v3010
    %3102 = vmatpush.msra.mxu0 %v3006
    %3103 = vmatpush.msra.mxu0 %v3002
    %3104 = vmatpush.msra.mxu0 %v2998
    %3105 = vmatpush.msra.mxu0 %v2994
    %3106 = vmatpush.msra.mxu0 %v2990
    %3107 = vmatpush.msra.mxu0 %v2986
    %3108 = vmatpush.msra.mxu0 %v2982
    %3109 = vmatpush.msra.mxu0 %v2978
    %3110 = vmatpush.msra.mxu0 %v2974
    %3111 = vmatmul.f32.gmra.mxu0 %v2822
    %v3112 = vpop.f32.mrf.mxu0
    %v3113 = vadd.f32 0.0, %v3112
    %3114 = vdwg.mxu0
    %s3115 = scalar_lea.vmem [#allocation2], 160
    %v3116 = vld [vmem:[%s3115] sm:$0xff]
    %v3117 = vld [vmem:[%s3115 + $0x8] sm:$0xff]
    %v3118 = vld [vmem:[%s3115 + $0x10] sm:$0xff]
    %v3119 = vld [vmem:[%s3115 + $0x18] sm:$0xff]
    %v3120 = vadd.f32 %v3116, %v2909
    %v3121 = vadd.f32 %v3117, %v2929
    %v3122 = vadd.f32 %v3118, %v2949
    %v3123 = vadd.f32 %v3119, %v2969
    %s3124 = scalar_lea.vmem [#allocation3], 64
    %v3125 = vld [vmem:[%s3124] sm:$0xff]
    %v3126 = vld [vmem:[%s3124 + $0x8] sm:$0xff]
    %v3127 = vld [vmem:[%s3124 + $0x10] sm:$0xff]
    %v3128 = vld [vmem:[%s3124 + $0x18] sm:$0xff]
    %v3129 = vadd.f32 %v3125, %v3053
    %v3130 = vadd.f32 %v3126, %v3073
    %v3131 = vadd.f32 %v3127, %v3093
    %v3132 = vadd.f32 %v3128, %v3113
    %v3133 = vxor.u32 %v3120, 2147483648
    %v3134 = vmul.f32 %v3133, 1.442695
    %v3135 = vpow.pop %v3134
    %v3136 = vadd.f32 %v3135, 1.0
    %v3137 = vrcp.pop %v3136
    %v3138 = vmul.f32 %v3136, %v3137
    %v3139 = vsub.f32 1.0, %v3138
    %v3140 = vmul.f32 %v3137, %v3139
    %v3141 = vadd.f32 %v3137, %v3140
    %vm3142 = vweird.f32 %v3136
    %vm3143 = vweird.f32 %v3137
    %vm3144 = vmor %vm3142, %vm3143
    %v3145 = vsel %vm3144, %v3137, %v3141
    %v3146 = vand.u32 2147483647, %v3136
    %vm3147 = vcmp.eq.f32.partialorder %v3146, 8.507059e+37
    %v3148 = vand.u32 %v3136, 2147483648
    %v3149 = vor.u32 1.1754944e-38, %v3148
    %v3150 = vsel %vm3147, %v3149, %v3145
    %v3151 = vmul.f32 1.0, %v3150
    %v3152 = vxor.u32 %v3121, 2147483648
    %v3153 = vmul.f32 %v3152, 1.442695
    %v3154 = vpow.pop %v3153
    %v3155 = vadd.f32 %v3154, 1.0
    %v3156 = vrcp.pop %v3155
    %v3157 = vmul.f32 %v3155, %v3156
    %v3158 = vsub.f32 1.0, %v3157
    %v3159 = vmul.f32 %v3156, %v3158
    %v3160 = vadd.f32 %v3156, %v3159
    %vm3161 = vweird.f32 %v3155
    %vm3162 = vweird.f32 %v3156
    %vm3163 = vmor %vm3161, %vm3162
    %v3164 = vsel %vm3163, %v3156, %v3160
    %v3165 = vand.u32 2147483647, %v3155
    %vm3166 = vcmp.eq.f32.partialorder %v3165, 8.507059e+37
    %v3167 = vand.u32 %v3155, 2147483648
    %v3168 = vor.u32 1.1754944e-38, %v3167
    %v3169 = vsel %vm3166, %v3168, %v3164
    %v3170 = vmul.f32 1.0, %v3169
    %v3171 = vtanh.pop %v3122
    %v3172 = vxor.u32 %v3123, 2147483648
    %v3173 = vmul.f32 %v3172, 1.442695
    %v3174 = vpow.pop %v3173
    %v3175 = vadd.f32 %v3174, 1.0
    %v3176 = vrcp.pop %v3175
    %v3177 = vmul.f32 %v3175, %v3176
    %v3178 = vsub.f32 1.0, %v3177
    %v3179 = vmul.f32 %v3176, %v3178
    %v3180 = vadd.f32 %v3176, %v3179
    %vm3181 = vweird.f32 %v3175
    %vm3182 = vweird.f32 %v3176
    %vm3183 = vmor %vm3181, %vm3182
    %v3184 = vsel %vm3183, %v3176, %v3180
    %v3185 = vand.u32 2147483647, %v3175
    %vm3186 = vcmp.eq.f32.partialorder %v3185, 8.507059e+37
    %v3187 = vand.u32 %v3175, 2147483648
    %v3188 = vor.u32 1.1754944e-38, %v3187
    %v3189 = vsel %vm3186, %v3188, %v3184
    %v3190 = vmul.f32 1.0, %v3189
    %v3191 = vmul.f32 %v3170, %v2757
    %v3192 = vmul.f32 %v3151, %v3171
    %v3193 = vadd.f32 %v3191, %v3192
    %v3194 = vtanh.pop %v3193
    %v3195 = vmul.f32 %v3190, %v3194
    %v3196 = vxor.u32 %v3129, 2147483648
    %v3197 = vmul.f32 %v3196, 1.442695
    %v3198 = vpow.pop %v3197
    %v3199 = vadd.f32 %v3198, 1.0
    %v3200 = vrcp.pop %v3199
    %v3201 = vmul.f32 %v3199, %v3200
    %v3202 = vsub.f32 1.0, %v3201
    %v3203 = vmul.f32 %v3200, %v3202
    %v3204 = vadd.f32 %v3200, %v3203
    %vm3205 = vweird.f32 %v3199
    %vm3206 = vweird.f32 %v3200
    %vm3207 = vmor %vm3205, %vm3206
    %v3208 = vsel %vm3207, %v3200, %v3204
    %v3209 = vand.u32 2147483647, %v3199
    %vm3210 = vcmp.eq.f32.partialorder %v3209, 8.507059e+37
    %v3211 = vand.u32 %v3199, 2147483648
    %v3212 = vor.u32 1.1754944e-38, %v3211
    %v3213 = vsel %vm3210, %v3212, %v3208
    %v3214 = vmul.f32 1.0, %v3213
    %v3215 = vxor.u32 %v3130, 2147483648
    %v3216 = vmul.f32 %v3215, 1.442695
    %v3217 = vpow.pop %v3216
    %v3218 = vadd.f32 %v3217, 1.0
    %v3219 = vrcp.pop %v3218
    %v3220 = vmul.f32 %v3218, %v3219
    %v3221 = vsub.f32 1.0, %v3220
    %v3222 = vmul.f32 %v3219, %v3221
    %v3223 = vadd.f32 %v3219, %v3222
    %vm3224 = vweird.f32 %v3218
    %vm3225 = vweird.f32 %v3219
    %vm3226 = vmor %vm3224, %vm3225
    %v3227 = vsel %vm3226, %v3219, %v3223
    %v3228 = vand.u32 2147483647, %v3218
    %vm3229 = vcmp.eq.f32.partialorder %v3228, 8.507059e+37
    %v3230 = vand.u32 %v3218, 2147483648
    %v3231 = vor.u32 1.1754944e-38, %v3230
    %v3232 = vsel %vm3229, %v3231, %v3227
    %v3233 = vmul.f32 1.0, %v3232
    %v3234 = vtanh.pop %v3131
    %v3235 = vxor.u32 %v3132, 2147483648
    %v3236 = vmul.f32 %v3235, 1.442695
    %v3237 = vpow.pop %v3236
    %v3238 = vadd.f32 %v3237, 1.0
    %v3239 = vrcp.pop %v3238
    %v3240 = vmul.f32 %v3238, %v3239
    %v3241 = vsub.f32 1.0, %v3240
    %v3242 = vmul.f32 %v3239, %v3241
    %v3243 = vadd.f32 %v3239, %v3242
    %vm3244 = vweird.f32 %v3238
    %vm3245 = vweird.f32 %v3239
    %vm3246 = vmor %vm3244, %vm3245
    %v3247 = vsel %vm3246, %v3239, %v3243
    %v3248 = vand.u32 2147483647, %v3238
    %vm3249 = vcmp.eq.f32.partialorder %v3248, 8.507059e+37
    %v3250 = vand.u32 %v3238, 2147483648
    %v3251 = vor.u32 1.1754944e-38, %v3250
    %v3252 = vsel %vm3249, %v3251, %v3247
    %v3253 = vmul.f32 1.0, %v3252
    %v3254 = vmul.f32 %v3233, %v2820
    %v3255 = vmul.f32 %v3214, %v3234
    %v3256 = vadd.f32 %v3254, %v3255
    %v3257 = vtanh.pop %v3256
    %v3258 = vmul.f32 %v3253, %v3257
    %s3259 = scalar_lea.vmem [#allocation4], 40
    %3260 = vst [vmem:[%s3259] sm:$0xff] %v3195
    %s3261 = scalar_lea.vmem [#allocation5], 16
    %3262 = vst [vmem:[%s3261] sm:$0xff] %v3258
    %v3263 = vld [vmem:[#allocation15] sm:$0xff]
    %v3264 = vld [vmem:[#allocation15 + $0x8] sm:$0xff]
    %v3265 = vld [vmem:[#allocation15 + $0x10] sm:$0xff]
    %v3266 = vld [vmem:[#allocation15 + $0x18] sm:$0xff]
    %v3267 = vld [vmem:[#allocation15 + $0x20] sm:$0xff]
    %v3268 = vld [vmem:[#allocation15 + $0x28] sm:$0xff]
    %v3269 = vld [vmem:[#allocation15 + $0x30] sm:$0xff]
    %v3270 = vld [vmem:[#allocation15 + $0x38] sm:$0xff]
    %v3271 = vld [vmem:[#allocation15 + $0x40] sm:$0xff]
    %v3272 = vld [vmem:[#allocation15 + $0x48] sm:$0xff]
    %v3273 = vld [vmem:[#allocation15 + $0x50] sm:$0xff]
    %v3274 = vld [vmem:[#allocation15 + $0x58] sm:$0xff]
    %v3275 = vld [vmem:[#allocation15 + $0x60] sm:$0xff]
    %v3276 = vld [vmem:[#allocation15 + $0x68] sm:$0xff]
    %v3277 = vld [vmem:[#allocation15 + $0x70] sm:$0xff]
    %v3278 = vld [vmem:[#allocation15 + $0x78] sm:$0xff]
    %v3279 = vld [vmem:[#allocation15 + $0x80] sm:$0xff]
    %v3280 = vld [vmem:[#allocation15 + $0x88] sm:$0xff]
    %v3281 = vld [vmem:[#allocation15 + $0x90] sm:$0xff]
    %v3282 = vld [vmem:[#allocation15 + $0x98] sm:$0xff]
    %v3283 = vld [vmem:[#allocation15 + $0xa0] sm:$0xff]
    %v3284 = vld [vmem:[#allocation15 + $0xa8] sm:$0xff]
    %v3285 = vld [vmem:[#allocation15 + $0xb0] sm:$0xff]
    %v3286 = vld [vmem:[#allocation15 + $0xb8] sm:$0xff]
    %v3287 = vld [vmem:[#allocation15 + $0xc0] sm:$0xff]
    %v3288 = vld [vmem:[#allocation15 + $0xc8] sm:$0xff]
    %v3289 = vld [vmem:[#allocation15 + $0xd0] sm:$0xff]
    %v3290 = vld [vmem:[#allocation15 + $0xd8] sm:$0xff]
    %v3291 = vld [vmem:[#allocation15 + $0xe0] sm:$0xff]
    %v3292 = vld [vmem:[#allocation15 + $0xe8] sm:$0xff]
    %v3293 = vld [vmem:[#allocation15 + $0xf0] sm:$0xff]
    %v3294 = vld [vmem:[#allocation15 + $0xf8] sm:$0xff]
    %v3295 = vld [vmem:[#allocation15 + $0x100] sm:$0xff]
    %v3296 = vld [vmem:[#allocation15 + $0x108] sm:$0xff]
    %v3297 = vld [vmem:[#allocation15 + $0x110] sm:$0xff]
    %v3298 = vld [vmem:[#allocation15 + $0x118] sm:$0xff]
    %v3299 = vld [vmem:[#allocation15 + $0x120] sm:$0xff]
    %v3300 = vld [vmem:[#allocation15 + $0x128] sm:$0xff]
    %v3301 = vld [vmem:[#allocation15 + $0x130] sm:$0xff]
    %v3302 = vld [vmem:[#allocation15 + $0x138] sm:$0xff]
    %v3303 = vld [vmem:[#allocation15 + $0x140] sm:$0xff]
    %v3304 = vld [vmem:[#allocation15 + $0x148] sm:$0xff]
    %v3305 = vld [vmem:[#allocation15 + $0x150] sm:$0xff]
    %v3306 = vld [vmem:[#allocation15 + $0x158] sm:$0xff]
    %v3307 = vld [vmem:[#allocation15 + $0x160] sm:$0xff]
    %v3308 = vld [vmem:[#allocation15 + $0x168] sm:$0xff]
    %v3309 = vld [vmem:[#allocation15 + $0x170] sm:$0xff]
    %v3310 = vld [vmem:[#allocation15 + $0x178] sm:$0xff]
    %v3311 = vld [vmem:[#allocation15 + $0x180] sm:$0xff]
    %v3312 = vld [vmem:[#allocation15 + $0x188] sm:$0xff]
    %v3313 = vld [vmem:[#allocation15 + $0x190] sm:$0xff]
    %v3314 = vld [vmem:[#allocation15 + $0x198] sm:$0xff]
    %v3315 = vld [vmem:[#allocation15 + $0x1a0] sm:$0xff]
    %v3316 = vld [vmem:[#allocation15 + $0x1a8] sm:$0xff]
    %v3317 = vld [vmem:[#allocation15 + $0x1b0] sm:$0xff]
    %v3318 = vld [vmem:[#allocation15 + $0x1b8] sm:$0xff]
    %v3319 = vld [vmem:[#allocation15 + $0x1c0] sm:$0xff]
    %v3320 = vld [vmem:[#allocation15 + $0x1c8] sm:$0xff]
    %v3321 = vld [vmem:[#allocation15 + $0x1d0] sm:$0xff]
    %v3322 = vld [vmem:[#allocation15 + $0x1d8] sm:$0xff]
    %v3323 = vld [vmem:[#allocation15 + $0x1e0] sm:$0xff]
    %v3324 = vld [vmem:[#allocation15 + $0x1e8] sm:$0xff]
    %v3325 = vld [vmem:[#allocation15 + $0x1f0] sm:$0xff]
    %v3326 = vld [vmem:[#allocation15 + $0x1f8] sm:$0xff]
    %3327 = vmatpush.msra.mxu0 %v3323
    %3328 = vmatpush.msra.mxu0 %v3319
    %3329 = vmatpush.msra.mxu0 %v3315
    %3330 = vmatpush.msra.mxu0 %v3311
    %3331 = vmatpush.msra.mxu0 %v3307
    %3332 = vmatpush.msra.mxu0 %v3303
    %3333 = vmatpush.msra.mxu0 %v3299
    %3334 = vmatpush.msra.mxu0 %v3295
    %3335 = vmatpush.msra.mxu0 %v3291
    %3336 = vmatpush.msra.mxu0 %v3287
    %3337 = vmatpush.msra.mxu0 %v3283
    %3338 = vmatpush.msra.mxu0 %v3279
    %3339 = vmatpush.msra.mxu0 %v3275
    %3340 = vmatpush.msra.mxu0 %v3271
    %3341 = vmatpush.msra.mxu0 %v3267
    %3342 = vmatpush.msra.mxu0 %v3263
    %3343 = vmatmul.f32.gmra.mxu0 %v3195
    %v3344 = vpop.f32.mrf.mxu0
    %v3345 = vadd.f32 0.0, %v3344
    %3346 = vdwg.mxu0
    %3347 = vmatpush.msra.mxu0 %v3324
    %3348 = vmatpush.msra.mxu0 %v3320
    %3349 = vmatpush.msra.mxu0 %v3316
    %3350 = vmatpush.msra.mxu0 %v3312
    %3351 = vmatpush.msra.mxu0 %v3308
    %3352 = vmatpush.msra.mxu0 %v3304
    %3353 = vmatpush.msra.mxu0 %v3300
    %3354 = vmatpush.msra.mxu0 %v3296
    %3355 = vmatpush.msra.mxu0 %v3292
    %3356 = vmatpush.msra.mxu0 %v3288
    %3357 = vmatpush.msra.mxu0 %v3284
    %3358 = vmatpush.msra.mxu0 %v3280
    %3359 = vmatpush.msra.mxu0 %v3276
    %3360 = vmatpush.msra.mxu0 %v3272
    %3361 = vmatpush.msra.mxu0 %v3268
    %3362 = vmatpush.msra.mxu0 %v3264
    %3363 = vmatmul.f32.gmra.mxu0 %v3195
    %v3364 = vpop.f32.mrf.mxu0
    %v3365 = vadd.f32 0.0, %v3364
    %3366 = vdwg.mxu0
    %3367 = vmatpush.msra.mxu0 %v3325
    %3368 = vmatpush.msra.mxu0 %v3321
    %3369 = vmatpush.msra.mxu0 %v3317
    %3370 = vmatpush.msra.mxu0 %v3313
    %3371 = vmatpush.msra.mxu0 %v3309
    %3372 = vmatpush.msra.mxu0 %v3305
    %3373 = vmatpush.msra.mxu0 %v3301
    %3374 = vmatpush.msra.mxu0 %v3297
    %3375 = vmatpush.msra.mxu0 %v3293
    %3376 = vmatpush.msra.mxu0 %v3289
    %3377 = vmatpush.msra.mxu0 %v3285
    %3378 = vmatpush.msra.mxu0 %v3281
    %3379 = vmatpush.msra.mxu0 %v3277
    %3380 = vmatpush.msra.mxu0 %v3273
    %3381 = vmatpush.msra.mxu0 %v3269
    %3382 = vmatpush.msra.mxu0 %v3265
    %3383 = vmatmul.f32.gmra.mxu0 %v3195
    %v3384 = vpop.f32.mrf.mxu0
    %v3385 = vadd.f32 0.0, %v3384
    %3386 = vdwg.mxu0
    %3387 = vmatpush.msra.mxu0 %v3326
    %3388 = vmatpush.msra.mxu0 %v3322
    %3389 = vmatpush.msra.mxu0 %v3318
    %3390 = vmatpush.msra.mxu0 %v3314
    %3391 = vmatpush.msra.mxu0 %v3310
    %3392 = vmatpush.msra.mxu0 %v3306
    %3393 = vmatpush.msra.mxu0 %v3302
    %3394 = vmatpush.msra.mxu0 %v3298
    %3395 = vmatpush.msra.mxu0 %v3294
    %3396 = vmatpush.msra.mxu0 %v3290
    %3397 = vmatpush.msra.mxu0 %v3286
    %3398 = vmatpush.msra.mxu0 %v3282
    %3399 = vmatpush.msra.mxu0 %v3278
    %3400 = vmatpush.msra.mxu0 %v3274
    %3401 = vmatpush.msra.mxu0 %v3270
    %3402 = vmatpush.msra.mxu0 %v3266
    %3403 = vmatmul.f32.gmra.mxu0 %v3195
    %v3404 = vpop.f32.mrf.mxu0
    %v3405 = vadd.f32 0.0, %v3404
    %3406 = vdwg.mxu0
    %v3407 = vld [vmem:[#allocation17] sm:$0xff]
    %v3408 = vld [vmem:[#allocation17 + $0x8] sm:$0xff]
    %v3409 = vld [vmem:[#allocation17 + $0x10] sm:$0xff]
    %v3410 = vld [vmem:[#allocation17 + $0x18] sm:$0xff]
    %v3411 = vld [vmem:[#allocation17 + $0x20] sm:$0xff]
    %v3412 = vld [vmem:[#allocation17 + $0x28] sm:$0xff]
    %v3413 = vld [vmem:[#allocation17 + $0x30] sm:$0xff]
    %v3414 = vld [vmem:[#allocation17 + $0x38] sm:$0xff]
    %v3415 = vld [vmem:[#allocation17 + $0x40] sm:$0xff]
    %v3416 = vld [vmem:[#allocation17 + $0x48] sm:$0xff]
    %v3417 = vld [vmem:[#allocation17 + $0x50] sm:$0xff]
    %v3418 = vld [vmem:[#allocation17 + $0x58] sm:$0xff]
    %v3419 = vld [vmem:[#allocation17 + $0x60] sm:$0xff]
    %v3420 = vld [vmem:[#allocation17 + $0x68] sm:$0xff]
    %v3421 = vld [vmem:[#allocation17 + $0x70] sm:$0xff]
    %v3422 = vld [vmem:[#allocation17 + $0x78] sm:$0xff]
    %v3423 = vld [vmem:[#allocation17 + $0x80] sm:$0xff]
    %v3424 = vld [vmem:[#allocation17 + $0x88] sm:$0xff]
    %v3425 = vld [vmem:[#allocation17 + $0x90] sm:$0xff]
    %v3426 = vld [vmem:[#allocation17 + $0x98] sm:$0xff]
    %v3427 = vld [vmem:[#allocation17 + $0xa0] sm:$0xff]
    %v3428 = vld [vmem:[#allocation17 + $0xa8] sm:$0xff]
    %v3429 = vld [vmem:[#allocation17 + $0xb0] sm:$0xff]
    %v3430 = vld [vmem:[#allocation17 + $0xb8] sm:$0xff]
    %v3431 = vld [vmem:[#allocation17 + $0xc0] sm:$0xff]
    %v3432 = vld [vmem:[#allocation17 + $0xc8] sm:$0xff]
    %v3433 = vld [vmem:[#allocation17 + $0xd0] sm:$0xff]
    %v3434 = vld [vmem:[#allocation17 + $0xd8] sm:$0xff]
    %v3435 = vld [vmem:[#allocation17 + $0xe0] sm:$0xff]
    %v3436 = vld [vmem:[#allocation17 + $0xe8] sm:$0xff]
    %v3437 = vld [vmem:[#allocation17 + $0xf0] sm:$0xff]
    %v3438 = vld [vmem:[#allocation17 + $0xf8] sm:$0xff]
    %v3439 = vld [vmem:[#allocation17 + $0x100] sm:$0xff]
    %v3440 = vld [vmem:[#allocation17 + $0x108] sm:$0xff]
    %v3441 = vld [vmem:[#allocation17 + $0x110] sm:$0xff]
    %v3442 = vld [vmem:[#allocation17 + $0x118] sm:$0xff]
    %v3443 = vld [vmem:[#allocation17 + $0x120] sm:$0xff]
    %v3444 = vld [vmem:[#allocation17 + $0x128] sm:$0xff]
    %v3445 = vld [vmem:[#allocation17 + $0x130] sm:$0xff]
    %v3446 = vld [vmem:[#allocation17 + $0x138] sm:$0xff]
    %v3447 = vld [vmem:[#allocation17 + $0x140] sm:$0xff]
    %v3448 = vld [vmem:[#allocation17 + $0x148] sm:$0xff]
    %v3449 = vld [vmem:[#allocation17 + $0x150] sm:$0xff]
    %v3450 = vld [vmem:[#allocation17 + $0x158] sm:$0xff]
    %v3451 = vld [vmem:[#allocation17 + $0x160] sm:$0xff]
    %v3452 = vld [vmem:[#allocation17 + $0x168] sm:$0xff]
    %v3453 = vld [vmem:[#allocation17 + $0x170] sm:$0xff]
    %v3454 = vld [vmem:[#allocation17 + $0x178] sm:$0xff]
    %v3455 = vld [vmem:[#allocation17 + $0x180] sm:$0xff]
    %v3456 = vld [vmem:[#allocation17 + $0x188] sm:$0xff]
    %v3457 = vld [vmem:[#allocation17 + $0x190] sm:$0xff]
    %v3458 = vld [vmem:[#allocation17 + $0x198] sm:$0xff]
    %v3459 = vld [vmem:[#allocation17 + $0x1a0] sm:$0xff]
    %v3460 = vld [vmem:[#allocation17 + $0x1a8] sm:$0xff]
    %v3461 = vld [vmem:[#allocation17 + $0x1b0] sm:$0xff]
    %v3462 = vld [vmem:[#allocation17 + $0x1b8] sm:$0xff]
    %v3463 = vld [vmem:[#allocation17 + $0x1c0] sm:$0xff]
    %v3464 = vld [vmem:[#allocation17 + $0x1c8] sm:$0xff]
    %v3465 = vld [vmem:[#allocation17 + $0x1d0] sm:$0xff]
    %v3466 = vld [vmem:[#allocation17 + $0x1d8] sm:$0xff]
    %v3467 = vld [vmem:[#allocation17 + $0x1e0] sm:$0xff]
    %v3468 = vld [vmem:[#allocation17 + $0x1e8] sm:$0xff]
    %v3469 = vld [vmem:[#allocation17 + $0x1f0] sm:$0xff]
    %v3470 = vld [vmem:[#allocation17 + $0x1f8] sm:$0xff]
    %3471 = vmatpush.msra.mxu0 %v3467
    %3472 = vmatpush.msra.mxu0 %v3463
    %3473 = vmatpush.msra.mxu0 %v3459
    %3474 = vmatpush.msra.mxu0 %v3455
    %3475 = vmatpush.msra.mxu0 %v3451
    %3476 = vmatpush.msra.mxu0 %v3447
    %3477 = vmatpush.msra.mxu0 %v3443
    %3478 = vmatpush.msra.mxu0 %v3439
    %3479 = vmatpush.msra.mxu0 %v3435
    %3480 = vmatpush.msra.mxu0 %v3431
    %3481 = vmatpush.msra.mxu0 %v3427
    %3482 = vmatpush.msra.mxu0 %v3423
    %3483 = vmatpush.msra.mxu0 %v3419
    %3484 = vmatpush.msra.mxu0 %v3415
    %3485 = vmatpush.msra.mxu0 %v3411
    %3486 = vmatpush.msra.mxu0 %v3407
    %3487 = vmatmul.f32.gmra.mxu0 %v3258
    %v3488 = vpop.f32.mrf.mxu0
    %v3489 = vadd.f32 0.0, %v3488
    %3490 = vdwg.mxu0
    %3491 = vmatpush.msra.mxu0 %v3468
    %3492 = vmatpush.msra.mxu0 %v3464
    %3493 = vmatpush.msra.mxu0 %v3460
    %3494 = vmatpush.msra.mxu0 %v3456
    %3495 = vmatpush.msra.mxu0 %v3452
    %3496 = vmatpush.msra.mxu0 %v3448
    %3497 = vmatpush.msra.mxu0 %v3444
    %3498 = vmatpush.msra.mxu0 %v3440
    %3499 = vmatpush.msra.mxu0 %v3436
    %3500 = vmatpush.msra.mxu0 %v3432
    %3501 = vmatpush.msra.mxu0 %v3428
    %3502 = vmatpush.msra.mxu0 %v3424
    %3503 = vmatpush.msra.mxu0 %v3420
    %3504 = vmatpush.msra.mxu0 %v3416
    %3505 = vmatpush.msra.mxu0 %v3412
    %3506 = vmatpush.msra.mxu0 %v3408
    %3507 = vmatmul.f32.gmra.mxu0 %v3258
    %v3508 = vpop.f32.mrf.mxu0
    %v3509 = vadd.f32 0.0, %v3508
    %3510 = vdwg.mxu0
    %3511 = vmatpush.msra.mxu0 %v3469
    %3512 = vmatpush.msra.mxu0 %v3465
    %3513 = vmatpush.msra.mxu0 %v3461
    %3514 = vmatpush.msra.mxu0 %v3457
    %3515 = vmatpush.msra.mxu0 %v3453
    %3516 = vmatpush.msra.mxu0 %v3449
    %3517 = vmatpush.msra.mxu0 %v3445
    %3518 = vmatpush.msra.mxu0 %v3441
    %3519 = vmatpush.msra.mxu0 %v3437
    %3520 = vmatpush.msra.mxu0 %v3433
    %3521 = vmatpush.msra.mxu0 %v3429
    %3522 = vmatpush.msra.mxu0 %v3425
    %3523 = vmatpush.msra.mxu0 %v3421
    %3524 = vmatpush.msra.mxu0 %v3417
    %3525 = vmatpush.msra.mxu0 %v3413
    %3526 = vmatpush.msra.mxu0 %v3409
    %3527 = vmatmul.f32.gmra.mxu0 %v3258
    %v3528 = vpop.f32.mrf.mxu0
    %v3529 = vadd.f32 0.0, %v3528
    %3530 = vdwg.mxu0
    %3531 = vmatpush.msra.mxu0 %v3470
    %3532 = vmatpush.msra.mxu0 %v3466
    %3533 = vmatpush.msra.mxu0 %v3462
    %3534 = vmatpush.msra.mxu0 %v3458
    %3535 = vmatpush.msra.mxu0 %v3454
    %3536 = vmatpush.msra.mxu0 %v3450
    %3537 = vmatpush.msra.mxu0 %v3446
    %3538 = vmatpush.msra.mxu0 %v3442
    %3539 = vmatpush.msra.mxu0 %v3438
    %3540 = vmatpush.msra.mxu0 %v3434
    %3541 = vmatpush.msra.mxu0 %v3430
    %3542 = vmatpush.msra.mxu0 %v3426
    %3543 = vmatpush.msra.mxu0 %v3422
    %3544 = vmatpush.msra.mxu0 %v3418
    %3545 = vmatpush.msra.mxu0 %v3414
    %3546 = vmatpush.msra.mxu0 %v3410
    %3547 = vmatmul.f32.gmra.mxu0 %v3258
    %v3548 = vpop.f32.mrf.mxu0
    %v3549 = vadd.f32 0.0, %v3548
    %3550 = vdwg.mxu0
    %s3551 = scalar_lea.vmem [#allocation2], 192
    %v3552 = vld [vmem:[%s3551] sm:$0xff]
    %v3553 = vld [vmem:[%s3551 + $0x8] sm:$0xff]
    %v3554 = vld [vmem:[%s3551 + $0x10] sm:$0xff]
    %v3555 = vld [vmem:[%s3551 + $0x18] sm:$0xff]
    %v3556 = vadd.f32 %v3552, %v3345
    %v3557 = vadd.f32 %v3553, %v3365
    %v3558 = vadd.f32 %v3554, %v3385
    %v3559 = vadd.f32 %v3555, %v3405
    %s3560 = scalar_lea.vmem [#allocation3], 32
    %v3561 = vld [vmem:[%s3560] sm:$0xff]
    %v3562 = vld [vmem:[%s3560 + $0x8] sm:$0xff]
    %v3563 = vld [vmem:[%s3560 + $0x10] sm:$0xff]
    %v3564 = vld [vmem:[%s3560 + $0x18] sm:$0xff]
    %v3565 = vadd.f32 %v3561, %v3489
    %v3566 = vadd.f32 %v3562, %v3509
    %v3567 = vadd.f32 %v3563, %v3529
    %v3568 = vadd.f32 %v3564, %v3549
    %v3569 = vxor.u32 %v3556, 2147483648
    %v3570 = vmul.f32 %v3569, 1.442695
    %v3571 = vpow.pop %v3570
    %v3572 = vadd.f32 %v3571, 1.0
    %v3573 = vrcp.pop %v3572
    %v3574 = vmul.f32 %v3572, %v3573
    %v3575 = vsub.f32 1.0, %v3574
    %v3576 = vmul.f32 %v3573, %v3575
    %v3577 = vadd.f32 %v3573, %v3576
    %vm3578 = vweird.f32 %v3572
    %vm3579 = vweird.f32 %v3573
    %vm3580 = vmor %vm3578, %vm3579
    %v3581 = vsel %vm3580, %v3573, %v3577
    %v3582 = vand.u32 2147483647, %v3572
    %vm3583 = vcmp.eq.f32.partialorder %v3582, 8.507059e+37
    %v3584 = vand.u32 %v3572, 2147483648
    %v3585 = vor.u32 1.1754944e-38, %v3584
    %v3586 = vsel %vm3583, %v3585, %v3581
    %v3587 = vmul.f32 1.0, %v3586
    %v3588 = vxor.u32 %v3557, 2147483648
    %v3589 = vmul.f32 %v3588, 1.442695
    %v3590 = vpow.pop %v3589
    %v3591 = vadd.f32 %v3590, 1.0
    %v3592 = vrcp.pop %v3591
    %v3593 = vmul.f32 %v3591, %v3592
    %v3594 = vsub.f32 1.0, %v3593
    %v3595 = vmul.f32 %v3592, %v3594
    %v3596 = vadd.f32 %v3592, %v3595
    %vm3597 = vweird.f32 %v3591
    %vm3598 = vweird.f32 %v3592
    %vm3599 = vmor %vm3597, %vm3598
    %v3600 = vsel %vm3599, %v3592, %v3596
    %v3601 = vand.u32 2147483647, %v3591
    %vm3602 = vcmp.eq.f32.partialorder %v3601, 8.507059e+37
    %v3603 = vand.u32 %v3591, 2147483648
    %v3604 = vor.u32 1.1754944e-38, %v3603
    %v3605 = vsel %vm3602, %v3604, %v3600
    %v3606 = vmul.f32 1.0, %v3605
    %v3607 = vtanh.pop %v3558
    %v3608 = vxor.u32 %v3559, 2147483648
    %v3609 = vmul.f32 %v3608, 1.442695
    %v3610 = vpow.pop %v3609
    %v3611 = vadd.f32 %v3610, 1.0
    %v3612 = vrcp.pop %v3611
    %v3613 = vmul.f32 %v3611, %v3612
    %v3614 = vsub.f32 1.0, %v3613
    %v3615 = vmul.f32 %v3612, %v3614
    %v3616 = vadd.f32 %v3612, %v3615
    %vm3617 = vweird.f32 %v3611
    %vm3618 = vweird.f32 %v3612
    %vm3619 = vmor %vm3617, %vm3618
    %v3620 = vsel %vm3619, %v3612, %v3616
    %v3621 = vand.u32 2147483647, %v3611
    %vm3622 = vcmp.eq.f32.partialorder %v3621, 8.507059e+37
    %v3623 = vand.u32 %v3611, 2147483648
    %v3624 = vor.u32 1.1754944e-38, %v3623
    %v3625 = vsel %vm3622, %v3624, %v3620
    %v3626 = vmul.f32 1.0, %v3625
    %v3627 = vmul.f32 %v3606, %v3193
    %v3628 = vmul.f32 %v3587, %v3607
    %v3629 = vadd.f32 %v3627, %v3628
    %v3630 = vtanh.pop %v3629
    %v3631 = vmul.f32 %v3626, %v3630
    %v3632 = vxor.u32 %v3565, 2147483648
    %v3633 = vmul.f32 %v3632, 1.442695
    %v3634 = vpow.pop %v3633
    %v3635 = vadd.f32 %v3634, 1.0
    %v3636 = vrcp.pop %v3635
    %v3637 = vmul.f32 %v3635, %v3636
    %v3638 = vsub.f32 1.0, %v3637
    %v3639 = vmul.f32 %v3636, %v3638
    %v3640 = vadd.f32 %v3636, %v3639
    %vm3641 = vweird.f32 %v3635
    %vm3642 = vweird.f32 %v3636
    %vm3643 = vmor %vm3641, %vm3642
    %v3644 = vsel %vm3643, %v3636, %v3640
    %v3645 = vand.u32 2147483647, %v3635
    %vm3646 = vcmp.eq.f32.partialorder %v3645, 8.507059e+37
    %v3647 = vand.u32 %v3635, 2147483648
    %v3648 = vor.u32 1.1754944e-38, %v3647
    %v3649 = vsel %vm3646, %v3648, %v3644
    %v3650 = vmul.f32 1.0, %v3649
    %v3651 = vxor.u32 %v3566, 2147483648
    %v3652 = vmul.f32 %v3651, 1.442695
    %v3653 = vpow.pop %v3652
    %v3654 = vadd.f32 %v3653, 1.0
    %v3655 = vrcp.pop %v3654
    %v3656 = vmul.f32 %v3654, %v3655
    %v3657 = vsub.f32 1.0, %v3656
    %v3658 = vmul.f32 %v3655, %v3657
    %v3659 = vadd.f32 %v3655, %v3658
    %vm3660 = vweird.f32 %v3654
    %vm3661 = vweird.f32 %v3655
    %vm3662 = vmor %vm3660, %vm3661
    %v3663 = vsel %vm3662, %v3655, %v3659
    %v3664 = vand.u32 2147483647, %v3654
    %vm3665 = vcmp.eq.f32.partialorder %v3664, 8.507059e+37
    %v3666 = vand.u32 %v3654, 2147483648
    %v3667 = vor.u32 1.1754944e-38, %v3666
    %v3668 = vsel %vm3665, %v3667, %v3663
    %v3669 = vmul.f32 1.0, %v3668
    %v3670 = vtanh.pop %v3567
    %v3671 = vxor.u32 %v3568, 2147483648
    %v3672 = vmul.f32 %v3671, 1.442695
    %v3673 = vpow.pop %v3672
    %v3674 = vadd.f32 %v3673, 1.0
    %v3675 = vrcp.pop %v3674
    %v3676 = vmul.f32 %v3674, %v3675
    %v3677 = vsub.f32 1.0, %v3676
    %v3678 = vmul.f32 %v3675, %v3677
    %v3679 = vadd.f32 %v3675, %v3678
    %vm3680 = vweird.f32 %v3674
    %vm3681 = vweird.f32 %v3675
    %vm3682 = vmor %vm3680, %vm3681
    %v3683 = vsel %vm3682, %v3675, %v3679
    %v3684 = vand.u32 2147483647, %v3674
    %vm3685 = vcmp.eq.f32.partialorder %v3684, 8.507059e+37
    %v3686 = vand.u32 %v3674, 2147483648
    %v3687 = vor.u32 1.1754944e-38, %v3686
    %v3688 = vsel %vm3685, %v3687, %v3683
    %v3689 = vmul.f32 1.0, %v3688
    %v3690 = vmul.f32 %v3669, %v3256
    %v3691 = vmul.f32 %v3650, %v3670
    %v3692 = vadd.f32 %v3690, %v3691
    %v3693 = vtanh.pop %v3692
    %v3694 = vmul.f32 %v3689, %v3693
    %s3695 = scalar_lea.vmem [#allocation4], 48
    %3696 = vst [vmem:[%s3695] sm:$0xff] %v3631
    %s3697 = scalar_lea.vmem [#allocation5], 8
    %3698 = vst [vmem:[%s3697] sm:$0xff] %v3694
    %v3699 = vld [vmem:[#allocation15] sm:$0xff]
    %v3700 = vld [vmem:[#allocation15 + $0x8] sm:$0xff]
    %v3701 = vld [vmem:[#allocation15 + $0x10] sm:$0xff]
    %v3702 = vld [vmem:[#allocation15 + $0x18] sm:$0xff]
    %v3703 = vld [vmem:[#allocation15 + $0x20] sm:$0xff]
    %v3704 = vld [vmem:[#allocation15 + $0x28] sm:$0xff]
    %v3705 = vld [vmem:[#allocation15 + $0x30] sm:$0xff]
    %v3706 = vld [vmem:[#allocation15 + $0x38] sm:$0xff]
    %v3707 = vld [vmem:[#allocation15 + $0x40] sm:$0xff]
    %v3708 = vld [vmem:[#allocation15 + $0x48] sm:$0xff]
    %v3709 = vld [vmem:[#allocation15 + $0x50] sm:$0xff]
    %v3710 = vld [vmem:[#allocation15 + $0x58] sm:$0xff]
    %v3711 = vld [vmem:[#allocation15 + $0x60] sm:$0xff]
    %v3712 = vld [vmem:[#allocation15 + $0x68] sm:$0xff]
    %v3713 = vld [vmem:[#allocation15 + $0x70] sm:$0xff]
    %v3714 = vld [vmem:[#allocation15 + $0x78] sm:$0xff]
    %v3715 = vld [vmem:[#allocation15 + $0x80] sm:$0xff]
    %v3716 = vld [vmem:[#allocation15 + $0x88] sm:$0xff]
    %v3717 = vld [vmem:[#allocation15 + $0x90] sm:$0xff]
    %v3718 = vld [vmem:[#allocation15 + $0x98] sm:$0xff]
    %v3719 = vld [vmem:[#allocation15 + $0xa0] sm:$0xff]
    %v3720 = vld [vmem:[#allocation15 + $0xa8] sm:$0xff]
    %v3721 = vld [vmem:[#allocation15 + $0xb0] sm:$0xff]
    %v3722 = vld [vmem:[#allocation15 + $0xb8] sm:$0xff]
    %v3723 = vld [vmem:[#allocation15 + $0xc0] sm:$0xff]
    %v3724 = vld [vmem:[#allocation15 + $0xc8] sm:$0xff]
    %v3725 = vld [vmem:[#allocation15 + $0xd0] sm:$0xff]
    %v3726 = vld [vmem:[#allocation15 + $0xd8] sm:$0xff]
    %v3727 = vld [vmem:[#allocation15 + $0xe0] sm:$0xff]
    %v3728 = vld [vmem:[#allocation15 + $0xe8] sm:$0xff]
    %v3729 = vld [vmem:[#allocation15 + $0xf0] sm:$0xff]
    %v3730 = vld [vmem:[#allocation15 + $0xf8] sm:$0xff]
    %v3731 = vld [vmem:[#allocation15 + $0x100] sm:$0xff]
    %v3732 = vld [vmem:[#allocation15 + $0x108] sm:$0xff]
    %v3733 = vld [vmem:[#allocation15 + $0x110] sm:$0xff]
    %v3734 = vld [vmem:[#allocation15 + $0x118] sm:$0xff]
    %v3735 = vld [vmem:[#allocation15 + $0x120] sm:$0xff]
    %v3736 = vld [vmem:[#allocation15 + $0x128] sm:$0xff]
    %v3737 = vld [vmem:[#allocation15 + $0x130] sm:$0xff]
    %v3738 = vld [vmem:[#allocation15 + $0x138] sm:$0xff]
    %v3739 = vld [vmem:[#allocation15 + $0x140] sm:$0xff]
    %v3740 = vld [vmem:[#allocation15 + $0x148] sm:$0xff]
    %v3741 = vld [vmem:[#allocation15 + $0x150] sm:$0xff]
    %v3742 = vld [vmem:[#allocation15 + $0x158] sm:$0xff]
    %v3743 = vld [vmem:[#allocation15 + $0x160] sm:$0xff]
    %v3744 = vld [vmem:[#allocation15 + $0x168] sm:$0xff]
    %v3745 = vld [vmem:[#allocation15 + $0x170] sm:$0xff]
    %v3746 = vld [vmem:[#allocation15 + $0x178] sm:$0xff]
    %v3747 = vld [vmem:[#allocation15 + $0x180] sm:$0xff]
    %v3748 = vld [vmem:[#allocation15 + $0x188] sm:$0xff]
    %v3749 = vld [vmem:[#allocation15 + $0x190] sm:$0xff]
    %v3750 = vld [vmem:[#allocation15 + $0x198] sm:$0xff]
    %v3751 = vld [vmem:[#allocation15 + $0x1a0] sm:$0xff]
    %v3752 = vld [vmem:[#allocation15 + $0x1a8] sm:$0xff]
    %v3753 = vld [vmem:[#allocation15 + $0x1b0] sm:$0xff]
    %v3754 = vld [vmem:[#allocation15 + $0x1b8] sm:$0xff]
    %v3755 = vld [vmem:[#allocation15 + $0x1c0] sm:$0xff]
    %v3756 = vld [vmem:[#allocation15 + $0x1c8] sm:$0xff]
    %v3757 = vld [vmem:[#allocation15 + $0x1d0] sm:$0xff]
    %v3758 = vld [vmem:[#allocation15 + $0x1d8] sm:$0xff]
    %v3759 = vld [vmem:[#allocation15 + $0x1e0] sm:$0xff]
    %v3760 = vld [vmem:[#allocation15 + $0x1e8] sm:$0xff]
    %v3761 = vld [vmem:[#allocation15 + $0x1f0] sm:$0xff]
    %v3762 = vld [vmem:[#allocation15 + $0x1f8] sm:$0xff]
    %3763 = vmatpush.msra.mxu0 %v3759
    %3764 = vmatpush.msra.mxu0 %v3755
    %3765 = vmatpush.msra.mxu0 %v3751
    %3766 = vmatpush.msra.mxu0 %v3747
    %3767 = vmatpush.msra.mxu0 %v3743
    %3768 = vmatpush.msra.mxu0 %v3739
    %3769 = vmatpush.msra.mxu0 %v3735
    %3770 = vmatpush.msra.mxu0 %v3731
    %3771 = vmatpush.msra.mxu0 %v3727
    %3772 = vmatpush.msra.mxu0 %v3723
    %3773 = vmatpush.msra.mxu0 %v3719
    %3774 = vmatpush.msra.mxu0 %v3715
    %3775 = vmatpush.msra.mxu0 %v3711
    %3776 = vmatpush.msra.mxu0 %v3707
    %3777 = vmatpush.msra.mxu0 %v3703
    %3778 = vmatpush.msra.mxu0 %v3699
    %3779 = vmatmul.f32.gmra.mxu0 %v3631
    %v3780 = vpop.f32.mrf.mxu0
    %v3781 = vadd.f32 0.0, %v3780
    %3782 = vdwg.mxu0
    %3783 = vmatpush.msra.mxu0 %v3760
    %3784 = vmatpush.msra.mxu0 %v3756
    %3785 = vmatpush.msra.mxu0 %v3752
    %3786 = vmatpush.msra.mxu0 %v3748
    %3787 = vmatpush.msra.mxu0 %v3744
    %3788 = vmatpush.msra.mxu0 %v3740
    %3789 = vmatpush.msra.mxu0 %v3736
    %3790 = vmatpush.msra.mxu0 %v3732
    %3791 = vmatpush.msra.mxu0 %v3728
    %3792 = vmatpush.msra.mxu0 %v3724
    %3793 = vmatpush.msra.mxu0 %v3720
    %3794 = vmatpush.msra.mxu0 %v3716
    %3795 = vmatpush.msra.mxu0 %v3712
    %3796 = vmatpush.msra.mxu0 %v3708
    %3797 = vmatpush.msra.mxu0 %v3704
    %3798 = vmatpush.msra.mxu0 %v3700
    %3799 = vmatmul.f32.gmra.mxu0 %v3631
    %v3800 = vpop.f32.mrf.mxu0
    %v3801 = vadd.f32 0.0, %v3800
    %3802 = vdwg.mxu0
    %3803 = vmatpush.msra.mxu0 %v3761
    %3804 = vmatpush.msra.mxu0 %v3757
    %3805 = vmatpush.msra.mxu0 %v3753
    %3806 = vmatpush.msra.mxu0 %v3749
    %3807 = vmatpush.msra.mxu0 %v3745
    %3808 = vmatpush.msra.mxu0 %v3741
    %3809 = vmatpush.msra.mxu0 %v3737
    %3810 = vmatpush.msra.mxu0 %v3733
    %3811 = vmatpush.msra.mxu0 %v3729
    %3812 = vmatpush.msra.mxu0 %v3725
    %3813 = vmatpush.msra.mxu0 %v3721
    %3814 = vmatpush.msra.mxu0 %v3717
    %3815 = vmatpush.msra.mxu0 %v3713
    %3816 = vmatpush.msra.mxu0 %v3709
    %3817 = vmatpush.msra.mxu0 %v3705
    %3818 = vmatpush.msra.mxu0 %v3701
    %3819 = vmatmul.f32.gmra.mxu0 %v3631
    %v3820 = vpop.f32.mrf.mxu0
    %v3821 = vadd.f32 0.0, %v3820
    %3822 = vdwg.mxu0
    %3823 = vmatpush.msra.mxu0 %v3762
    %3824 = vmatpush.msra.mxu0 %v3758
    %3825 = vmatpush.msra.mxu0 %v3754
    %3826 = vmatpush.msra.mxu0 %v3750
    %3827 = vmatpush.msra.mxu0 %v3746
    %3828 = vmatpush.msra.mxu0 %v3742
    %3829 = vmatpush.msra.mxu0 %v3738
    %3830 = vmatpush.msra.mxu0 %v3734
    %3831 = vmatpush.msra.mxu0 %v3730
    %3832 = vmatpush.msra.mxu0 %v3726
    %3833 = vmatpush.msra.mxu0 %v3722
    %3834 = vmatpush.msra.mxu0 %v3718
    %3835 = vmatpush.msra.mxu0 %v3714
    %3836 = vmatpush.msra.mxu0 %v3710
    %3837 = vmatpush.msra.mxu0 %v3706
    %3838 = vmatpush.msra.mxu0 %v3702
    %3839 = vmatmul.f32.gmra.mxu0 %v3631
    %v3840 = vpop.f32.mrf.mxu0
    %v3841 = vadd.f32 0.0, %v3840
    %3842 = vdwg.mxu0
    %v3843 = vld [vmem:[#allocation17] sm:$0xff]
    %v3844 = vld [vmem:[#allocation17 + $0x8] sm:$0xff]
    %v3845 = vld [vmem:[#allocation17 + $0x10] sm:$0xff]
    %v3846 = vld [vmem:[#allocation17 + $0x18] sm:$0xff]
    %v3847 = vld [vmem:[#allocation17 + $0x20] sm:$0xff]
    %v3848 = vld [vmem:[#allocation17 + $0x28] sm:$0xff]
    %v3849 = vld [vmem:[#allocation17 + $0x30] sm:$0xff]
    %v3850 = vld [vmem:[#allocation17 + $0x38] sm:$0xff]
    %v3851 = vld [vmem:[#allocation17 + $0x40] sm:$0xff]
    %v3852 = vld [vmem:[#allocation17 + $0x48] sm:$0xff]
    %v3853 = vld [vmem:[#allocation17 + $0x50] sm:$0xff]
    %v3854 = vld [vmem:[#allocation17 + $0x58] sm:$0xff]
    %v3855 = vld [vmem:[#allocation17 + $0x60] sm:$0xff]
    %v3856 = vld [vmem:[#allocation17 + $0x68] sm:$0xff]
    %v3857 = vld [vmem:[#allocation17 + $0x70] sm:$0xff]
    %v3858 = vld [vmem:[#allocation17 + $0x78] sm:$0xff]
    %v3859 = vld [vmem:[#allocation17 + $0x80] sm:$0xff]
    %v3860 = vld [vmem:[#allocation17 + $0x88] sm:$0xff]
    %v3861 = vld [vmem:[#allocation17 + $0x90] sm:$0xff]
    %v3862 = vld [vmem:[#allocation17 + $0x98] sm:$0xff]
    %v3863 = vld [vmem:[#allocation17 + $0xa0] sm:$0xff]
    %v3864 = vld [vmem:[#allocation17 + $0xa8] sm:$0xff]
    %v3865 = vld [vmem:[#allocation17 + $0xb0] sm:$0xff]
    %v3866 = vld [vmem:[#allocation17 + $0xb8] sm:$0xff]
    %v3867 = vld [vmem:[#allocation17 + $0xc0] sm:$0xff]
    %v3868 = vld [vmem:[#allocation17 + $0xc8] sm:$0xff]
    %v3869 = vld [vmem:[#allocation17 + $0xd0] sm:$0xff]
    %v3870 = vld [vmem:[#allocation17 + $0xd8] sm:$0xff]
    %v3871 = vld [vmem:[#allocation17 + $0xe0] sm:$0xff]
    %v3872 = vld [vmem:[#allocation17 + $0xe8] sm:$0xff]
    %v3873 = vld [vmem:[#allocation17 + $0xf0] sm:$0xff]
    %v3874 = vld [vmem:[#allocation17 + $0xf8] sm:$0xff]
    %v3875 = vld [vmem:[#allocation17 + $0x100] sm:$0xff]
    %v3876 = vld [vmem:[#allocation17 + $0x108] sm:$0xff]
    %v3877 = vld [vmem:[#allocation17 + $0x110] sm:$0xff]
    %v3878 = vld [vmem:[#allocation17 + $0x118] sm:$0xff]
    %v3879 = vld [vmem:[#allocation17 + $0x120] sm:$0xff]
    %v3880 = vld [vmem:[#allocation17 + $0x128] sm:$0xff]
    %v3881 = vld [vmem:[#allocation17 + $0x130] sm:$0xff]
    %v3882 = vld [vmem:[#allocation17 + $0x138] sm:$0xff]
    %v3883 = vld [vmem:[#allocation17 + $0x140] sm:$0xff]
    %v3884 = vld [vmem:[#allocation17 + $0x148] sm:$0xff]
    %v3885 = vld [vmem:[#allocation17 + $0x150] sm:$0xff]
    %v3886 = vld [vmem:[#allocation17 + $0x158] sm:$0xff]
    %v3887 = vld [vmem:[#allocation17 + $0x160] sm:$0xff]
    %v3888 = vld [vmem:[#allocation17 + $0x168] sm:$0xff]
    %v3889 = vld [vmem:[#allocation17 + $0x170] sm:$0xff]
    %v3890 = vld [vmem:[#allocation17 + $0x178] sm:$0xff]
    %v3891 = vld [vmem:[#allocation17 + $0x180] sm:$0xff]
    %v3892 = vld [vmem:[#allocation17 + $0x188] sm:$0xff]
    %v3893 = vld [vmem:[#allocation17 + $0x190] sm:$0xff]
    %v3894 = vld [vmem:[#allocation17 + $0x198] sm:$0xff]
    %v3895 = vld [vmem:[#allocation17 + $0x1a0] sm:$0xff]
    %v3896 = vld [vmem:[#allocation17 + $0x1a8] sm:$0xff]
    %v3897 = vld [vmem:[#allocation17 + $0x1b0] sm:$0xff]
    %v3898 = vld [vmem:[#allocation17 + $0x1b8] sm:$0xff]
    %v3899 = vld [vmem:[#allocation17 + $0x1c0] sm:$0xff]
    %v3900 = vld [vmem:[#allocation17 + $0x1c8] sm:$0xff]
    %v3901 = vld [vmem:[#allocation17 + $0x1d0] sm:$0xff]
    %v3902 = vld [vmem:[#allocation17 + $0x1d8] sm:$0xff]
    %v3903 = vld [vmem:[#allocation17 + $0x1e0] sm:$0xff]
    %v3904 = vld [vmem:[#allocation17 + $0x1e8] sm:$0xff]
    %v3905 = vld [vmem:[#allocation17 + $0x1f0] sm:$0xff]
    %v3906 = vld [vmem:[#allocation17 + $0x1f8] sm:$0xff]
    %3907 = vmatpush.msra.mxu0 %v3903
    %3908 = vmatpush.msra.mxu0 %v3899
    %3909 = vmatpush.msra.mxu0 %v3895
    %3910 = vmatpush.msra.mxu0 %v3891
    %3911 = vmatpush.msra.mxu0 %v3887
    %3912 = vmatpush.msra.mxu0 %v3883
    %3913 = vmatpush.msra.mxu0 %v3879
    %3914 = vmatpush.msra.mxu0 %v3875
    %3915 = vmatpush.msra.mxu0 %v3871
    %3916 = vmatpush.msra.mxu0 %v3867
    %3917 = vmatpush.msra.mxu0 %v3863
    %3918 = vmatpush.msra.mxu0 %v3859
    %3919 = vmatpush.msra.mxu0 %v3855
    %3920 = vmatpush.msra.mxu0 %v3851
    %3921 = vmatpush.msra.mxu0 %v3847
    %3922 = vmatpush.msra.mxu0 %v3843
    %3923 = vmatmul.f32.gmra.mxu0 %v3694
    %v3924 = vpop.f32.mrf.mxu0
    %v3925 = vadd.f32 0.0, %v3924
    %3926 = vdwg.mxu0
    %3927 = vmatpush.msra.mxu0 %v3904
    %3928 = vmatpush.msra.mxu0 %v3900
    %3929 = vmatpush.msra.mxu0 %v3896
    %3930 = vmatpush.msra.mxu0 %v3892
    %3931 = vmatpush.msra.mxu0 %v3888
    %3932 = vmatpush.msra.mxu0 %v3884
    %3933 = vmatpush.msra.mxu0 %v3880
    %3934 = vmatpush.msra.mxu0 %v3876
    %3935 = vmatpush.msra.mxu0 %v3872
    %3936 = vmatpush.msra.mxu0 %v3868
    %3937 = vmatpush.msra.mxu0 %v3864
    %3938 = vmatpush.msra.mxu0 %v3860
    %3939 = vmatpush.msra.mxu0 %v3856
    %3940 = vmatpush.msra.mxu0 %v3852
    %3941 = vmatpush.msra.mxu0 %v3848
    %3942 = vmatpush.msra.mxu0 %v3844
    %3943 = vmatmul.f32.gmra.mxu0 %v3694
    %v3944 = vpop.f32.mrf.mxu0
    %v3945 = vadd.f32 0.0, %v3944
    %3946 = vdwg.mxu0
    %3947 = vmatpush.msra.mxu0 %v3905
    %3948 = vmatpush.msra.mxu0 %v3901
    %3949 = vmatpush.msra.mxu0 %v3897
    %3950 = vmatpush.msra.mxu0 %v3893
    %3951 = vmatpush.msra.mxu0 %v3889
    %3952 = vmatpush.msra.mxu0 %v3885
    %3953 = vmatpush.msra.mxu0 %v3881
    %3954 = vmatpush.msra.mxu0 %v3877
    %3955 = vmatpush.msra.mxu0 %v3873
    %3956 = vmatpush.msra.mxu0 %v3869
    %3957 = vmatpush.msra.mxu0 %v3865
    %3958 = vmatpush.msra.mxu0 %v3861
    %3959 = vmatpush.msra.mxu0 %v3857
    %3960 = vmatpush.msra.mxu0 %v3853
    %3961 = vmatpush.msra.mxu0 %v3849
    %3962 = vmatpush.msra.mxu0 %v3845
    %3963 = vmatmul.f32.gmra.mxu0 %v3694
    %v3964 = vpop.f32.mrf.mxu0
    %v3965 = vadd.f32 0.0, %v3964
    %3966 = vdwg.mxu0
    %3967 = vmatpush.msra.mxu0 %v3906
    %3968 = vmatpush.msra.mxu0 %v3902
    %3969 = vmatpush.msra.mxu0 %v3898
    %3970 = vmatpush.msra.mxu0 %v3894
    %3971 = vmatpush.msra.mxu0 %v3890
    %3972 = vmatpush.msra.mxu0 %v3886
    %3973 = vmatpush.msra.mxu0 %v3882
    %3974 = vmatpush.msra.mxu0 %v3878
    %3975 = vmatpush.msra.mxu0 %v3874
    %3976 = vmatpush.msra.mxu0 %v3870
    %3977 = vmatpush.msra.mxu0 %v3866
    %3978 = vmatpush.msra.mxu0 %v3862
    %3979 = vmatpush.msra.mxu0 %v3858
    %3980 = vmatpush.msra.mxu0 %v3854
    %3981 = vmatpush.msra.mxu0 %v3850
    %3982 = vmatpush.msra.mxu0 %v3846
    %3983 = vmatmul.f32.gmra.mxu0 %v3694
    %v3984 = vpop.f32.mrf.mxu0
    %v3985 = vadd.f32 0.0, %v3984
    %3986 = vdwg.mxu0
    %s3987 = scalar_lea.vmem [#allocation2], 224
    %v3988 = vld [vmem:[%s3987] sm:$0xff]
    %v3989 = vld [vmem:[%s3987 + $0x8] sm:$0xff]
    %v3990 = vld [vmem:[%s3987 + $0x10] sm:$0xff]
    %v3991 = vld [vmem:[%s3987 + $0x18] sm:$0xff]
    %v3992 = vadd.f32 %v3988, %v3781
    %v3993 = vadd.f32 %v3989, %v3801
    %v3994 = vadd.f32 %v3990, %v3821
    %v3995 = vadd.f32 %v3991, %v3841
    %v3996 = vld [vmem:[#allocation3] sm:$0xff]
    %v3997 = vld [vmem:[#allocation3 + $0x8] sm:$0xff]
    %v3998 = vld [vmem:[#allocation3 + $0x10] sm:$0xff]
    %v3999 = vld [vmem:[#allocation3 + $0x18] sm:$0xff]
    %v4000 = vadd.f32 %v3996, %v3925
    %v4001 = vadd.f32 %v3997, %v3945
    %v4002 = vadd.f32 %v3998, %v3965
    %v4003 = vadd.f32 %v3999, %v3985
    %v4004 = vxor.u32 %v3992, 2147483648
    %v4005 = vmul.f32 %v4004, 1.442695
    %v4006 = vpow.pop %v4005
    %v4007 = vadd.f32 %v4006, 1.0
    %v4008 = vrcp.pop %v4007
    %v4009 = vmul.f32 %v4007, %v4008
    %v4010 = vsub.f32 1.0, %v4009
    %v4011 = vmul.f32 %v4008, %v4010
    %v4012 = vadd.f32 %v4008, %v4011
    %vm4013 = vweird.f32 %v4007
    %vm4014 = vweird.f32 %v4008
    %vm4015 = vmor %vm4013, %vm4014
    %v4016 = vsel %vm4015, %v4008, %v4012
    %v4017 = vand.u32 2147483647, %v4007
    %vm4018 = vcmp.eq.f32.partialorder %v4017, 8.507059e+37
    %v4019 = vand.u32 %v4007, 2147483648
    %v4020 = vor.u32 1.1754944e-38, %v4019
    %v4021 = vsel %vm4018, %v4020, %v4016
    %v4022 = vmul.f32 1.0, %v4021
    %v4023 = vxor.u32 %v3993, 2147483648
    %v4024 = vmul.f32 %v4023, 1.442695
    %v4025 = vpow.pop %v4024
    %v4026 = vadd.f32 %v4025, 1.0
    %v4027 = vrcp.pop %v4026
    %v4028 = vmul.f32 %v4026, %v4027
    %v4029 = vsub.f32 1.0, %v4028
    %v4030 = vmul.f32 %v4027, %v4029
    %v4031 = vadd.f32 %v4027, %v4030
    %vm4032 = vweird.f32 %v4026
    %vm4033 = vweird.f32 %v4027
    %vm4034 = vmor %vm4032, %vm4033
    %v4035 = vsel %vm4034, %v4027, %v4031
    %v4036 = vand.u32 2147483647, %v4026
    %vm4037 = vcmp.eq.f32.partialorder %v4036, 8.507059e+37
    %v4038 = vand.u32 %v4026, 2147483648
    %v4039 = vor.u32 1.1754944e-38, %v4038
    %v4040 = vsel %vm4037, %v4039, %v4035
    %v4041 = vmul.f32 1.0, %v4040
    %v4042 = vtanh.pop %v3994
    %v4043 = vxor.u32 %v3995, 2147483648
    %v4044 = vmul.f32 %v4043, 1.442695
    %v4045 = vpow.pop %v4044
    %v4046 = vadd.f32 %v4045, 1.0
    %v4047 = vrcp.pop %v4046
    %v4048 = vmul.f32 %v4046, %v4047
    %v4049 = vsub.f32 1.0, %v4048
    %v4050 = vmul.f32 %v4047, %v4049
    %v4051 = vadd.f32 %v4047, %v4050
    %vm4052 = vweird.f32 %v4046
    %vm4053 = vweird.f32 %v4047
    %vm4054 = vmor %vm4052, %vm4053
    %v4055 = vsel %vm4054, %v4047, %v4051
    %v4056 = vand.u32 2147483647, %v4046
    %vm4057 = vcmp.eq.f32.partialorder %v4056, 8.507059e+37
    %v4058 = vand.u32 %v4046, 2147483648
    %v4059 = vor.u32 1.1754944e-38, %v4058
    %v4060 = vsel %vm4057, %v4059, %v4055
    %v4061 = vmul.f32 1.0, %v4060
    %v4062 = vmul.f32 %v4041, %v3629
    %v4063 = vmul.f32 %v4022, %v4042
    %v4064 = vadd.f32 %v4062, %v4063
    %v4065 = vtanh.pop %v4064
    %v4066 = vmul.f32 %v4061, %v4065
    %v4067 = vxor.u32 %v4000, 2147483648
    %v4068 = vmul.f32 %v4067, 1.442695
    %v4069 = vpow.pop %v4068
    %v4070 = vadd.f32 %v4069, 1.0
    %v4071 = vrcp.pop %v4070
    %v4072 = vmul.f32 %v4070, %v4071
    %v4073 = vsub.f32 1.0, %v4072
    %v4074 = vmul.f32 %v4071, %v4073
    %v4075 = vadd.f32 %v4071, %v4074
    %vm4076 = vweird.f32 %v4070
    %vm4077 = vweird.f32 %v4071
    %vm4078 = vmor %vm4076, %vm4077
    %v4079 = vsel %vm4078, %v4071, %v4075
    %v4080 = vand.u32 2147483647, %v4070
    %vm4081 = vcmp.eq.f32.partialorder %v4080, 8.507059e+37
    %v4082 = vand.u32 %v4070, 2147483648
    %v4083 = vor.u32 1.1754944e-38, %v4082
    %v4084 = vsel %vm4081, %v4083, %v4079
    %v4085 = vmul.f32 1.0, %v4084
    %v4086 = vxor.u32 %v4001, 2147483648
    %v4087 = vmul.f32 %v4086, 1.442695
    %v4088 = vpow.pop %v4087
    %v4089 = vadd.f32 %v4088, 1.0
    %v4090 = vrcp.pop %v4089
    %v4091 = vmul.f32 %v4089, %v4090
    %v4092 = vsub.f32 1.0, %v4091
    %v4093 = vmul.f32 %v4090, %v4092
    %v4094 = vadd.f32 %v4090, %v4093
    %vm4095 = vweird.f32 %v4089
    %vm4096 = vweird.f32 %v4090
    %vm4097 = vmor %vm4095, %vm4096
    %v4098 = vsel %vm4097, %v4090, %v4094
    %v4099 = vand.u32 2147483647, %v4089
    %vm4100 = vcmp.eq.f32.partialorder %v4099, 8.507059e+37
    %v4101 = vand.u32 %v4089, 2147483648
    %v4102 = vor.u32 1.1754944e-38, %v4101
    %v4103 = vsel %vm4100, %v4102, %v4098
    %v4104 = vmul.f32 1.0, %v4103
    %v4105 = vtanh.pop %v4002
    %v4106 = vxor.u32 %v4003, 2147483648
    %v4107 = vmul.f32 %v4106, 1.442695
    %v4108 = vpow.pop %v4107
    %v4109 = vadd.f32 %v4108, 1.0
    %v4110 = vrcp.pop %v4109
    %v4111 = vmul.f32 %v4109, %v4110
    %v4112 = vsub.f32 1.0, %v4111
    %v4113 = vmul.f32 %v4110, %v4112
    %v4114 = vadd.f32 %v4110, %v4113
    %vm4115 = vweird.f32 %v4109
    %vm4116 = vweird.f32 %v4110
    %vm4117 = vmor %vm4115, %vm4116
    %v4118 = vsel %vm4117, %v4110, %v4114
    %v4119 = vand.u32 2147483647, %v4109
    %vm4120 = vcmp.eq.f32.partialorder %v4119, 8.507059e+37
    %v4121 = vand.u32 %v4109, 2147483648
    %v4122 = vor.u32 1.1754944e-38, %v4121
    %v4123 = vsel %vm4120, %v4122, %v4118
    %v4124 = vmul.f32 1.0, %v4123
    %v4125 = vmul.f32 %v4104, %v3692
    %v4126 = vmul.f32 %v4085, %v4105
    %v4127 = vadd.f32 %v4125, %v4126
    %v4128 = vtanh.pop %v4127
    %v4129 = vmul.f32 %v4124, %v4128
    %s4130 = scalar_lea.vmem [#allocation4], 56
    %4131 = vst [vmem:[%s4130] sm:$0xff] %v4066
    %4132 = vst [vmem:[#allocation5] sm:$0xff] %v4129
    %v4133 = vld [vmem:[#allocation4] sm:$0xff]
    %v4134 = vld [vmem:[#allocation4 + $0x8] sm:$0xff]
    %v4135 = vld [vmem:[#allocation4 + $0x10] sm:$0xff]
    %v4136 = vld [vmem:[#allocation4 + $0x18] sm:$0xff]
    %v4137 = vld [vmem:[#allocation4 + $0x20] sm:$0xff]
    %v4138 = vld [vmem:[#allocation4 + $0x28] sm:$0xff]
    %v4139 = vld [vmem:[#allocation4 + $0x30] sm:$0xff]
    %v4140 = vld [vmem:[#allocation4 + $0x38] sm:$0xff]
    %v4141 = vld [vmem:[#allocation5] sm:$0xff]
    %v4142 = vld [vmem:[#allocation5 + $0x8] sm:$0xff]
    %v4143 = vld [vmem:[#allocation5 + $0x10] sm:$0xff]
    %v4144 = vld [vmem:[#allocation5 + $0x18] sm:$0xff]
    %v4145 = vld [vmem:[#allocation5 + $0x20] sm:$0xff]
    %v4146 = vld [vmem:[#allocation5 + $0x28] sm:$0xff]
    %v4147 = vld [vmem:[#allocation5 + $0x30] sm:$0xff]
    %v4148 = vld [vmem:[#allocation5 + $0x38] sm:$0xff]
    %v4149 = vld [vmem:[#allocation18] sm:$0xff]
    %v4150 = vld [vmem:[#allocation18 + $0x8] sm:$0xff]
    %v4151 = vld [vmem:[#allocation18 + $0x10] sm:$0xff]
    %v4152 = vld [vmem:[#allocation18 + $0x18] sm:$0xff]
    %v4153 = vld [vmem:[#allocation18 + $0x20] sm:$0xff]
    %v4154 = vld [vmem:[#allocation18 + $0x28] sm:$0xff]
    %v4155 = vld [vmem:[#allocation18 + $0x30] sm:$0xff]
    %v4156 = vld [vmem:[#allocation18 + $0x38] sm:$0xff]
    %v4157 = vld [vmem:[#allocation18 + $0x40] sm:$0xff]
    %v4158 = vld [vmem:[#allocation18 + $0x48] sm:$0xff]
    %v4159 = vld [vmem:[#allocation18 + $0x50] sm:$0xff]
    %v4160 = vld [vmem:[#allocation18 + $0x58] sm:$0xff]
    %v4161 = vld [vmem:[#allocation18 + $0x60] sm:$0xff]
    %v4162 = vld [vmem:[#allocation18 + $0x68] sm:$0xff]
    %v4163 = vld [vmem:[#allocation18 + $0x70] sm:$0xff]
    %v4164 = vld [vmem:[#allocation18 + $0x78] sm:$0xff]
    %v4165 = vld [vmem:[#allocation20] sm:$0xff]
    %v4166 = vld [vmem:[#allocation20 + $0x8] sm:$0xff]
    %v4167 = vld [vmem:[#allocation20 + $0x10] sm:$0xff]
    %v4168 = vld [vmem:[#allocation20 + $0x18] sm:$0xff]
    %v4169 = vld [vmem:[#allocation20 + $0x20] sm:$0xff]
    %v4170 = vld [vmem:[#allocation20 + $0x28] sm:$0xff]
    %v4171 = vld [vmem:[#allocation20 + $0x30] sm:$0xff]
    %v4172 = vld [vmem:[#allocation20 + $0x38] sm:$0xff]
    %v4173 = vld [vmem:[#allocation20 + $0x40] sm:$0xff]
    %v4174 = vld [vmem:[#allocation20 + $0x48] sm:$0xff]
    %v4175 = vld [vmem:[#allocation20 + $0x50] sm:$0xff]
    %v4176 = vld [vmem:[#allocation20 + $0x58] sm:$0xff]
    %v4177 = vld [vmem:[#allocation20 + $0x60] sm:$0xff]
    %v4178 = vld [vmem:[#allocation20 + $0x68] sm:$0xff]
    %v4179 = vld [vmem:[#allocation20 + $0x70] sm:$0xff]
    %v4180 = vld [vmem:[#allocation20 + $0x78] sm:$0xff]
    %4181 = vmatpush.msra.mxu0 %v4180
    %4182 = vmatpush.msra.mxu0 %v4179
    %4183 = vmatpush.msra.mxu0 %v4178
    %4184 = vmatpush.msra.mxu0 %v4177
    %4185 = vmatpush.msra.mxu0 %v4176
    %4186 = vmatpush.msra.mxu0 %v4175
    %4187 = vmatpush.msra.mxu0 %v4174
    %4188 = vmatpush.msra.mxu0 %v4173
    %4189 = vmatpush.msra.mxu0 %v4172
    %4190 = vmatpush.msra.mxu0 %v4171
    %4191 = vmatpush.msra.mxu0 %v4170
    %4192 = vmatpush.msra.mxu0 %v4169
    %4193 = vmatpush.msra.mxu0 %v4168
    %4194 = vmatpush.msra.mxu0 %v4167
    %4195 = vmatpush.msra.mxu0 %v4166
    %4196 = vmatpush.msra.mxu0 %v4165
    %4197 = vmatmul.f32.gmra.mxu0 %v4141
    %v4198 = vpop.f32.mrf.mxu0
    %v4199 = vadd.f32 0.0, %v4198
    %4200 = vmatmul.f32.gmra.mxu0 %v4142
    %v4201 = vpop.f32.mrf.mxu0
    %v4202 = vadd.f32 0.0, %v4201
    %4203 = vmatmul.f32.gmra.mxu0 %v4143
    %v4204 = vpop.f32.mrf.mxu0
    %v4205 = vadd.f32 0.0, %v4204
    %4206 = vmatmul.f32.gmra.mxu0 %v4144
    %v4207 = vpop.f32.mrf.mxu0
    %v4208 = vadd.f32 0.0, %v4207
    %4209 = vmatmul.f32.gmra.mxu0 %v4145
    %v4210 = vpop.f32.mrf.mxu0
    %v4211 = vadd.f32 0.0, %v4210
    %4212 = vmatmul.f32.gmra.mxu0 %v4146
    %v4213 = vpop.f32.mrf.mxu0
    %v4214 = vadd.f32 0.0, %v4213
    %4215 = vmatmul.f32.gmra.mxu0 %v4147
    %v4216 = vpop.f32.mrf.mxu0
    %v4217 = vadd.f32 0.0, %v4216
    %4218 = vmatmul.f32.gmra.mxu0 %v4148
    %v4219 = vpop.f32.mrf.mxu0
    %v4220 = vadd.f32 0.0, %v4219
    %4221 = vdwg.mxu0
    %4222 = vmatpush.msra.mxu0 %v4164
    %4223 = vmatpush.msra.mxu0 %v4163
    %4224 = vmatpush.msra.mxu0 %v4162
    %4225 = vmatpush.msra.mxu0 %v4161
    %4226 = vmatpush.msra.mxu0 %v4160
    %4227 = vmatpush.msra.mxu0 %v4159
    %4228 = vmatpush.msra.mxu0 %v4158
    %4229 = vmatpush.msra.mxu0 %v4157
    %4230 = vmatpush.msra.mxu0 %v4156
    %4231 = vmatpush.msra.mxu0 %v4155
    %4232 = vmatpush.msra.mxu0 %v4154
    %4233 = vmatpush.msra.mxu0 %v4153
    %4234 = vmatpush.msra.mxu0 %v4152
    %4235 = vmatpush.msra.mxu0 %v4151
    %4236 = vmatpush.msra.mxu0 %v4150
    %4237 = vmatpush.msra.mxu0 %v4149
    %4238 = vmatmul.f32.gmra.mxu0 %v4133
    %v4239 = vpop.f32.mrf.mxu0
    %v4240 = vadd.f32 %v4199, %v4239
    %4241 = vmatmul.f32.gmra.mxu0 %v4134
    %v4242 = vpop.f32.mrf.mxu0
    %v4243 = vadd.f32 %v4202, %v4242
    %4244 = vmatmul.f32.gmra.mxu0 %v4135
    %v4245 = vpop.f32.mrf.mxu0
    %v4246 = vadd.f32 %v4205, %v4245
    %4247 = vmatmul.f32.gmra.mxu0 %v4136
    %v4248 = vpop.f32.mrf.mxu0
    %v4249 = vadd.f32 %v4208, %v4248
    %4250 = vmatmul.f32.gmra.mxu0 %v4137
    %v4251 = vpop.f32.mrf.mxu0
    %v4252 = vadd.f32 %v4211, %v4251
    %4253 = vmatmul.f32.gmra.mxu0 %v4138
    %v4254 = vpop.f32.mrf.mxu0
    %v4255 = vadd.f32 %v4214, %v4254
    %4256 = vmatmul.f32.gmra.mxu0 %v4139
    %v4257 = vpop.f32.mrf.mxu0
    %v4258 = vadd.f32 %v4217, %v4257
    %4259 = vmatmul.f32.gmra.mxu0 %v4140
    %v4260 = vpop.f32.mrf.mxu0
    %v4261 = vadd.f32 %v4220, %v4260
    %4262 = vdwg.mxu0
    %v4263 = vld [vmem:[%s9] sm:$0x1]
    %v4265 = vperm.slane %v4263, 0
    %v4267 = vadd.f32 %v4240, %v4265
    %v4268 = vadd.f32 %v4243, %v4265
    %v4269 = vadd.f32 %v4246, %v4265
    %v4270 = vadd.f32 %v4249, %v4265
    %v4271 = vadd.f32 %v4252, %v4265
    %v4272 = vadd.f32 %v4255, %v4265
    %v4273 = vadd.f32 %v4258, %v4265
    %v4274 = vadd.f32 %v4261, %v4265
    %4275 = vst [vmem:[#allocation21] sm:$0xff] %v4267
    %4276 = vst [vmem:[#allocation21 + $0x8] sm:$0xff] %v4268
    %4277 = vst [vmem:[#allocation21 + $0x10] sm:$0xff] %v4269
    %4278 = vst [vmem:[#allocation21 + $0x18] sm:$0xff] %v4270
    %4279 = vst [vmem:[#allocation21 + $0x20] sm:$0xff] %v4271
    %4280 = vst [vmem:[#allocation21 + $0x28] sm:$0xff] %v4272
    %4281 = vst [vmem:[#allocation21 + $0x30] sm:$0xff] %v4273
    %4282 = vst [vmem:[#allocation21 + $0x38] sm:$0xff] %v4274
    // Predicated region
    $region78: #{tpu_custom_call.1} parent=1 // pred_check
      _
    $region79: #{tpu_custom_call.1} parent=1 // pred_check_branch
      %4284 = sbr.rel (0) target = $region81
    $region80: #{tpu_custom_call.1} parent=1 // pred_region
      %4286 = vsyncadd [#allocation8], 0
      %s4287 = sshll.u32 [#allocation21], 4
      %s4288 = int_to_ptr.vmem [resolvable:$true] %s4287
      %s4289 = sshll.u32 %s10, 4
      %s4290 = int_to_ptr.hbm [resolvable:$true] %s4289
      %4295 = dma.vmem_to_hbm [thread:$0]  %s4288, 1024, %s4290, [#allocation8], 128, 128, 8
    $region81: #{tpu_custom_call.1} parent=1 // pred_fallthru
      _
    // Predicated region
    $region82: #{tpu_custom_call.1} parent=1 // pred_check
      _
    $region83: #{tpu_custom_call.1} parent=1 // pred_check_branch
      %4297 = sbr.rel (0) target = $region85
    $region84: #{tpu_custom_call.1} parent=1 // pred_region
      %4299 = dma.done [#allocation8], 1024
    $region85: #{tpu_custom_call.1} parent=1 // pred_fallthru
      _
    %4300 = vsyncpa [#allocation7], 1
    %4301 = vsyncpa [#allocation10], 1
    %4302 = vsyncpa [#allocation13], 1
    %4303 = vsyncpa [#allocation16], 1
    %4304 = vsyncpa [#allocation19], 1
    %4305 = vsyncpa [#allocation8], 1

</llo_original>
